<compile_context>
chip_gen: v6e
topology: v6e:2x2x1
jax: 0.10.0
libtpu: 0.0.40
codegen_flags: <defaults>
</compile_context>

<pallas_src>
import functools
import math

import jax
import jax.numpy as jnp
from jax.experimental import pallas as pl
from jax.experimental.pallas import tpu as pltpu

_NEG_INF = -1e30   # additive causal-mask bias (f32 scores)


# ----------------------------------------------------------------------------
# Compiler params / BlockSpec helpers
# ----------------------------------------------------------------------------

def _vmem_limit_bytes():
    """Generation-aware VMEM budget: headroom on v7x (64 MiB), more on v5e/v6e."""
    try:
        cap = pltpu.get_tpu_info().vmem_capacity_bytes
    except Exception:   # interpret mode / unknown chip -> conservative
        cap = 64 * 1024 * 1024
    return int(min(cap * 3 // 4, 96 * 1024 * 1024))


def _compiler_params():
    return pltpu.CompilerParams(
        dimension_semantics=("parallel", "arbitrary"),   # (batch, layer)
        vmem_limit_bytes=_vmem_limit_bytes(),
    )


def _rep_spec(shape):
    """Weight replicated across the whole (batch, layer) grid."""
    z = (0,) * len(shape)
    return pl.BlockSpec(tuple(shape), lambda i, l, _z=z: _z)


def _batch_spec(shape):
    """Per-batch block (leading dim indexed by grid axis 0)."""
    t = (0,) * (len(shape) - 1)
    return pl.BlockSpec((1,) + tuple(shape[1:]), lambda i, l, _t=t: (i,) + _t)


def _layer_spec(shape):
    """Stacked per-layer weight block (leading dim indexed by grid axis 1)."""
    t = (0,) * (len(shape) - 1)
    return pl.BlockSpec((1,) + tuple(shape[1:]), lambda i, l, _t=t: (l,) + _t)


# ----------------------------------------------------------------------------
# In-kernel math helpers (all values VMEM-resident)
# ----------------------------------------------------------------------------

def _ln(x, g, b, eps):
    """LayerNorm over last dim; x (S, D) f32, g/b (1, D) f32."""
    mean = jnp.mean(x, axis=-1, keepdims=True)
    var = jnp.mean(jnp.square(x - mean), axis=-1, keepdims=True)
    return (x - mean) * jax.lax.rsqrt(var + eps) * g + b


def _attention_core(q, k, v, heads, bias):
    """Scaled dot-product attention. q (Sq, E), k/v (Sk, E) f32 -> (Sq, E) f32.

    Heads are tiny in-register lane slices of the fused Q/K/V projections; all
    MXU-heavy matmuls (QKV / KV / out-proj) are fused outside this function.
    TODO(synk): at real ViT sizes switch this loop to one batched dot_general
    over the head axis.
    """
    _, E = q.shape
    dh = E // heads
    scale = 1.0 / math.sqrt(dh)
    qb = (q * scale).astype(jnp.bfloat16)
    kb = k.astype(jnp.bfloat16)
    vb = v.astype(jnp.bfloat16)
    outs = []
    for h in range(heads):
        sl = slice(h * dh, (h + 1) * dh)
        # Contract last dims directly (no .T / XLU transpose of K).
        s = jax.lax.dot_general(qb[:, sl], kb[:, sl],
                                (((1,), (1,)), ((), ())),
                                preferred_element_type=jnp.float32)
        if bias is not None:
            s = s + bias
        m = jnp.max(s, axis=-1, keepdims=True)
        p = jnp.exp(s - m)
        p = p * pl.reciprocal(jnp.sum(p, axis=-1, keepdims=True), approx=True)
        outs.append(jnp.dot(p.astype(jnp.bfloat16), vb[:, sl],
                            preferred_element_type=jnp.float32))
    return jnp.concatenate(outs, axis=-1)


def _self_attention(x, wqkv, bqkv, wo, bo, heads, bias):
    """Fused QKV projection (N = 3D, lane-dense) + attention + fused out-proj."""
    E = x.shape[-1]
    qkv = jnp.dot(x.astype(jnp.bfloat16), wqkv,
                  preferred_element_type=jnp.float32) + bqkv          # (S, 3E)
    o = _attention_core(qkv[:, :E], qkv[:, E:2 * E], qkv[:, 2 * E:], heads, bias)
    return jnp.dot(o.astype(jnp.bfloat16), wo,
                   preferred_element_type=jnp.float32) + bo


def _cross_attention(x, mem, wq, bq, wkv, bkv, wo, bo, heads):
    """Q from decoder state, fused KV projection (N = 2E) from encoder memory."""
    E = x.shape[-1]
    q = jnp.dot(x.astype(jnp.bfloat16), wq,
                preferred_element_type=jnp.float32) + bq              # (Sq, E)
    kv = jnp.dot(mem.astype(jnp.bfloat16), wkv,
                 preferred_element_type=jnp.float32) + bkv            # (Sk, 2E)
    o = _attention_core(q, kv[:, :E], kv[:, E:], heads, None)
    return jnp.dot(o.astype(jnp.bfloat16), wo,
                   preferred_element_type=jnp.float32) + bo


# ----------------------------------------------------------------------------
# Fused stack kernels
# ----------------------------------------------------------------------------

def _encoder_stack_kernel(patch_ref, pw_ref, pb_ref, clspos_ref, pospatch_ref,
                          ln1g_ref, ln1b_ref, wqkv_ref, bqkv_ref, wo_ref, bo_ref,
                          ln2g_ref, ln2b_ref, w1_ref, b1_ref, w2_ref, b2_ref,
                          lnfg_ref, lnfb_ref,
                          o_ref, x_sc, *, heads, eps):
    """Patch-embed + L pre-norm ViT layers + final LN; grid=(B, L)."""
    l = pl.program_id(1)

    @pl.when(l == 0)
    def _():
        emb = jnp.dot(patch_ref[0].astype(jnp.bfloat16), pw_ref[...],
                      preferred_element_type=jnp.float32) + pb_ref[...]
        # Build the full (S, D) block in-register and do one aligned store.
        x_sc[...] = jnp.concatenate(
            [clspos_ref[...], emb + pospatch_ref[...]], axis=0)

    x = x_sc[...]
    h = _ln(x, ln1g_ref[0], ln1b_ref[0], eps)
    x = x + _self_attention(h, wqkv_ref[0], bqkv_ref[0], wo_ref[0], bo_ref[0],
                            heads, None)
    h = _ln(x, ln2g_ref[0], ln2b_ref[0], eps)
    h = jnp.dot(h.astype(jnp.bfloat16), w1_ref[0],
                preferred_element_type=jnp.float32) + b1_ref[0]
    # TODO(synk): HF ViT uses exact erf GELU; tanh approximation used here.
    h = jax.nn.gelu(h, approximate=True)
    h = jnp.dot(h.astype(jnp.bfloat16), w2_ref[0],
                preferred_element_type=jnp.float32) + b2_ref[0]
    x = x + h
    x_sc[...] = x

    @pl.when(l == pl.num_programs(1) - 1)
    def _():
        o_ref[0] = _ln(x, lnfg_ref[...], lnfb_ref[...], eps).astype(o_ref.dtype)


def _decoder_stack_kernel(x_ref, mem_ref, causal_ref,
                          s_wqkv_ref, s_bqkv_ref, s_wo_ref, s_bo_ref,
                          ln1g_ref, ln1b_ref,
                          c_wq_ref, c_bq_ref, c_wkv_ref, c_bkv_ref,
                          c_wo_ref, c_bo_ref,
                          ln2g_ref, ln2b_ref,
                          w1_ref, b1_ref, w2_ref, b2_ref,
                          ln3g_ref, ln3b_ref,
                          hw_ref, hb_ref,
                          o_ref, x_sc, *, heads, eps):
    """L post-norm decoder layers + vocab head; grid=(B, L)."""
    l = pl.program_id(1)

    @pl.when(l == 0)
    def _():
        x_sc[...] = x_ref[0].astype(jnp.float32)

    x = x_sc[...]
    mem = mem_ref[0].astype(jnp.float32)
    causal = causal_ref[...]

    a = _self_attention(x, s_wqkv_ref[0], s_bqkv_ref[0], s_wo_ref[0],
                        s_bo_ref[0], heads, causal)
    x = _ln(x + a, ln1g_ref[0], ln1b_ref[0], eps)

    a = _cross_attention(x, mem, c_wq_ref[0], c_bq_ref[0], c_wkv_ref[0],
                         c_bkv_ref[0], c_wo_ref[0], c_bo_ref[0], heads)
    x = _ln(x + a, ln2g_ref[0], ln2b_ref[0], eps)

    h = jnp.dot(x.astype(jnp.bfloat16), w1_ref[0],
                preferred_element_type=jnp.float32) + b1_ref[0]
    h = jnp.maximum(h, 0.0)
    h = jnp.dot(h.astype(jnp.bfloat16), w2_ref[0],
                preferred_element_type=jnp.float32) + b2_ref[0]
    x = _ln(x + h, ln3g_ref[0], ln3b_ref[0], eps)
    x_sc[...] = x

    @pl.when(l == pl.num_programs(1) - 1)
    def _():
        # Vocab head fused into the last layer step; Vpad=128 -> lane-dense store.
        logits = jnp.dot(x.astype(jnp.bfloat16), hw_ref[...],
                         preferred_element_type=jnp.float32) + hb_ref[...]
        o_ref[0] = logits.astype(o_ref.dtype)


# ----------------------------------------------------------------------------
# Pallas wrappers
# ----------------------------------------------------------------------------

def _vit_encoder(patches, enc, cfg):
    B, NP, _ = patches.shape
    D = cfg["hidden"]
    L = cfg["enc_layers"]
    S = NP + 1
    st = enc["stack"]
    shared = [enc["patch_w"], enc["patch_b"], enc["cls_pos"], enc["pos_patch"]]
    stacked = [st["ln1_g"], st["ln1_b"], st["wqkv"], st["bqkv"], st["wo"], st["bo"],
               st["ln2_g"], st["ln2_b"], st["mlp_w1"], st["mlp_b1"],
               st["mlp_w2"], st["mlp_b2"]]
    final = [enc["lnf_g"], enc["lnf_b"]]
    kern = functools.partial(_encoder_stack_kernel, heads=cfg["heads"],
                             eps=cfg["enc_ln_eps"])
    return pl.pallas_call(
        kern,
        out_shape=jax.ShapeDtypeStruct((B, S, D), jnp.float32),
        grid=(B, L),
        in_specs=([_batch_spec(patches.shape)] +
                  [_rep_spec(a.shape) for a in shared] +
                  [_layer_spec(a.shape) for a in stacked] +
                  [_rep_spec(a.shape) for a in final]),
        out_specs=_batch_spec((B, S, D)),
        scratch_shapes=[pltpu.VMEM((S, D), jnp.float32)],
        compiler_params=_compiler_params(),
    )(patches, *shared, *stacked, *final)


def _transformer_decoder(x_emb, mem, causal, dec, cfg):
    B, S, E = x_emb.shape
    L = cfg["dec_layers"]
    Vp = cfg["vocab_pad"]
    st = dec["stack"]
    stacked = [st["s_wqkv"], st["s_bqkv"], st["s_wo"], st["s_bo"],
               st["ln1_g"], st["ln1_b"],
               st["c_wq"], st["c_bq"], st["c_wkv"], st["c_bkv"],
               st["c_wo"], st["c_bo"],
               st["ln2_g"], st["ln2_b"],
               st["ff_w1"], st["ff_b1"], st["ff_w2"], st["ff_b2"],
               st["ln3_g"], st["ln3_b"]]
    head = [dec["out_w"], dec["out_b"]]
    kern = functools.partial(_decoder_stack_kernel, heads=cfg["heads"],
                             eps=cfg["dec_ln_eps"])
    return pl.pallas_call(
        kern,
        out_shape=jax.ShapeDtypeStruct((B, S, Vp), jnp.float32),
        grid=(B, L),
        in_specs=([_batch_spec(x_emb.shape), _batch_spec(mem.shape),
                   _rep_spec(causal.shape)] +
                  [_layer_spec(a.shape) for a in stacked] +
                  [_rep_spec(a.shape) for a in head]),
        out_specs=_batch_spec((B, S, Vp)),
        scratch_shapes=[pltpu.VMEM((S, E), jnp.float32)],
        compiler_params=_compiler_params(),
    )(x_emb, mem, causal, *stacked, *head)


# ----------------------------------------------------------------------------
# Model forward (glue in JAX, compute in Pallas)
# ----------------------------------------------------------------------------

def vit_encoder_forward(images, params, cfg):
    """Encoder_ViT_Pretrained equivalent. images (B, C, H, W) -> (B, S, D)."""
    B, C, H, W = images.shape
    p = cfg["patch"]
    nph, npw = H // p, W // p
    NP = nph * npw
    # Patchify (glue): matches Conv2d(C, D, kernel=p, stride=p) weight layout.
    patches = images.reshape(B, C, nph, p, npw, p)
    patches = patches.transpose(0, 2, 4, 1, 3, 5).reshape(B, NP, C * p * p)
    return _vit_encoder(patches, params["encoder"], cfg)


def transformer_decoder_forward(image_features, captions, params, cfg):
    """TransformerDecoder equivalent. -> logits (B, S_cap, vocab)."""
    # TODO(synk): original custom TransformerDecoder not shown; standard
    # post-norm nn.TransformerDecoderLayer semantics (ReLU FFN) assumed.
    dec = params["decoder"]
    B, S = captions.shape
    x = jnp.take(dec["tok_emb"], captions, axis=0) + dec["pos_emb"][None, :S, :]
    row = jnp.arange(S, dtype=jnp.int32)[:, None]
    col = jnp.arange(S, dtype=jnp.int32)[None, :]
    causal = jnp.where(col <= row, 0.0, _NEG_INF).astype(jnp.float32)
    logits = _transformer_decoder(x, image_features, causal, dec, cfg)
    return logits[..., :cfg["vocab"]]


def vit_captioning_forward(images, captions, params, cfg):
    """ViTImageCaptioningModel.forward(images, captions)."""
    image_features = vit_encoder_forward(images, params, cfg)
    return transformer_decoder_forward(image_features, captions, params, cfg)


# ----------------------------------------------------------------------------
# Deterministic parameter initialization (bf16 matmul weights, f32 biases/LN)
# ----------------------------------------------------------------------------

def _linear(key, fan_in, fan_out, pad_out=None):
    n = pad_out if pad_out is not None else fan_out
    w = jnp.zeros((fan_in, n), jnp.float32)
    w = w.at[:, :fan_out].set(
        jax.random.normal(key, (fan_in, fan_out), jnp.float32) / math.sqrt(fan_in))
    return w.astype(jnp.bfloat16), jnp.zeros((1, n), jnp.float32)


def _stack_layers(layer_dicts):
    return {k: jnp.stack([d[k] for d in layer_dicts], axis=0)
            for k in layer_dicts[0]}


def init_params(key, cfg):
    # TODO(synk): real module loads a pretrained HuggingFace ViT; synthetic here.
    D, E, V = cfg["hidden"], cfg["embed"], cfg["vocab"]
    C, p = cfg["channels"], cfg["patch"]
    NP = (cfg["img_size"] // p) ** 2
    mlp, ff, Vp = cfg["mlp_dim"], cfg["ff_dim"], cfg["vocab_pad"]

    keys = jax.random.split(key, 8)

    # ---- ViT encoder ----
    pw, pb = _linear(keys[0], C * p * p, D)
    cls = jax.random.normal(keys[2], (1, D), jnp.float32) * 0.02
    pos = jax.random.normal(keys[3], (NP + 1, D), jnp.float32) * 0.02
    enc_layers = []
    for lk in jax.random.split(keys[1], cfg["enc_layers"]):
        k_qkv, k_o, k_1, k_2 = jax.random.split(lk, 4)
        wqkv, bqkv = _linear(k_qkv, D, 3 * D)     # fused Q|K|V
        wo, bo = _linear(k_o, D, D)
        w1, b1 = _linear(k_1, D, mlp)
        w2, b2 = _linear(k_2, mlp, D)
        enc_layers.append(dict(
            ln1_g=jnp.ones((1, D), jnp.float32), ln1_b=jnp.zeros((1, D), jnp.float32),
            wqkv=wqkv, bqkv=bqkv, wo=wo, bo=bo,
            ln2_g=jnp.ones((1, D), jnp.float32), ln2_b=jnp.zeros((1, D), jnp.float32),
            mlp_w1=w1, mlp_b1=b1, mlp_w2=w2, mlp_b2=b2))
    encoder = dict(
        patch_w=pw, patch_b=pb,
        cls_pos=cls + pos[0:1],          # CLS token + its positional embedding
        pos_patch=pos[1:],               # positional embeddings for patches
        stack=_stack_layers(enc_layers),
        lnf_g=jnp.ones((1, D), jnp.float32), lnf_b=jnp.zeros((1, D), jnp.float32))

    # ---- Transformer decoder ----
    dec_layers = []
    for lk in jax.random.split(keys[4], cfg["dec_layers"]):
        ks = jax.random.split(lk, 7)
        s_wqkv, s_bqkv = _linear(ks[0], E, 3 * E)     # fused self-attn Q|K|V
        s_wo, s_bo = _linear(ks[1], E, E)
        c_wq, c_bq = _linear(ks[2], E, E)
        c_wkv, c_bkv = _linear(ks[3], D, 2 * E)       # fused cross-attn K|V
        c_wo, c_bo = _linear(ks[4], E, E)
        w1, b1 = _linear(ks[5], E, ff)
        w2, b2 = _linear(ks[6], ff, E)
        dec_layers.append(dict(
            s_wqkv=s_wqkv, s_bqkv=s_bqkv, s_wo=s_wo, s_bo=s_bo,
            ln1_g=jnp.ones((1, E), jnp.float32), ln1_b=jnp.zeros((1, E), jnp.float32),
            c_wq=c_wq, c_bq=c_bq, c_wkv=c_wkv, c_bkv=c_bkv, c_wo=c_wo, c_bo=c_bo,
            ln2_g=jnp.ones((1, E), jnp.float32), ln2_b=jnp.zeros((1, E), jnp.float32),
            ff_w1=w1, ff_b1=b1, ff_w2=w2, ff_b2=b2,
            ln3_g=jnp.ones((1, E), jnp.float32), ln3_b=jnp.zeros((1, E), jnp.float32)))
    ow, ob = _linear(keys[5], E, V, pad_out=Vp)   # vocab padded to lane-dense 128
    decoder = dict(
        tok_emb=jax.random.normal(keys[6], (V, E), jnp.float32) * 0.02,
        pos_emb=jax.random.normal(keys[7], (cfg["max_len"], E), jnp.float32) * 0.02,
        stack=_stack_layers(dec_layers),
        out_w=ow, out_b=ob)

    return dict(encoder=encoder, decoder=decoder)


# ----------------------------------------------------------------------------
# Main
# ----------------------------------------------------------------------------

if __name__ == "__main__":
    cfg = dict(
        channels=4, img_size=16, patch=8,          # 4 patches (+1 CLS) per image
        hidden=32, enc_layers=2, heads=4, mlp_dim=64,
        embed=32, dec_layers=2, ff_dim=64,
        vocab=50, vocab_pad=128, max_len=16,
        enc_ln_eps=1e-12,                          # HF ViT layer_norm_eps
        dec_ln_eps=1e-5,                           # nn.LayerNorm default
    )

    key = jax.random.PRNGKey(0)
    k_img, k_cap, k_par = jax.random.split(key, 3)

    B, S_cap = 2, 8
    images = jax.random.normal(k_img, (B, cfg["channels"], cfg["img_size"],
                                       cfg["img_size"]), jnp.float32)   # NCHW
    captions = jax.random.randint(k_cap, (B, S_cap), 0, cfg["vocab"], jnp.int32)

    params = init_params(k_par, cfg)

    fwd = jax.jit(functools.partial(vit_captioning_forward, cfg=cfg))
    preds = fwd(images, captions, params)
    jax.block_until_ready(preds)

    assert preds.shape == (B, S_cap, cfg["vocab"]), preds.shape
    assert bool(jnp.all(jnp.isfinite(preds)))
    print("KERNEL_OK")
</pallas_src>

<mosaic_0001>
module attributes {stable_mosaic.version = 11 : i64} {
  func.func @_encoder_stack_kernel(%arg0: i32, %arg1: i32, %arg2: memref<1x4x256xf32, #tpu.memory_space<vmem>>, %arg3: memref<256x32xbf16, #tpu.memory_space<vmem>>, %arg4: memref<1x32xf32, #tpu.memory_space<vmem>>, %arg5: memref<1x32xf32, #tpu.memory_space<vmem>>, %arg6: memref<4x32xf32, #tpu.memory_space<vmem>>, %arg7: memref<1x1x32xf32, #tpu.memory_space<vmem>>, %arg8: memref<1x1x32xf32, #tpu.memory_space<vmem>>, %arg9: memref<1x32x96xbf16, #tpu.memory_space<vmem>>, %arg10: memref<1x1x96xf32, #tpu.memory_space<vmem>>, %arg11: memref<1x32x32xbf16, #tpu.memory_space<vmem>>, %arg12: memref<1x1x32xf32, #tpu.memory_space<vmem>>, %arg13: memref<1x1x32xf32, #tpu.memory_space<vmem>>, %arg14: memref<1x1x32xf32, #tpu.memory_space<vmem>>, %arg15: memref<1x32x64xbf16, #tpu.memory_space<vmem>>, %arg16: memref<1x1x64xf32, #tpu.memory_space<vmem>>, %arg17: memref<1x64x32xbf16, #tpu.memory_space<vmem>>, %arg18: memref<1x1x32xf32, #tpu.memory_space<vmem>>, %arg19: memref<1x32xf32, #tpu.memory_space<vmem>>, %arg20: memref<1x32xf32, #tpu.memory_space<vmem>>, %arg21: memref<1x5x32xf32, #tpu.memory_space<vmem>>, %arg22: memref<5x32xf32, #tpu.memory_space<vmem>>) attributes {dimension_semantics = [#tpu.dimension_semantics<parallel>, #tpu.dimension_semantics<arbitrary>], iteration_bounds = array<i64: 2, 2>, scalar_prefetch = 0 : i64, scratch_operands = 1 : i64, tpu.core_type = #tpu.core_type<tc>, window_params = [{transform_indices = @transform_0, window_bounds = array<i64: 1, 4, 256>}, {pipeline_mode = #tpu.pipeline_mode<synchronous>, transform_indices = @transform_1, window_bounds = array<i64: 256, 32>}, {pipeline_mode = #tpu.pipeline_mode<synchronous>, transform_indices = @transform_2, window_bounds = array<i64: 1, 32>}, {pipeline_mode = #tpu.pipeline_mode<synchronous>, transform_indices = @transform_3, window_bounds = array<i64: 1, 32>}, {pipeline_mode = #tpu.pipeline_mode<synchronous>, transform_indices = @transform_4, window_bounds = array<i64: 4, 32>}, {transform_indices = @transform_5, window_bounds = array<i64: 1, 1, 32>}, {transform_indices = @transform_6, window_bounds = array<i64: 1, 1, 32>}, {transform_indices = @transform_7, window_bounds = array<i64: 1, 32, 96>}, {transform_indices = @transform_8, window_bounds = array<i64: 1, 1, 96>}, {transform_indices = @transform_9, window_bounds = array<i64: 1, 32, 32>}, {transform_indices = @transform_10, window_bounds = array<i64: 1, 1, 32>}, {transform_indices = @transform_11, window_bounds = array<i64: 1, 1, 32>}, {transform_indices = @transform_12, window_bounds = array<i64: 1, 1, 32>}, {transform_indices = @transform_13, window_bounds = array<i64: 1, 32, 64>}, {transform_indices = @transform_14, window_bounds = array<i64: 1, 1, 64>}, {transform_indices = @transform_15, window_bounds = array<i64: 1, 64, 32>}, {transform_indices = @transform_16, window_bounds = array<i64: 1, 1, 32>}, {pipeline_mode = #tpu.pipeline_mode<synchronous>, transform_indices = @transform_17, window_bounds = array<i64: 1, 32>}, {pipeline_mode = #tpu.pipeline_mode<synchronous>, transform_indices = @transform_18, window_bounds = array<i64: 1, 32>}, {transform_indices = @transform_19, window_bounds = array<i64: 1, 5, 32>}]} {
    %c0_i32 = arith.constant 0 : i32
    %0 = arith.cmpi eq, %arg1, %c0_i32 : i32
    %1 = arith.extui %0 : i1 to i32
    %c0_i32_0 = arith.constant 0 : i32
    %2 = arith.cmpi ne, %1, %c0_i32_0 : i32
    scf.if %2 {
      %c0_75 = arith.constant 0 : index
      %c0_76 = arith.constant 0 : index
      %c0_77 = arith.constant 0 : index
      %180 = vector.load %arg2[%c0_75, %c0_76, %c0_77] : memref<1x4x256xf32, #tpu.memory_space<vmem>>, vector<1x4x256xf32>
      %181 = vector.shape_cast %180 : vector<1x4x256xf32> to vector<4x256xf32>
      %182 = arith.truncf %181 : vector<4x256xf32> to vector<4x256xbf16>
      %c0_78 = arith.constant 0 : index
      %c0_79 = arith.constant 0 : index
      %183 = vector.load %arg3[%c0_78, %c0_79] : memref<256x32xbf16, #tpu.memory_space<vmem>>, vector<256x32xbf16>
      %cst_80 = arith.constant dense<0.000000e+00> : vector<4x32xf32>
      %184 = tpu.matmul %182, %183, %cst_80 {dimension_numbers = #tpu.dot_dimension_numbers<[1], [0], [0], [1], [0, 0, 1, 1], [], []>} : vector<4x256xbf16>, vector<256x32xbf16>, vector<4x32xf32> -> vector<4x32xf32>
      %c0_81 = arith.constant 0 : index
      %c0_82 = arith.constant 0 : index
      %185 = vector.load %arg4[%c0_81, %c0_82] : memref<1x32xf32, #tpu.memory_space<vmem>>, vector<1x32xf32>
      %186 = vector.broadcast %185 : vector<1x32xf32> to vector<4x32xf32>
      %187 = arith.addf %184, %186 : vector<4x32xf32>
      %c0_83 = arith.constant 0 : index
      %c0_84 = arith.constant 0 : index
      %188 = vector.load %arg5[%c0_83, %c0_84] : memref<1x32xf32, #tpu.memory_space<vmem>>, vector<1x32xf32>
      %c0_85 = arith.constant 0 : index
      %c0_86 = arith.constant 0 : index
      %189 = vector.load %arg6[%c0_85, %c0_86] : memref<4x32xf32, #tpu.memory_space<vmem>>, vector<4x32xf32>
      %190 = arith.addf %187, %189 : vector<4x32xf32>
      %191 = tpu.concatenate %188, %190 in 0 : vector<1x32xf32>, vector<4x32xf32> -> vector<5x32xf32>
      %c0_87 = arith.constant 0 : index
      %c0_88 = arith.constant 0 : index
      %192 = vector.load %arg22[%c0_87, %c0_88] : memref<5x32xf32, #tpu.memory_space<vmem>>, vector<5x32xf32>
      tpu.vector_store %arg22[%c0_87, %c0_88], %191 {strides = array<i32>} : memref<5x32xf32, #tpu.memory_space<vmem>>, vector<5x32xf32>,
    } else {
    }
    %c0 = arith.constant 0 : index
    %c0_1 = arith.constant 0 : index
    %3 = vector.load %arg22[%c0, %c0_1] : memref<5x32xf32, #tpu.memory_space<vmem>>, vector<5x32xf32>
    %c0_2 = arith.constant 0 : index
    %c0_3 = arith.constant 0 : index
    %c0_4 = arith.constant 0 : index
    %4 = vector.load %arg7[%c0_2, %c0_3, %c0_4] : memref<1x1x32xf32, #tpu.memory_space<vmem>>, vector<1x1x32xf32>
    %5 = vector.shape_cast %4 : vector<1x1x32xf32> to vector<1x32xf32>
    %c0_5 = arith.constant 0 : index
    %c0_6 = arith.constant 0 : index
    %c0_7 = arith.constant 0 : index
    %6 = vector.load %arg8[%c0_5, %c0_6, %c0_7] : memref<1x1x32xf32, #tpu.memory_space<vmem>>, vector<1x1x32xf32>
    %7 = vector.shape_cast %6 : vector<1x1x32xf32> to vector<1x32xf32>
    %cst = arith.constant dense<0.000000e+00> : vector<5xf32>
    %8 = vector.multi_reduction <add>, %3, %cst [1] : vector<5x32xf32> to vector<5xf32>
    %9 = vector.shape_cast %8 : vector<5xf32> to vector<5x1xf32>
    %cst_8 = arith.constant 3.200000e+01 : f32
    %10 = vector.broadcast %cst_8 : f32 to vector<5x1xf32>
    %11 = arith.divf %9, %10 : vector<5x1xf32>
    %12 = vector.broadcast %11 : vector<5x1xf32> to vector<5x32xf32>
    %13 = arith.subf %3, %12 : vector<5x32xf32>
    %14 = arith.mulf %13, %13 : vector<5x32xf32>
    %cst_9 = arith.constant dense<0.000000e+00> : vector<5xf32>
    %15 = vector.multi_reduction <add>, %14, %cst_9 [1] : vector<5x32xf32> to vector<5xf32>
    %16 = vector.shape_cast %15 : vector<5xf32> to vector<5x1xf32>
    %cst_10 = arith.constant 3.200000e+01 : f32
    %17 = vector.broadcast %cst_10 : f32 to vector<5x1xf32>
    %18 = arith.divf %16, %17 : vector<5x1xf32>
    %19 = vector.broadcast %11 : vector<5x1xf32> to vector<5x32xf32>
    %20 = arith.subf %3, %19 : vector<5x32xf32>
    %cst_11 = arith.constant 9.99999996E-13 : f32
    %21 = vector.broadcast %cst_11 : f32 to vector<5x1xf32>
    %22 = arith.addf %18, %21 : vector<5x1xf32>
    %23 = math.rsqrt %22 : vector<5x1xf32>
    %24 = vector.broadcast %23 : vector<5x1xf32> to vector<5x32xf32>
    %25 = arith.mulf %20, %24 : vector<5x32xf32>
    %26 = vector.broadcast %5 : vector<1x32xf32> to vector<5x32xf32>
    %27 = arith.mulf %25, %26 : vector<5x32xf32>
    %28 = vector.broadcast %7 : vector<1x32xf32> to vector<5x32xf32>
    %29 = arith.addf %27, %28 : vector<5x32xf32>
    %c0_12 = arith.constant 0 : index
    %c0_13 = arith.constant 0 : index
    %c0_14 = arith.constant 0 : index
    %30 = vector.load %arg9[%c0_12, %c0_13, %c0_14] : memref<1x32x96xbf16, #tpu.memory_space<vmem>>, vector<1x32x96xbf16>
    %31 = vector.shape_cast %30 : vector<1x32x96xbf16> to vector<32x96xbf16>
    %c0_15 = arith.constant 0 : index
    %c0_16 = arith.constant 0 : index
    %c0_17 = arith.constant 0 : index
    %32 = vector.load %arg10[%c0_15, %c0_16, %c0_17] : memref<1x1x96xf32, #tpu.memory_space<vmem>>, vector<1x1x96xf32>
    %33 = vector.shape_cast %32 : vector<1x1x96xf32> to vector<1x96xf32>
    %c0_18 = arith.constant 0 : index
    %c0_19 = arith.constant 0 : index
    %c0_20 = arith.constant 0 : index
    %34 = vector.load %arg11[%c0_18, %c0_19, %c0_20] : memref<1x32x32xbf16, #tpu.memory_space<vmem>>, vector<1x32x32xbf16>
    %35 = vector.shape_cast %34 : vector<1x32x32xbf16> to vector<32x32xbf16>
    %c0_21 = arith.constant 0 : index
    %c0_22 = arith.constant 0 : index
    %c0_23 = arith.constant 0 : index
    %36 = vector.load %arg12[%c0_21, %c0_22, %c0_23] : memref<1x1x32xf32, #tpu.memory_space<vmem>>, vector<1x1x32xf32>
    %37 = vector.shape_cast %36 : vector<1x1x32xf32> to vector<1x32xf32>
    %38 = arith.truncf %29 : vector<5x32xf32> to vector<5x32xbf16>
    %cst_24 = arith.constant dense<0.000000e+00> : vector<5x96xf32>
    %39 = tpu.matmul %38, %31, %cst_24 {dimension_numbers = #tpu.dot_dimension_numbers<[1], [0], [0], [1], [0, 0, 1, 1], [], []>} : vector<5x32xbf16>, vector<32x96xbf16>, vector<5x96xf32> -> vector<5x96xf32>
    %40 = vector.broadcast %33 : vector<1x96xf32> to vector<5x96xf32>
    %41 = arith.addf %39, %40 : vector<5x96xf32>
    %42 = vector.extract_strided_slice %41 {offsets = [0, 0], sizes = [5, 32], strides = [1, 1]} : vector<5x96xf32> to vector<5x32xf32>
    %43 = vector.extract_strided_slice %41 {offsets = [0, 32], sizes = [5, 32], strides = [1, 1]} : vector<5x96xf32> to vector<5x32xf32>
    %44 = vector.extract_strided_slice %41 {offsets = [0, 64], sizes = [5, 32], strides = [1, 1]} : vector<5x96xf32> to vector<5x32xf32>
    %cst_25 = arith.constant 0.353553385 : f32
    %45 = vector.broadcast %cst_25 : f32 to vector<5x32xf32>
    %46 = arith.mulf %42, %45 : vector<5x32xf32>
    %47 = arith.truncf %46 : vector<5x32xf32> to vector<5x32xbf16>
    %48 = arith.truncf %43 : vector<5x32xf32> to vector<5x32xbf16>
    %49 = arith.truncf %44 : vector<5x32xf32> to vector<5x32xbf16>
    %50 = vector.extract_strided_slice %47 {offsets = [0, 0], sizes = [5, 8], strides = [1, 1]} : vector<5x32xbf16> to vector<5x8xbf16>
    %51 = vector.extract_strided_slice %48 {offsets = [0, 0], sizes = [5, 8], strides = [1, 1]} : vector<5x32xbf16> to vector<5x8xbf16>
    %cst_26 = arith.constant dense<0.000000e+00> : vector<5x5xf32>
    %52 = tpu.matmul %50, %51, %cst_26 {dimension_numbers = #tpu.dot_dimension_numbers<[1], [1], [0], [0], [0, 0, 1, 0], [], []>} : vector<5x8xbf16>, vector<5x8xbf16>, vector<5x5xf32> -> vector<5x5xf32>
    %cst_27 = arith.constant dense<0xFF800000> : vector<5xf32>
    %53 = vector.multi_reduction <maximumf>, %52, %cst_27 [1] : vector<5x5xf32> to vector<5xf32>
    %54 = vector.shape_cast %53 : vector<5xf32> to vector<5x1xf32>
    %55 = vector.broadcast %54 : vector<5x1xf32> to vector<5x5xf32>
    %56 = arith.subf %52, %55 : vector<5x5xf32>
    %57 = math.exp %56 : vector<5x5xf32>
    %cst_28 = arith.constant dense<0.000000e+00> : vector<5xf32>
    %58 = vector.multi_reduction <add>, %57, %cst_28 [1] : vector<5x5xf32> to vector<5xf32>
    %59 = vector.shape_cast %58 : vector<5xf32> to vector<5x1xf32>
    %60 = tpu.reciprocal %59 {approx = true} : vector<5x1xf32> -> vector<5x1xf32>
    %61 = vector.broadcast %60 : vector<5x1xf32> to vector<5x5xf32>
    %62 = arith.mulf %57, %61 : vector<5x5xf32>
    %63 = arith.truncf %62 : vector<5x5xf32> to vector<5x5xbf16>
    %64 = vector.extract_strided_slice %49 {offsets = [0, 0], sizes = [5, 8], strides = [1, 1]} : vector<5x32xbf16> to vector<5x8xbf16>
    %cst_29 = arith.constant dense<0.000000e+00> : vector<5x8xf32>
    %65 = tpu.matmul %63, %64, %cst_29 {dimension_numbers = #tpu.dot_dimension_numbers<[1], [0], [0], [1], [0, 0, 1, 1], [], []>} : vector<5x5xbf16>, vector<5x8xbf16>, vector<5x8xf32> -> vector<5x8xf32>
    %66 = vector.extract_strided_slice %47 {offsets = [0, 8], sizes = [5, 8], strides = [1, 1]} : vector<5x32xbf16> to vector<5x8xbf16>
    %67 = vector.extract_strided_slice %48 {offsets = [0, 8], sizes = [5, 8], strides = [1, 1]} : vector<5x32xbf16> to vector<5x8xbf16>
    %cst_30 = arith.constant dense<0.000000e+00> : vector<5x5xf32>
    %68 = tpu.matmul %66, %67, %cst_30 {dimension_numbers = #tpu.dot_dimension_numbers<[1], [1], [0], [0], [0, 0, 1, 0], [], []>} : vector<5x8xbf16>, vector<5x8xbf16>, vector<5x5xf32> -> vector<5x5xf32>
    %cst_31 = arith.constant dense<0xFF800000> : vector<5xf32>
    %69 = vector.multi_reduction <maximumf>, %68, %cst_31 [1] : vector<5x5xf32> to vector<5xf32>
    %70 = vector.shape_cast %69 : vector<5xf32> to vector<5x1xf32>
    %71 = vector.broadcast %70 : vector<5x1xf32> to vector<5x5xf32>
    %72 = arith.subf %68, %71 : vector<5x5xf32>
    %73 = math.exp %72 : vector<5x5xf32>
    %cst_32 = arith.constant dense<0.000000e+00> : vector<5xf32>
    %74 = vector.multi_reduction <add>, %73, %cst_32 [1] : vector<5x5xf32> to vector<5xf32>
    %75 = vector.shape_cast %74 : vector<5xf32> to vector<5x1xf32>
    %76 = tpu.reciprocal %75 {approx = true} : vector<5x1xf32> -> vector<5x1xf32>
    %77 = vector.broadcast %76 : vector<5x1xf32> to vector<5x5xf32>
    %78 = arith.mulf %73, %77 : vector<5x5xf32>
    %79 = arith.truncf %78 : vector<5x5xf32> to vector<5x5xbf16>
    %80 = vector.extract_strided_slice %49 {offsets = [0, 8], sizes = [5, 8], strides = [1, 1]} : vector<5x32xbf16> to vector<5x8xbf16>
    %cst_33 = arith.constant dense<0.000000e+00> : vector<5x8xf32>
    %81 = tpu.matmul %79, %80, %cst_33 {dimension_numbers = #tpu.dot_dimension_numbers<[1], [0], [0], [1], [0, 0, 1, 1], [], []>} : vector<5x5xbf16>, vector<5x8xbf16>, vector<5x8xf32> -> vector<5x8xf32>
    %82 = vector.extract_strided_slice %47 {offsets = [0, 16], sizes = [5, 8], strides = [1, 1]} : vector<5x32xbf16> to vector<5x8xbf16>
    %83 = vector.extract_strided_slice %48 {offsets = [0, 16], sizes = [5, 8], strides = [1, 1]} : vector<5x32xbf16> to vector<5x8xbf16>
    %cst_34 = arith.constant dense<0.000000e+00> : vector<5x5xf32>
    %84 = tpu.matmul %82, %83, %cst_34 {dimension_numbers = #tpu.dot_dimension_numbers<[1], [1], [0], [0], [0, 0, 1, 0], [], []>} : vector<5x8xbf16>, vector<5x8xbf16>, vector<5x5xf32> -> vector<5x5xf32>
    %cst_35 = arith.constant dense<0xFF800000> : vector<5xf32>
    %85 = vector.multi_reduction <maximumf>, %84, %cst_35 [1] : vector<5x5xf32> to vector<5xf32>
    %86 = vector.shape_cast %85 : vector<5xf32> to vector<5x1xf32>
    %87 = vector.broadcast %86 : vector<5x1xf32> to vector<5x5xf32>
    %88 = arith.subf %84, %87 : vector<5x5xf32>
    %89 = math.exp %88 : vector<5x5xf32>
    %cst_36 = arith.constant dense<0.000000e+00> : vector<5xf32>
    %90 = vector.multi_reduction <add>, %89, %cst_36 [1] : vector<5x5xf32> to vector<5xf32>
    %91 = vector.shape_cast %90 : vector<5xf32> to vector<5x1xf32>
    %92 = tpu.reciprocal %91 {approx = true} : vector<5x1xf32> -> vector<5x1xf32>
    %93 = vector.broadcast %92 : vector<5x1xf32> to vector<5x5xf32>
    %94 = arith.mulf %89, %93 : vector<5x5xf32>
    %95 = arith.truncf %94 : vector<5x5xf32> to vector<5x5xbf16>
    %96 = vector.extract_strided_slice %49 {offsets = [0, 16], sizes = [5, 8], strides = [1, 1]} : vector<5x32xbf16> to vector<5x8xbf16>
    %cst_37 = arith.constant dense<0.000000e+00> : vector<5x8xf32>
    %97 = tpu.matmul %95, %96, %cst_37 {dimension_numbers = #tpu.dot_dimension_numbers<[1], [0], [0], [1], [0, 0, 1, 1], [], []>} : vector<5x5xbf16>, vector<5x8xbf16>, vector<5x8xf32> -> vector<5x8xf32>
    %98 = vector.extract_strided_slice %47 {offsets = [0, 24], sizes = [5, 8], strides = [1, 1]} : vector<5x32xbf16> to vector<5x8xbf16>
    %99 = vector.extract_strided_slice %48 {offsets = [0, 24], sizes = [5, 8], strides = [1, 1]} : vector<5x32xbf16> to vector<5x8xbf16>
    %cst_38 = arith.constant dense<0.000000e+00> : vector<5x5xf32>
    %100 = tpu.matmul %98, %99, %cst_38 {dimension_numbers = #tpu.dot_dimension_numbers<[1], [1], [0], [0], [0, 0, 1, 0], [], []>} : vector<5x8xbf16>, vector<5x8xbf16>, vector<5x5xf32> -> vector<5x5xf32>
    %cst_39 = arith.constant dense<0xFF800000> : vector<5xf32>
    %101 = vector.multi_reduction <maximumf>, %100, %cst_39 [1] : vector<5x5xf32> to vector<5xf32>
    %102 = vector.shape_cast %101 : vector<5xf32> to vector<5x1xf32>
    %103 = vector.broadcast %102 : vector<5x1xf32> to vector<5x5xf32>
    %104 = arith.subf %100, %103 : vector<5x5xf32>
    %105 = math.exp %104 : vector<5x5xf32>
    %cst_40 = arith.constant dense<0.000000e+00> : vector<5xf32>
    %106 = vector.multi_reduction <add>, %105, %cst_40 [1] : vector<5x5xf32> to vector<5xf32>
    %107 = vector.shape_cast %106 : vector<5xf32> to vector<5x1xf32>
    %108 = tpu.reciprocal %107 {approx = true} : vector<5x1xf32> -> vector<5x1xf32>
    %109 = vector.broadcast %108 : vector<5x1xf32> to vector<5x5xf32>
    %110 = arith.mulf %105, %109 : vector<5x5xf32>
    %111 = arith.truncf %110 : vector<5x5xf32> to vector<5x5xbf16>
    %112 = vector.extract_strided_slice %49 {offsets = [0, 24], sizes = [5, 8], strides = [1, 1]} : vector<5x32xbf16> to vector<5x8xbf16>
    %cst_41 = arith.constant dense<0.000000e+00> : vector<5x8xf32>
    %113 = tpu.matmul %111, %112, %cst_41 {dimension_numbers = #tpu.dot_dimension_numbers<[1], [0], [0], [1], [0, 0, 1, 1], [], []>} : vector<5x5xbf16>, vector<5x8xbf16>, vector<5x8xf32> -> vector<5x8xf32>
    %114 = tpu.concatenate %65, %81, %97, %113 in 1 : vector<5x8xf32>, vector<5x8xf32>, vector<5x8xf32>, vector<5x8xf32> -> vector<5x32xf32>
    %115 = arith.truncf %114 : vector<5x32xf32> to vector<5x32xbf16>
    %cst_42 = arith.constant dense<0.000000e+00> : vector<5x32xf32>
    %116 = tpu.matmul %115, %35, %cst_42 {dimension_numbers = #tpu.dot_dimension_numbers<[1], [0], [0], [1], [0, 0, 1, 1], [], []>} : vector<5x32xbf16>, vector<32x32xbf16>, vector<5x32xf32> -> vector<5x32xf32>
    %117 = vector.broadcast %37 : vector<1x32xf32> to vector<5x32xf32>
    %118 = arith.addf %116, %117 : vector<5x32xf32>
    %119 = arith.addf %3, %118 : vector<5x32xf32>
    %c0_43 = arith.constant 0 : index
    %c0_44 = arith.constant 0 : index
    %c0_45 = arith.constant 0 : index
    %120 = vector.load %arg13[%c0_43, %c0_44, %c0_45] : memref<1x1x32xf32, #tpu.memory_space<vmem>>, vector<1x1x32xf32>
    %121 = vector.shape_cast %120 : vector<1x1x32xf32> to vector<1x32xf32>
    %c0_46 = arith.constant 0 : index
    %c0_47 = arith.constant 0 : index
    %c0_48 = arith.constant 0 : index
    %122 = vector.load %arg14[%c0_46, %c0_47, %c0_48] : memref<1x1x32xf32, #tpu.memory_space<vmem>>, vector<1x1x32xf32>
    %123 = vector.shape_cast %122 : vector<1x1x32xf32> to vector<1x32xf32>
    %cst_49 = arith.constant dense<0.000000e+00> : vector<5xf32>
    %124 = vector.multi_reduction <add>, %119, %cst_49 [1] : vector<5x32xf32> to vector<5xf32>
    %125 = vector.shape_cast %124 : vector<5xf32> to vector<5x1xf32>
    %cst_50 = arith.constant 3.200000e+01 : f32
    %126 = vector.broadcast %cst_50 : f32 to vector<5x1xf32>
    %127 = arith.divf %125, %126 : vector<5x1xf32>
    %128 = vector.broadcast %127 : vector<5x1xf32> to vector<5x32xf32>
    %129 = arith.subf %119, %128 : vector<5x32xf32>
    %130 = arith.mulf %129, %129 : vector<5x32xf32>
    %cst_51 = arith.constant dense<0.000000e+00> : vector<5xf32>
    %131 = vector.multi_reduction <add>, %130, %cst_51 [1] : vector<5x32xf32> to vector<5xf32>
    %132 = vector.shape_cast %131 : vector<5xf32> to vector<5x1xf32>
    %cst_52 = arith.constant 3.200000e+01 : f32
    %133 = vector.broadcast %cst_52 : f32 to vector<5x1xf32>
    %134 = arith.divf %132, %133 : vector<5x1xf32>
    %135 = vector.broadcast %127 : vector<5x1xf32> to vector<5x32xf32>
    %136 = arith.subf %119, %135 : vector<5x32xf32>
    %cst_53 = arith.constant 9.99999996E-13 : f32
    %137 = vector.broadcast %cst_53 : f32 to vector<5x1xf32>
    %138 = arith.addf %134, %137 : vector<5x1xf32>
    %139 = math.rsqrt %138 : vector<5x1xf32>
    %140 = vector.broadcast %139 : vector<5x1xf32> to vector<5x32xf32>
    %141 = arith.mulf %136, %140 : vector<5x32xf32>
    %142 = vector.broadcast %121 : vector<1x32xf32> to vector<5x32xf32>
    %143 = arith.mulf %141, %142 : vector<5x32xf32>
    %144 = vector.broadcast %123 : vector<1x32xf32> to vector<5x32xf32>
    %145 = arith.addf %143, %144 : vector<5x32xf32>
    %146 = arith.truncf %145 : vector<5x32xf32> to vector<5x32xbf16>
    %c0_54 = arith.constant 0 : index
    %c0_55 = arith.constant 0 : index
    %c0_56 = arith.constant 0 : index
    %147 = vector.load %arg15[%c0_54, %c0_55, %c0_56] : memref<1x32x64xbf16, #tpu.memory_space<vmem>>, vector<1x32x64xbf16>
    %148 = vector.shape_cast %147 : vector<1x32x64xbf16> to vector<32x64xbf16>
    %cst_57 = arith.constant dense<0.000000e+00> : vector<5x64xf32>
    %149 = tpu.matmul %146, %148, %cst_57 {dimension_numbers = #tpu.dot_dimension_numbers<[1], [0], [0], [1], [0, 0, 1, 1], [], []>} : vector<5x32xbf16>, vector<32x64xbf16>, vector<5x64xf32> -> vector<5x64xf32>
    %c0_58 = arith.constant 0 : index
    %c0_59 = arith.constant 0 : index
    %c0_60 = arith.constant 0 : index
    %150 = vector.load %arg16[%c0_58, %c0_59, %c0_60] : memref<1x1x64xf32, #tpu.memory_space<vmem>>, vector<1x1x64xf32>
    %151 = vector.shape_cast %150 : vector<1x1x64xf32> to vector<1x64xf32>
    %152 = vector.broadcast %151 : vector<1x64xf32> to vector<5x64xf32>
    %153 = arith.addf %149, %152 : vector<5x64xf32>
    %154 = arith.mulf %153, %153 : vector<5x64xf32>
    %155 = arith.mulf %153, %154 : vector<5x64xf32>
    %cst_61 = arith.constant 4.471500e-02 : f32
    %156 = vector.broadcast %cst_61 : f32 to vector<5x64xf32>
    %157 = arith.mulf %156, %155 : vector<5x64xf32>
    %158 = arith.addf %153, %157 : vector<5x64xf32>
    %cst_62 = arith.constant 0.797884583 : f32
    %159 = vector.broadcast %cst_62 : f32 to vector<5x64xf32>
    %160 = arith.mulf %159, %158 : vector<5x64xf32>
    %161 = math.tanh %160 : vector<5x64xf32>
    %cst_63 = arith.constant 1.000000e+00 : f32
    %162 = vector.broadcast %cst_63 : f32 to vector<5x64xf32>
    %163 = arith.addf %162, %161 : vector<5x64xf32>
    %cst_64 = arith.constant 5.000000e-01 : f32
    %164 = vector.broadcast %cst_64 : f32 to vector<5x64xf32>
    %165 = arith.mulf %164, %163 : vector<5x64xf32>
    %166 = arith.mulf %153, %165 : vector<5x64xf32>
    %167 = arith.truncf %166 : vector<5x64xf32> to vector<5x64xbf16>
    %c0_65 = arith.constant 0 : index
    %c0_66 = arith.constant 0 : index
    %c0_67 = arith.constant 0 : index
    %168 = vector.load %arg17[%c0_65, %c0_66, %c0_67] : memref<1x64x32xbf16, #tpu.memory_space<vmem>>, vector<1x64x32xbf16>
    %169 = vector.shape_cast %168 : vector<1x64x32xbf16> to vector<64x32xbf16>
    %cst_68 = arith.constant dense<0.000000e+00> : vector<5x32xf32>
    %170 = tpu.matmul %167, %169, %cst_68 {dimension_numbers = #tpu.dot_dimension_numbers<[1], [0], [0], [1], [0, 0, 1, 1], [], []>} : vector<5x64xbf16>, vector<64x32xbf16>, vector<5x32xf32> -> vector<5x32xf32>
    %c0_69 = arith.constant 0 : index
    %c0_70 = arith.constant 0 : index
    %c0_71 = arith.constant 0 : index
    %171 = vector.load %arg18[%c0_69, %c0_70, %c0_71] : memref<1x1x32xf32, #tpu.memory_space<vmem>>, vector<1x1x32xf32>
    %172 = vector.shape_cast %171 : vector<1x1x32xf32> to vector<1x32xf32>
    %173 = vector.broadcast %172 : vector<1x32xf32> to vector<5x32xf32>
    %174 = arith.addf %170, %173 : vector<5x32xf32>
    %175 = arith.addf %119, %174 : vector<5x32xf32>
    %c0_72 = arith.constant 0 : index
    %c0_73 = arith.constant 0 : index
    %176 = vector.load %arg22[%c0_72, %c0_73] : memref<5x32xf32, #tpu.memory_space<vmem>>, vector<5x32xf32>
    tpu.vector_store %arg22[%c0_72, %c0_73], %175 {strides = array<i32>} : memref<5x32xf32, #tpu.memory_space<vmem>>, vector<5x32xf32>,
    %c1_i32 = arith.constant 1 : i32
    %177 = arith.cmpi eq, %arg1, %c1_i32 : i32
    %178 = arith.extui %177 : i1 to i32
    %c0_i32_74 = arith.constant 0 : i32
    %179 = arith.cmpi ne, %178, %c0_i32_74 : i32
    scf.if %179 {
      %c0_75 = arith.constant 0 : index
      %c0_76 = arith.constant 0 : index
      %180 = vector.load %arg19[%c0_75, %c0_76] : memref<1x32xf32, #tpu.memory_space<vmem>>, vector<1x32xf32>
      %c0_77 = arith.constant 0 : index
      %c0_78 = arith.constant 0 : index
      %181 = vector.load %arg20[%c0_77, %c0_78] : memref<1x32xf32, #tpu.memory_space<vmem>>, vector<1x32xf32>
      %cst_79 = arith.constant dense<0.000000e+00> : vector<5xf32>
      %182 = vector.multi_reduction <add>, %175, %cst_79 [1] : vector<5x32xf32> to vector<5xf32>
      %183 = vector.shape_cast %182 : vector<5xf32> to vector<5x1xf32>
      %cst_80 = arith.constant 3.200000e+01 : f32
      %184 = vector.broadcast %cst_80 : f32 to vector<5x1xf32>
      %185 = arith.divf %183, %184 : vector<5x1xf32>
      %186 = vector.broadcast %185 : vector<5x1xf32> to vector<5x32xf32>
      %187 = arith.subf %175, %186 : vector<5x32xf32>
      %188 = arith.mulf %187, %187 : vector<5x32xf32>
      %cst_81 = arith.constant dense<0.000000e+00> : vector<5xf32>
      %189 = vector.multi_reduction <add>, %188, %cst_81 [1] : vector<5x32xf32> to vector<5xf32>
      %190 = vector.shape_cast %189 : vector<5xf32> to vector<5x1xf32>
      %cst_82 = arith.constant 3.200000e+01 : f32
      %191 = vector.broadcast %cst_82 : f32 to vector<5x1xf32>
      %192 = arith.divf %190, %191 : vector<5x1xf32>
      %193 = vector.broadcast %185 : vector<5x1xf32> to vector<5x32xf32>
      %194 = arith.subf %175, %193 : vector<5x32xf32>
      %cst_83 = arith.constant 9.99999996E-13 : f32
      %195 = vector.broadcast %cst_83 : f32 to vector<5x1xf32>
      %196 = arith.addf %192, %195 : vector<5x1xf32>
      %197 = math.rsqrt %196 : vector<5x1xf32>
      %198 = vector.broadcast %197 : vector<5x1xf32> to vector<5x32xf32>
      %199 = arith.mulf %194, %198 : vector<5x32xf32>
      %200 = vector.broadcast %180 : vector<1x32xf32> to vector<5x32xf32>
      %201 = arith.mulf %199, %200 : vector<5x32xf32>
      %202 = vector.broadcast %181 : vector<1x32xf32> to vector<5x32xf32>
      %203 = arith.addf %201, %202 : vector<5x32xf32>
      %c0_84 = arith.constant 0 : index
      %c0_85 = arith.constant 0 : index
      %c0_86 = arith.constant 0 : index
      %204 = vector.load %arg21[%c0_84, %c0_85, %c0_86] : memref<1x5x32xf32, #tpu.memory_space<vmem>>, vector<1x5x32xf32>
      %205 = vector.shape_cast %204 : vector<1x5x32xf32> to vector<5x32xf32>
      %206 = vector.shape_cast %203 : vector<5x32xf32> to vector<1x5x32xf32>
      tpu.vector_store %arg21[%c0_84, %c0_85, %c0_86], %206 {strides = array<i32>} : memref<1x5x32xf32, #tpu.memory_space<vmem>>, vector<1x5x32xf32>,
    } else {
    }
    return
  }
  func.func @transform_0(%arg0: i32, %arg1: i32) -> (i32, i32, i32) {
    %c0_i32 = arith.constant 0 : i32
    %c0_i32_0 = arith.constant 0 : i32
    %c0_i32_1 = arith.constant 0 : i32
    return %arg0, %c0_i32, %c0_i32_0 : i32, i32, i32
  }
  func.func @transform_1(%arg0: i32, %arg1: i32) -> (i32, i32) {
    %c0_i32 = arith.constant 0 : i32
    %c0_i32_0 = arith.constant 0 : i32
    %c0_i32_1 = arith.constant 0 : i32
    return %c0_i32, %c0_i32_0 : i32, i32
  }
  func.func @transform_2(%arg0: i32, %arg1: i32) -> (i32, i32) {
    %c0_i32 = arith.constant 0 : i32
    %c0_i32_0 = arith.constant 0 : i32
    %c0_i32_1 = arith.constant 0 : i32
    return %c0_i32, %c0_i32_0 : i32, i32
  }
  func.func @transform_3(%arg0: i32, %arg1: i32) -> (i32, i32) {
    %c0_i32 = arith.constant 0 : i32
    %c0_i32_0 = arith.constant 0 : i32
    %c0_i32_1 = arith.constant 0 : i32
    return %c0_i32, %c0_i32_0 : i32, i32
  }
  func.func @transform_4(%arg0: i32, %arg1: i32) -> (i32, i32) {
    %c0_i32 = arith.constant 0 : i32
    %c0_i32_0 = arith.constant 0 : i32
    %c0_i32_1 = arith.constant 0 : i32
    return %c0_i32, %c0_i32_0 : i32, i32
  }
  func.func @transform_5(%arg0: i32, %arg1: i32) -> (i32, i32, i32) {
    %c0_i32 = arith.constant 0 : i32
    %c0_i32_0 = arith.constant 0 : i32
    %c0_i32_1 = arith.constant 0 : i32
    return %arg1, %c0_i32, %c0_i32_0 : i32, i32, i32
  }
  func.func @transform_6(%arg0: i32, %arg1: i32) -> (i32, i32, i32) {
    %c0_i32 = arith.constant 0 : i32
    %c0_i32_0 = arith.constant 0 : i32
    %c0_i32_1 = arith.constant 0 : i32
    return %arg1, %c0_i32, %c0_i32_0 : i32, i32, i32
  }
  func.func @transform_7(%arg0: i32, %arg1: i32) -> (i32, i32, i32) {
    %c0_i32 = arith.constant 0 : i32
    %c0_i32_0 = arith.constant 0 : i32
    %c0_i32_1 = arith.constant 0 : i32
    return %arg1, %c0_i32, %c0_i32_0 : i32, i32, i32
  }
  func.func @transform_8(%arg0: i32, %arg1: i32) -> (i32, i32, i32) {
    %c0_i32 = arith.constant 0 : i32
    %c0_i32_0 = arith.constant 0 : i32
    %c0_i32_1 = arith.constant 0 : i32
    return %arg1, %c0_i32, %c0_i32_0 : i32, i32, i32
  }
  func.func @transform_9(%arg0: i32, %arg1: i32) -> (i32, i32, i32) {
    %c0_i32 = arith.constant 0 : i32
    %c0_i32_0 = arith.constant 0 : i32
    %c0_i32_1 = arith.constant 0 : i32
    return %arg1, %c0_i32, %c0_i32_0 : i32, i32, i32
  }
  func.func @transform_10(%arg0: i32, %arg1: i32) -> (i32, i32, i32) {
    %c0_i32 = arith.constant 0 : i32
    %c0_i32_0 = arith.constant 0 : i32
    %c0_i32_1 = arith.constant 0 : i32
    return %arg1, %c0_i32, %c0_i32_0 : i32, i32, i32
  }
  func.func @transform_11(%arg0: i32, %arg1: i32) -> (i32, i32, i32) {
    %c0_i32 = arith.constant 0 : i32
    %c0_i32_0 = arith.constant 0 : i32
    %c0_i32_1 = arith.constant 0 : i32
    return %arg1, %c0_i32, %c0_i32_0 : i32, i32, i32
  }
  func.func @transform_12(%arg0: i32, %arg1: i32) -> (i32, i32, i32) {
    %c0_i32 = arith.constant 0 : i32
    %c0_i32_0 = arith.constant 0 : i32
    %c0_i32_1 = arith.constant 0 : i32
    return %arg1, %c0_i32, %c0_i32_0 : i32, i32, i32
  }
  func.func @transform_13(%arg0: i32, %arg1: i32) -> (i32, i32, i32) {
    %c0_i32 = arith.constant 0 : i32
    %c0_i32_0 = arith.constant 0 : i32
    %c0_i32_1 = arith.constant 0 : i32
    return %arg1, %c0_i32, %c0_i32_0 : i32, i32, i32
  }
  func.func @transform_14(%arg0: i32, %arg1: i32) -> (i32, i32, i32) {
    %c0_i32 = arith.constant 0 : i32
    %c0_i32_0 = arith.constant 0 : i32
    %c0_i32_1 = arith.constant 0 : i32
    return %arg1, %c0_i32, %c0_i32_0 : i32, i32, i32
  }
  func.func @transform_15(%arg0: i32, %arg1: i32) -> (i32, i32, i32) {
    %c0_i32 = arith.constant 0 : i32
    %c0_i32_0 = arith.constant 0 : i32
    %c0_i32_1 = arith.constant 0 : i32
    return %arg1, %c0_i32, %c0_i32_0 : i32, i32, i32
  }
  func.func @transform_16(%arg0: i32, %arg1: i32) -> (i32, i32, i32) {
    %c0_i32 = arith.constant 0 : i32
    %c0_i32_0 = arith.constant 0 : i32
    %c0_i32_1 = arith.constant 0 : i32
    return %arg1, %c0_i32, %c0_i32_0 : i32, i32, i32
  }
  func.func @transform_17(%arg0: i32, %arg1: i32) -> (i32, i32) {
    %c0_i32 = arith.constant 0 : i32
    %c0_i32_0 = arith.constant 0 : i32
    %c0_i32_1 = arith.constant 0 : i32
    return %c0_i32, %c0_i32_0 : i32, i32
  }
  func.func @transform_18(%arg0: i32, %arg1: i32) -> (i32, i32) {
    %c0_i32 = arith.constant 0 : i32
    %c0_i32_0 = arith.constant 0 : i32
    %c0_i32_1 = arith.constant 0 : i32
    return %c0_i32, %c0_i32_0 : i32, i32
  }
  func.func @transform_19(%arg0: i32, %arg1: i32) -> (i32, i32, i32) {
    %c0_i32 = arith.constant 0 : i32
    %c0_i32_0 = arith.constant 0 : i32
    %c0_i32_1 = arith.constant 0 : i32
    return %arg0, %c0_i32, %c0_i32_0 : i32, i32, i32
  }
}

module attributes {stable_mosaic.version = 11 : i64} {
  func.func @_decoder_stack_kernel(%arg0: i32, %arg1: i32, %arg2: memref<1x8x32xf32, #tpu.memory_space<vmem>>, %arg3: memref<1x5x32xf32, #tpu.memory_space<vmem>>, %arg4: memref<8x8xf32, #tpu.memory_space<vmem>>, %arg5: memref<1x32x96xbf16, #tpu.memory_space<vmem>>, %arg6: memref<1x1x96xf32, #tpu.memory_space<vmem>>, %arg7: memref<1x32x32xbf16, #tpu.memory_space<vmem>>, %arg8: memref<1x1x32xf32, #tpu.memory_space<vmem>>, %arg9: memref<1x1x32xf32, #tpu.memory_space<vmem>>, %arg10: memref<1x1x32xf32, #tpu.memory_space<vmem>>, %arg11: memref<1x32x32xbf16, #tpu.memory_space<vmem>>, %arg12: memref<1x1x32xf32, #tpu.memory_space<vmem>>, %arg13: memref<1x32x64xbf16, #tpu.memory_space<vmem>>, %arg14: memref<1x1x64xf32, #tpu.memory_space<vmem>>, %arg15: memref<1x32x32xbf16, #tpu.memory_space<vmem>>, %arg16: memref<1x1x32xf32, #tpu.memory_space<vmem>>, %arg17: memref<1x1x32xf32, #tpu.memory_space<vmem>>, %arg18: memref<1x1x32xf32, #tpu.memory_space<vmem>>, %arg19: memref<1x32x64xbf16, #tpu.memory_space<vmem>>, %arg20: memref<1x1x64xf32, #tpu.memory_space<vmem>>, %arg21: memref<1x64x32xbf16, #tpu.memory_space<vmem>>, %arg22: memref<1x1x32xf32, #tpu.memory_space<vmem>>, %arg23: memref<1x1x32xf32, #tpu.memory_space<vmem>>, %arg24: memref<1x1x32xf32, #tpu.memory_space<vmem>>, %arg25: memref<32x128xbf16, #tpu.memory_space<vmem>>, %arg26: memref<1x128xf32, #tpu.memory_space<vmem>>, %arg27: memref<1x8x128xf32, #tpu.memory_space<vmem>>, %arg28: memref<8x32xf32, #tpu.memory_space<vmem>>) attributes {dimension_semantics = [#tpu.dimension_semantics<parallel>, #tpu.dimension_semantics<arbitrary>], iteration_bounds = array<i64: 2, 2>, scalar_prefetch = 0 : i64, scratch_operands = 1 : i64, tpu.core_type = #tpu.core_type<tc>, window_params = [{transform_indices = @transform_0, window_bounds = array<i64: 1, 8, 32>}, {transform_indices = @transform_1, window_bounds = array<i64: 1, 5, 32>}, {pipeline_mode = #tpu.pipeline_mode<synchronous>, transform_indices = @transform_2, window_bounds = array<i64: 8, 8>}, {transform_indices = @transform_3, window_bounds = array<i64: 1, 32, 96>}, {transform_indices = @transform_4, window_bounds = array<i64: 1, 1, 96>}, {transform_indices = @transform_5, window_bounds = array<i64: 1, 32, 32>}, {transform_indices = @transform_6, window_bounds = array<i64: 1, 1, 32>}, {transform_indices = @transform_7, window_bounds = array<i64: 1, 1, 32>}, {transform_indices = @transform_8, window_bounds = array<i64: 1, 1, 32>}, {transform_indices = @transform_9, window_bounds = array<i64: 1, 32, 32>}, {transform_indices = @transform_10, window_bounds = array<i64: 1, 1, 32>}, {transform_indices = @transform_11, window_bounds = array<i64: 1, 32, 64>}, {transform_indices = @transform_12, window_bounds = array<i64: 1, 1, 64>}, {transform_indices = @transform_13, window_bounds = array<i64: 1, 32, 32>}, {transform_indices = @transform_14, window_bounds = array<i64: 1, 1, 32>}, {transform_indices = @transform_15, window_bounds = array<i64: 1, 1, 32>}, {transform_indices = @transform_16, window_bounds = array<i64: 1, 1, 32>}, {transform_indices = @transform_17, window_bounds = array<i64: 1, 32, 64>}, {transform_indices = @transform_18, window_bounds = array<i64: 1, 1, 64>}, {transform_indices = @transform_19, window_bounds = array<i64: 1, 64, 32>}, {transform_indices = @transform_20, window_bounds = array<i64: 1, 1, 32>}, {transform_indices = @transform_21, window_bounds = array<i64: 1, 1, 32>}, {transform_indices = @transform_22, window_bounds = array<i64: 1, 1, 32>}, {pipeline_mode = #tpu.pipeline_mode<synchronous>, transform_indices = @transform_23, window_bounds = array<i64: 32, 128>}, {pipeline_mode = #tpu.pipeline_mode<synchronous>, transform_indices = @transform_24, window_bounds = array<i64: 1, 128>}, {transform_indices = @transform_25, window_bounds = array<i64: 1, 8, 128>}]} {
    %c0_i32 = arith.constant 0 : i32
    %0 = arith.cmpi eq, %arg1, %c0_i32 : i32
    %1 = arith.extui %0 : i1 to i32
    %c0_i32_0 = arith.constant 0 : i32
    %2 = arith.cmpi ne, %1, %c0_i32_0 : i32
    scf.if %2 {
      %c0_126 = arith.constant 0 : index
      %c0_127 = arith.constant 0 : index
      %c0_128 = arith.constant 0 : index
      %299 = vector.load %arg2[%c0_126, %c0_127, %c0_128] : memref<1x8x32xf32, #tpu.memory_space<vmem>>, vector<1x8x32xf32>
      %300 = vector.shape_cast %299 : vector<1x8x32xf32> to vector<8x32xf32>
      %c0_129 = arith.constant 0 : index
      %c0_130 = arith.constant 0 : index
      %301 = vector.load %arg28[%c0_129, %c0_130] : memref<8x32xf32, #tpu.memory_space<vmem>>, vector<8x32xf32>
      tpu.vector_store %arg28[%c0_129, %c0_130], %300 {strides = array<i32>} : memref<8x32xf32, #tpu.memory_space<vmem>>, vector<8x32xf32>,
    } else {
    }
    %c0 = arith.constant 0 : index
    %c0_1 = arith.constant 0 : index
    %3 = vector.load %arg28[%c0, %c0_1] : memref<8x32xf32, #tpu.memory_space<vmem>>, vector<8x32xf32>
    %c0_2 = arith.constant 0 : index
    %c0_3 = arith.constant 0 : index
    %c0_4 = arith.constant 0 : index
    %4 = vector.load %arg3[%c0_2, %c0_3, %c0_4] : memref<1x5x32xf32, #tpu.memory_space<vmem>>, vector<1x5x32xf32>
    %5 = vector.shape_cast %4 : vector<1x5x32xf32> to vector<5x32xf32>
    %c0_5 = arith.constant 0 : index
    %c0_6 = arith.constant 0 : index
    %6 = vector.load %arg4[%c0_5, %c0_6] : memref<8x8xf32, #tpu.memory_space<vmem>>, vector<8x8xf32>
    %c0_7 = arith.constant 0 : index
    %c0_8 = arith.constant 0 : index
    %c0_9 = arith.constant 0 : index
    %7 = vector.load %arg5[%c0_7, %c0_8, %c0_9] : memref<1x32x96xbf16, #tpu.memory_space<vmem>>, vector<1x32x96xbf16>
    %8 = vector.shape_cast %7 : vector<1x32x96xbf16> to vector<32x96xbf16>
    %c0_10 = arith.constant 0 : index
    %c0_11 = arith.constant 0 : index
    %c0_12 = arith.constant 0 : index
    %9 = vector.load %arg6[%c0_10, %c0_11, %c0_12] : memref<1x1x96xf32, #tpu.memory_space<vmem>>, vector<1x1x96xf32>
    %10 = vector.shape_cast %9 : vector<1x1x96xf32> to vector<1x96xf32>
    %c0_13 = arith.constant 0 : index
    %c0_14 = arith.constant 0 : index
    %c0_15 = arith.constant 0 : index
    %11 = vector.load %arg7[%c0_13, %c0_14, %c0_15] : memref<1x32x32xbf16, #tpu.memory_space<vmem>>, vector<1x32x32xbf16>
    %12 = vector.shape_cast %11 : vector<1x32x32xbf16> to vector<32x32xbf16>
    %c0_16 = arith.constant 0 : index
    %c0_17 = arith.constant 0 : index
    %c0_18 = arith.constant 0 : index
    %13 = vector.load %arg8[%c0_16, %c0_17, %c0_18] : memref<1x1x32xf32, #tpu.memory_space<vmem>>, vector<1x1x32xf32>
    %14 = vector.shape_cast %13 : vector<1x1x32xf32> to vector<1x32xf32>
    %15 = arith.truncf %3 : vector<8x32xf32> to vector<8x32xbf16>
    %cst = arith.constant dense<0.000000e+00> : vector<8x96xf32>
    %16 = tpu.matmul %15, %8, %cst {dimension_numbers = #tpu.dot_dimension_numbers<[1], [0], [0], [1], [0, 0, 1, 1], [], []>} : vector<8x32xbf16>, vector<32x96xbf16>, vector<8x96xf32> -> vector<8x96xf32>
    %17 = vector.broadcast %10 : vector<1x96xf32> to vector<8x96xf32>
    %18 = arith.addf %16, %17 : vector<8x96xf32>
    %19 = vector.extract_strided_slice %18 {offsets = [0, 0], sizes = [8, 32], strides = [1, 1]} : vector<8x96xf32> to vector<8x32xf32>
    %20 = vector.extract_strided_slice %18 {offsets = [0, 32], sizes = [8, 32], strides = [1, 1]} : vector<8x96xf32> to vector<8x32xf32>
    %21 = vector.extract_strided_slice %18 {offsets = [0, 64], sizes = [8, 32], strides = [1, 1]} : vector<8x96xf32> to vector<8x32xf32>
    %cst_19 = arith.constant 0.353553385 : f32
    %22 = vector.broadcast %cst_19 : f32 to vector<8x32xf32>
    %23 = arith.mulf %19, %22 : vector<8x32xf32>
    %24 = arith.truncf %23 : vector<8x32xf32> to vector<8x32xbf16>
    %25 = arith.truncf %20 : vector<8x32xf32> to vector<8x32xbf16>
    %26 = arith.truncf %21 : vector<8x32xf32> to vector<8x32xbf16>
    %27 = vector.extract_strided_slice %24 {offsets = [0, 0], sizes = [8, 8], strides = [1, 1]} : vector<8x32xbf16> to vector<8x8xbf16>
    %28 = vector.extract_strided_slice %25 {offsets = [0, 0], sizes = [8, 8], strides = [1, 1]} : vector<8x32xbf16> to vector<8x8xbf16>
    %cst_20 = arith.constant dense<0.000000e+00> : vector<8x8xf32>
    %29 = tpu.matmul %27, %28, %cst_20 {dimension_numbers = #tpu.dot_dimension_numbers<[1], [1], [0], [0], [0, 0, 1, 0], [], []>} : vector<8x8xbf16>, vector<8x8xbf16>, vector<8x8xf32> -> vector<8x8xf32>
    %30 = arith.addf %29, %6 : vector<8x8xf32>
    %cst_21 = arith.constant dense<0xFF800000> : vector<8xf32>
    %31 = vector.multi_reduction <maximumf>, %30, %cst_21 [1] : vector<8x8xf32> to vector<8xf32>
    %32 = vector.shape_cast %31 : vector<8xf32> to vector<8x1xf32>
    %33 = vector.broadcast %32 : vector<8x1xf32> to vector<8x8xf32>
    %34 = arith.subf %30, %33 : vector<8x8xf32>
    %35 = math.exp %34 : vector<8x8xf32>
    %cst_22 = arith.constant dense<0.000000e+00> : vector<8xf32>
    %36 = vector.multi_reduction <add>, %35, %cst_22 [1] : vector<8x8xf32> to vector<8xf32>
    %37 = vector.shape_cast %36 : vector<8xf32> to vector<8x1xf32>
    %38 = tpu.reciprocal %37 {approx = true} : vector<8x1xf32> -> vector<8x1xf32>
    %39 = vector.broadcast %38 : vector<8x1xf32> to vector<8x8xf32>
    %40 = arith.mulf %35, %39 : vector<8x8xf32>
    %41 = arith.truncf %40 : vector<8x8xf32> to vector<8x8xbf16>
    %42 = vector.extract_strided_slice %26 {offsets = [0, 0], sizes = [8, 8], strides = [1, 1]} : vector<8x32xbf16> to vector<8x8xbf16>
    %cst_23 = arith.constant dense<0.000000e+00> : vector<8x8xf32>
    %43 = tpu.matmul %41, %42, %cst_23 {dimension_numbers = #tpu.dot_dimension_numbers<[1], [0], [0], [1], [0, 0, 1, 1], [], []>} : vector<8x8xbf16>, vector<8x8xbf16>, vector<8x8xf32> -> vector<8x8xf32>
    %44 = vector.extract_strided_slice %24 {offsets = [0, 8], sizes = [8, 8], strides = [1, 1]} : vector<8x32xbf16> to vector<8x8xbf16>
    %45 = vector.extract_strided_slice %25 {offsets = [0, 8], sizes = [8, 8], strides = [1, 1]} : vector<8x32xbf16> to vector<8x8xbf16>
    %cst_24 = arith.constant dense<0.000000e+00> : vector<8x8xf32>
    %46 = tpu.matmul %44, %45, %cst_24 {dimension_numbers = #tpu.dot_dimension_numbers<[1], [1], [0], [0], [0, 0, 1, 0], [], []>} : vector<8x8xbf16>, vector<8x8xbf16>, vector<8x8xf32> -> vector<8x8xf32>
    %47 = arith.addf %46, %6 : vector<8x8xf32>
    %cst_25 = arith.constant dense<0xFF800000> : vector<8xf32>
    %48 = vector.multi_reduction <maximumf>, %47, %cst_25 [1] : vector<8x8xf32> to vector<8xf32>
    %49 = vector.shape_cast %48 : vector<8xf32> to vector<8x1xf32>
    %50 = vector.broadcast %49 : vector<8x1xf32> to vector<8x8xf32>
    %51 = arith.subf %47, %50 : vector<8x8xf32>
    %52 = math.exp %51 : vector<8x8xf32>
    %cst_26 = arith.constant dense<0.000000e+00> : vector<8xf32>
    %53 = vector.multi_reduction <add>, %52, %cst_26 [1] : vector<8x8xf32> to vector<8xf32>
    %54 = vector.shape_cast %53 : vector<8xf32> to vector<8x1xf32>
    %55 = tpu.reciprocal %54 {approx = true} : vector<8x1xf32> -> vector<8x1xf32>
    %56 = vector.broadcast %55 : vector<8x1xf32> to vector<8x8xf32>
    %57 = arith.mulf %52, %56 : vector<8x8xf32>
    %58 = arith.truncf %57 : vector<8x8xf32> to vector<8x8xbf16>
    %59 = vector.extract_strided_slice %26 {offsets = [0, 8], sizes = [8, 8], strides = [1, 1]} : vector<8x32xbf16> to vector<8x8xbf16>
    %cst_27 = arith.constant dense<0.000000e+00> : vector<8x8xf32>
    %60 = tpu.matmul %58, %59, %cst_27 {dimension_numbers = #tpu.dot_dimension_numbers<[1], [0], [0], [1], [0, 0, 1, 1], [], []>} : vector<8x8xbf16>, vector<8x8xbf16>, vector<8x8xf32> -> vector<8x8xf32>
    %61 = vector.extract_strided_slice %24 {offsets = [0, 16], sizes = [8, 8], strides = [1, 1]} : vector<8x32xbf16> to vector<8x8xbf16>
    %62 = vector.extract_strided_slice %25 {offsets = [0, 16], sizes = [8, 8], strides = [1, 1]} : vector<8x32xbf16> to vector<8x8xbf16>
    %cst_28 = arith.constant dense<0.000000e+00> : vector<8x8xf32>
    %63 = tpu.matmul %61, %62, %cst_28 {dimension_numbers = #tpu.dot_dimension_numbers<[1], [1], [0], [0], [0, 0, 1, 0], [], []>} : vector<8x8xbf16>, vector<8x8xbf16>, vector<8x8xf32> -> vector<8x8xf32>
    %64 = arith.addf %63, %6 : vector<8x8xf32>
    %cst_29 = arith.constant dense<0xFF800000> : vector<8xf32>
    %65 = vector.multi_reduction <maximumf>, %64, %cst_29 [1] : vector<8x8xf32> to vector<8xf32>
    %66 = vector.shape_cast %65 : vector<8xf32> to vector<8x1xf32>
    %67 = vector.broadcast %66 : vector<8x1xf32> to vector<8x8xf32>
    %68 = arith.subf %64, %67 : vector<8x8xf32>
    %69 = math.exp %68 : vector<8x8xf32>
    %cst_30 = arith.constant dense<0.000000e+00> : vector<8xf32>
    %70 = vector.multi_reduction <add>, %69, %cst_30 [1] : vector<8x8xf32> to vector<8xf32>
    %71 = vector.shape_cast %70 : vector<8xf32> to vector<8x1xf32>
    %72 = tpu.reciprocal %71 {approx = true} : vector<8x1xf32> -> vector<8x1xf32>
    %73 = vector.broadcast %72 : vector<8x1xf32> to vector<8x8xf32>
    %74 = arith.mulf %69, %73 : vector<8x8xf32>
    %75 = arith.truncf %74 : vector<8x8xf32> to vector<8x8xbf16>
    %76 = vector.extract_strided_slice %26 {offsets = [0, 16], sizes = [8, 8], strides = [1, 1]} : vector<8x32xbf16> to vector<8x8xbf16>
    %cst_31 = arith.constant dense<0.000000e+00> : vector<8x8xf32>
    %77 = tpu.matmul %75, %76, %cst_31 {dimension_numbers = #tpu.dot_dimension_numbers<[1], [0], [0], [1], [0, 0, 1, 1], [], []>} : vector<8x8xbf16>, vector<8x8xbf16>, vector<8x8xf32> -> vector<8x8xf32>
    %78 = vector.extract_strided_slice %24 {offsets = [0, 24], sizes = [8, 8], strides = [1, 1]} : vector<8x32xbf16> to vector<8x8xbf16>
    %79 = vector.extract_strided_slice %25 {offsets = [0, 24], sizes = [8, 8], strides = [1, 1]} : vector<8x32xbf16> to vector<8x8xbf16>
    %cst_32 = arith.constant dense<0.000000e+00> : vector<8x8xf32>
    %80 = tpu.matmul %78, %79, %cst_32 {dimension_numbers = #tpu.dot_dimension_numbers<[1], [1], [0], [0], [0, 0, 1, 0], [], []>} : vector<8x8xbf16>, vector<8x8xbf16>, vector<8x8xf32> -> vector<8x8xf32>
    %81 = arith.addf %80, %6 : vector<8x8xf32>
    %cst_33 = arith.constant dense<0xFF800000> : vector<8xf32>
    %82 = vector.multi_reduction <maximumf>, %81, %cst_33 [1] : vector<8x8xf32> to vector<8xf32>
    %83 = vector.shape_cast %82 : vector<8xf32> to vector<8x1xf32>
    %84 = vector.broadcast %83 : vector<8x1xf32> to vector<8x8xf32>
    %85 = arith.subf %81, %84 : vector<8x8xf32>
    %86 = math.exp %85 : vector<8x8xf32>
    %cst_34 = arith.constant dense<0.000000e+00> : vector<8xf32>
    %87 = vector.multi_reduction <add>, %86, %cst_34 [1] : vector<8x8xf32> to vector<8xf32>
    %88 = vector.shape_cast %87 : vector<8xf32> to vector<8x1xf32>
    %89 = tpu.reciprocal %88 {approx = true} : vector<8x1xf32> -> vector<8x1xf32>
    %90 = vector.broadcast %89 : vector<8x1xf32> to vector<8x8xf32>
    %91 = arith.mulf %86, %90 : vector<8x8xf32>
    %92 = arith.truncf %91 : vector<8x8xf32> to vector<8x8xbf16>
    %93 = vector.extract_strided_slice %26 {offsets = [0, 24], sizes = [8, 8], strides = [1, 1]} : vector<8x32xbf16> to vector<8x8xbf16>
    %cst_35 = arith.constant dense<0.000000e+00> : vector<8x8xf32>
    %94 = tpu.matmul %92, %93, %cst_35 {dimension_numbers = #tpu.dot_dimension_numbers<[1], [0], [0], [1], [0, 0, 1, 1], [], []>} : vector<8x8xbf16>, vector<8x8xbf16>, vector<8x8xf32> -> vector<8x8xf32>
    %95 = tpu.concatenate %43, %60, %77, %94 in 1 : vector<8x8xf32>, vector<8x8xf32>, vector<8x8xf32>, vector<8x8xf32> -> vector<8x32xf32>
    %96 = arith.truncf %95 : vector<8x32xf32> to vector<8x32xbf16>
    %cst_36 = arith.constant dense<0.000000e+00> : vector<8x32xf32>
    %97 = tpu.matmul %96, %12, %cst_36 {dimension_numbers = #tpu.dot_dimension_numbers<[1], [0], [0], [1], [0, 0, 1, 1], [], []>} : vector<8x32xbf16>, vector<32x32xbf16>, vector<8x32xf32> -> vector<8x32xf32>
    %98 = vector.broadcast %14 : vector<1x32xf32> to vector<8x32xf32>
    %99 = arith.addf %97, %98 : vector<8x32xf32>
    %100 = arith.addf %3, %99 : vector<8x32xf32>
    %c0_37 = arith.constant 0 : index
    %c0_38 = arith.constant 0 : index
    %c0_39 = arith.constant 0 : index
    %101 = vector.load %arg9[%c0_37, %c0_38, %c0_39] : memref<1x1x32xf32, #tpu.memory_space<vmem>>, vector<1x1x32xf32>
    %102 = vector.shape_cast %101 : vector<1x1x32xf32> to vector<1x32xf32>
    %c0_40 = arith.constant 0 : index
    %c0_41 = arith.constant 0 : index
    %c0_42 = arith.constant 0 : index
    %103 = vector.load %arg10[%c0_40, %c0_41, %c0_42] : memref<1x1x32xf32, #tpu.memory_space<vmem>>, vector<1x1x32xf32>
    %104 = vector.shape_cast %103 : vector<1x1x32xf32> to vector<1x32xf32>
    %cst_43 = arith.constant dense<0.000000e+00> : vector<8xf32>
    %105 = vector.multi_reduction <add>, %100, %cst_43 [1] : vector<8x32xf32> to vector<8xf32>
    %106 = vector.shape_cast %105 : vector<8xf32> to vector<8x1xf32>
    %cst_44 = arith.constant 3.200000e+01 : f32
    %107 = vector.broadcast %cst_44 : f32 to vector<8x1xf32>
    %108 = arith.divf %106, %107 : vector<8x1xf32>
    %109 = vector.broadcast %108 : vector<8x1xf32> to vector<8x32xf32>
    %110 = arith.subf %100, %109 : vector<8x32xf32>
    %111 = arith.mulf %110, %110 : vector<8x32xf32>
    %cst_45 = arith.constant dense<0.000000e+00> : vector<8xf32>
    %112 = vector.multi_reduction <add>, %111, %cst_45 [1] : vector<8x32xf32> to vector<8xf32>
    %113 = vector.shape_cast %112 : vector<8xf32> to vector<8x1xf32>
    %cst_46 = arith.constant 3.200000e+01 : f32
    %114 = vector.broadcast %cst_46 : f32 to vector<8x1xf32>
    %115 = arith.divf %113, %114 : vector<8x1xf32>
    %116 = vector.broadcast %108 : vector<8x1xf32> to vector<8x32xf32>
    %117 = arith.subf %100, %116 : vector<8x32xf32>
    %cst_47 = arith.constant 9.99999974E-6 : f32
    %118 = vector.broadcast %cst_47 : f32 to vector<8x1xf32>
    %119 = arith.addf %115, %118 : vector<8x1xf32>
    %120 = math.rsqrt %119 : vector<8x1xf32>
    %121 = vector.broadcast %120 : vector<8x1xf32> to vector<8x32xf32>
    %122 = arith.mulf %117, %121 : vector<8x32xf32>
    %123 = vector.broadcast %102 : vector<1x32xf32> to vector<8x32xf32>
    %124 = arith.mulf %122, %123 : vector<8x32xf32>
    %125 = vector.broadcast %104 : vector<1x32xf32> to vector<8x32xf32>
    %126 = arith.addf %124, %125 : vector<8x32xf32>
    %c0_48 = arith.constant 0 : index
    %c0_49 = arith.constant 0 : index
    %c0_50 = arith.constant 0 : index
    %127 = vector.load %arg11[%c0_48, %c0_49, %c0_50] : memref<1x32x32xbf16, #tpu.memory_space<vmem>>, vector<1x32x32xbf16>
    %128 = vector.shape_cast %127 : vector<1x32x32xbf16> to vector<32x32xbf16>
    %c0_51 = arith.constant 0 : index
    %c0_52 = arith.constant 0 : index
    %c0_53 = arith.constant 0 : index
    %129 = vector.load %arg12[%c0_51, %c0_52, %c0_53] : memref<1x1x32xf32, #tpu.memory_space<vmem>>, vector<1x1x32xf32>
    %130 = vector.shape_cast %129 : vector<1x1x32xf32> to vector<1x32xf32>
    %c0_54 = arith.constant 0 : index
    %c0_55 = arith.constant 0 : index
    %c0_56 = arith.constant 0 : index
    %131 = vector.load %arg13[%c0_54, %c0_55, %c0_56] : memref<1x32x64xbf16, #tpu.memory_space<vmem>>, vector<1x32x64xbf16>
    %132 = vector.shape_cast %131 : vector<1x32x64xbf16> to vector<32x64xbf16>
    %c0_57 = arith.constant 0 : index
    %c0_58 = arith.constant 0 : index
    %c0_59 = arith.constant 0 : index
    %133 = vector.load %arg14[%c0_57, %c0_58, %c0_59] : memref<1x1x64xf32, #tpu.memory_space<vmem>>, vector<1x1x64xf32>
    %134 = vector.shape_cast %133 : vector<1x1x64xf32> to vector<1x64xf32>
    %c0_60 = arith.constant 0 : index
    %c0_61 = arith.constant 0 : index
    %c0_62 = arith.constant 0 : index
    %135 = vector.load %arg15[%c0_60, %c0_61, %c0_62] : memref<1x32x32xbf16, #tpu.memory_space<vmem>>, vector<1x32x32xbf16>
    %136 = vector.shape_cast %135 : vector<1x32x32xbf16> to vector<32x32xbf16>
    %c0_63 = arith.constant 0 : index
    %c0_64 = arith.constant 0 : index
    %c0_65 = arith.constant 0 : index
    %137 = vector.load %arg16[%c0_63, %c0_64, %c0_65] : memref<1x1x32xf32, #tpu.memory_space<vmem>>, vector<1x1x32xf32>
    %138 = vector.shape_cast %137 : vector<1x1x32xf32> to vector<1x32xf32>
    %139 = arith.truncf %126 : vector<8x32xf32> to vector<8x32xbf16>
    %cst_66 = arith.constant dense<0.000000e+00> : vector<8x32xf32>
    %140 = tpu.matmul %139, %128, %cst_66 {dimension_numbers = #tpu.dot_dimension_numbers<[1], [0], [0], [1], [0, 0, 1, 1], [], []>} : vector<8x32xbf16>, vector<32x32xbf16>, vector<8x32xf32> -> vector<8x32xf32>
    %141 = vector.broadcast %130 : vector<1x32xf32> to vector<8x32xf32>
    %142 = arith.addf %140, %141 : vector<8x32xf32>
    %143 = arith.truncf %5 : vector<5x32xf32> to vector<5x32xbf16>
    %cst_67 = arith.constant dense<0.000000e+00> : vector<5x64xf32>
    %144 = tpu.matmul %143, %132, %cst_67 {dimension_numbers = #tpu.dot_dimension_numbers<[1], [0], [0], [1], [0, 0, 1, 1], [], []>} : vector<5x32xbf16>, vector<32x64xbf16>, vector<5x64xf32> -> vector<5x64xf32>
    %145 = vector.broadcast %134 : vector<1x64xf32> to vector<5x64xf32>
    %146 = arith.addf %144, %145 : vector<5x64xf32>
    %147 = vector.extract_strided_slice %146 {offsets = [0, 0], sizes = [5, 32], strides = [1, 1]} : vector<5x64xf32> to vector<5x32xf32>
    %148 = vector.extract_strided_slice %146 {offsets = [0, 32], sizes = [5, 32], strides = [1, 1]} : vector<5x64xf32> to vector<5x32xf32>
    %cst_68 = arith.constant 0.353553385 : f32
    %149 = vector.broadcast %cst_68 : f32 to vector<8x32xf32>
    %150 = arith.mulf %142, %149 : vector<8x32xf32>
    %151 = arith.truncf %150 : vector<8x32xf32> to vector<8x32xbf16>
    %152 = arith.truncf %147 : vector<5x32xf32> to vector<5x32xbf16>
    %153 = arith.truncf %148 : vector<5x32xf32> to vector<5x32xbf16>
    %154 = vector.extract_strided_slice %151 {offsets = [0, 0], sizes = [8, 8], strides = [1, 1]} : vector<8x32xbf16> to vector<8x8xbf16>
    %155 = vector.extract_strided_slice %152 {offsets = [0, 0], sizes = [5, 8], strides = [1, 1]} : vector<5x32xbf16> to vector<5x8xbf16>
    %cst_69 = arith.constant dense<0.000000e+00> : vector<8x5xf32>
    %156 = tpu.matmul %154, %155, %cst_69 {dimension_numbers = #tpu.dot_dimension_numbers<[1], [1], [0], [0], [0, 0, 1, 0], [], []>} : vector<8x8xbf16>, vector<5x8xbf16>, vector<8x5xf32> -> vector<8x5xf32>
    %cst_70 = arith.constant dense<0xFF800000> : vector<8xf32>
    %157 = vector.multi_reduction <maximumf>, %156, %cst_70 [1] : vector<8x5xf32> to vector<8xf32>
    %158 = vector.shape_cast %157 : vector<8xf32> to vector<8x1xf32>
    %159 = vector.broadcast %158 : vector<8x1xf32> to vector<8x5xf32>
    %160 = arith.subf %156, %159 : vector<8x5xf32>
    %161 = math.exp %160 : vector<8x5xf32>
    %cst_71 = arith.constant dense<0.000000e+00> : vector<8xf32>
    %162 = vector.multi_reduction <add>, %161, %cst_71 [1] : vector<8x5xf32> to vector<8xf32>
    %163 = vector.shape_cast %162 : vector<8xf32> to vector<8x1xf32>
    %164 = tpu.reciprocal %163 {approx = true} : vector<8x1xf32> -> vector<8x1xf32>
    %165 = vector.broadcast %164 : vector<8x1xf32> to vector<8x5xf32>
    %166 = arith.mulf %161, %165 : vector<8x5xf32>
    %167 = arith.truncf %166 : vector<8x5xf32> to vector<8x5xbf16>
    %168 = vector.extract_strided_slice %153 {offsets = [0, 0], sizes = [5, 8], strides = [1, 1]} : vector<5x32xbf16> to vector<5x8xbf16>
    %cst_72 = arith.constant dense<0.000000e+00> : vector<8x8xf32>
    %169 = tpu.matmul %167, %168, %cst_72 {dimension_numbers = #tpu.dot_dimension_numbers<[1], [0], [0], [1], [0, 0, 1, 1], [], []>} : vector<8x5xbf16>, vector<5x8xbf16>, vector<8x8xf32> -> vector<8x8xf32>
    %170 = vector.extract_strided_slice %151 {offsets = [0, 8], sizes = [8, 8], strides = [1, 1]} : vector<8x32xbf16> to vector<8x8xbf16>
    %171 = vector.extract_strided_slice %152 {offsets = [0, 8], sizes = [5, 8], strides = [1, 1]} : vector<5x32xbf16> to vector<5x8xbf16>
    %cst_73 = arith.constant dense<0.000000e+00> : vector<8x5xf32>
    %172 = tpu.matmul %170, %171, %cst_73 {dimension_numbers = #tpu.dot_dimension_numbers<[1], [1], [0], [0], [0, 0, 1, 0], [], []>} : vector<8x8xbf16>, vector<5x8xbf16>, vector<8x5xf32> -> vector<8x5xf32>
    %cst_74 = arith.constant dense<0xFF800000> : vector<8xf32>
    %173 = vector.multi_reduction <maximumf>, %172, %cst_74 [1] : vector<8x5xf32> to vector<8xf32>
    %174 = vector.shape_cast %173 : vector<8xf32> to vector<8x1xf32>
    %175 = vector.broadcast %174 : vector<8x1xf32> to vector<8x5xf32>
    %176 = arith.subf %172, %175 : vector<8x5xf32>
    %177 = math.exp %176 : vector<8x5xf32>
    %cst_75 = arith.constant dense<0.000000e+00> : vector<8xf32>
    %178 = vector.multi_reduction <add>, %177, %cst_75 [1] : vector<8x5xf32> to vector<8xf32>
    %179 = vector.shape_cast %178 : vector<8xf32> to vector<8x1xf32>
    %180 = tpu.reciprocal %179 {approx = true} : vector<8x1xf32> -> vector<8x1xf32>
    %181 = vector.broadcast %180 : vector<8x1xf32> to vector<8x5xf32>
    %182 = arith.mulf %177, %181 : vector<8x5xf32>
    %183 = arith.truncf %182 : vector<8x5xf32> to vector<8x5xbf16>
    %184 = vector.extract_strided_slice %153 {offsets = [0, 8], sizes = [5, 8], strides = [1, 1]} : vector<5x32xbf16> to vector<5x8xbf16>
    %cst_76 = arith.constant dense<0.000000e+00> : vector<8x8xf32>
    %185 = tpu.matmul %183, %184, %cst_76 {dimension_numbers = #tpu.dot_dimension_numbers<[1], [0], [0], [1], [0, 0, 1, 1], [], []>} : vector<8x5xbf16>, vector<5x8xbf16>, vector<8x8xf32> -> vector<8x8xf32>
    %186 = vector.extract_strided_slice %151 {offsets = [0, 16], sizes = [8, 8], strides = [1, 1]} : vector<8x32xbf16> to vector<8x8xbf16>
    %187 = vector.extract_strided_slice %152 {offsets = [0, 16], sizes = [5, 8], strides = [1, 1]} : vector<5x32xbf16> to vector<5x8xbf16>
    %cst_77 = arith.constant dense<0.000000e+00> : vector<8x5xf32>
    %188 = tpu.matmul %186, %187, %cst_77 {dimension_numbers = #tpu.dot_dimension_numbers<[1], [1], [0], [0], [0, 0, 1, 0], [], []>} : vector<8x8xbf16>, vector<5x8xbf16>, vector<8x5xf32> -> vector<8x5xf32>
    %cst_78 = arith.constant dense<0xFF800000> : vector<8xf32>
    %189 = vector.multi_reduction <maximumf>, %188, %cst_78 [1] : vector<8x5xf32> to vector<8xf32>
    %190 = vector.shape_cast %189 : vector<8xf32> to vector<8x1xf32>
    %191 = vector.broadcast %190 : vector<8x1xf32> to vector<8x5xf32>
    %192 = arith.subf %188, %191 : vector<8x5xf32>
    %193 = math.exp %192 : vector<8x5xf32>
    %cst_79 = arith.constant dense<0.000000e+00> : vector<8xf32>
    %194 = vector.multi_reduction <add>, %193, %cst_79 [1] : vector<8x5xf32> to vector<8xf32>
    %195 = vector.shape_cast %194 : vector<8xf32> to vector<8x1xf32>
    %196 = tpu.reciprocal %195 {approx = true} : vector<8x1xf32> -> vector<8x1xf32>
    %197 = vector.broadcast %196 : vector<8x1xf32> to vector<8x5xf32>
    %198 = arith.mulf %193, %197 : vector<8x5xf32>
    %199 = arith.truncf %198 : vector<8x5xf32> to vector<8x5xbf16>
    %200 = vector.extract_strided_slice %153 {offsets = [0, 16], sizes = [5, 8], strides = [1, 1]} : vector<5x32xbf16> to vector<5x8xbf16>
    %cst_80 = arith.constant dense<0.000000e+00> : vector<8x8xf32>
    %201 = tpu.matmul %199, %200, %cst_80 {dimension_numbers = #tpu.dot_dimension_numbers<[1], [0], [0], [1], [0, 0, 1, 1], [], []>} : vector<8x5xbf16>, vector<5x8xbf16>, vector<8x8xf32> -> vector<8x8xf32>
    %202 = vector.extract_strided_slice %151 {offsets = [0, 24], sizes = [8, 8], strides = [1, 1]} : vector<8x32xbf16> to vector<8x8xbf16>
    %203 = vector.extract_strided_slice %152 {offsets = [0, 24], sizes = [5, 8], strides = [1, 1]} : vector<5x32xbf16> to vector<5x8xbf16>
    %cst_81 = arith.constant dense<0.000000e+00> : vector<8x5xf32>
    %204 = tpu.matmul %202, %203, %cst_81 {dimension_numbers = #tpu.dot_dimension_numbers<[1], [1], [0], [0], [0, 0, 1, 0], [], []>} : vector<8x8xbf16>, vector<5x8xbf16>, vector<8x5xf32> -> vector<8x5xf32>
    %cst_82 = arith.constant dense<0xFF800000> : vector<8xf32>
    %205 = vector.multi_reduction <maximumf>, %204, %cst_82 [1] : vector<8x5xf32> to vector<8xf32>
    %206 = vector.shape_cast %205 : vector<8xf32> to vector<8x1xf32>
    %207 = vector.broadcast %206 : vector<8x1xf32> to vector<8x5xf32>
    %208 = arith.subf %204, %207 : vector<8x5xf32>
    %209 = math.exp %208 : vector<8x5xf32>
    %cst_83 = arith.constant dense<0.000000e+00> : vector<8xf32>
    %210 = vector.multi_reduction <add>, %209, %cst_83 [1] : vector<8x5xf32> to vector<8xf32>
    %211 = vector.shape_cast %210 : vector<8xf32> to vector<8x1xf32>
    %212 = tpu.reciprocal %211 {approx = true} : vector<8x1xf32> -> vector<8x1xf32>
    %213 = vector.broadcast %212 : vector<8x1xf32> to vector<8x5xf32>
    %214 = arith.mulf %209, %213 : vector<8x5xf32>
    %215 = arith.truncf %214 : vector<8x5xf32> to vector<8x5xbf16>
    %216 = vector.extract_strided_slice %153 {offsets = [0, 24], sizes = [5, 8], strides = [1, 1]} : vector<5x32xbf16> to vector<5x8xbf16>
    %cst_84 = arith.constant dense<0.000000e+00> : vector<8x8xf32>
    %217 = tpu.matmul %215, %216, %cst_84 {dimension_numbers = #tpu.dot_dimension_numbers<[1], [0], [0], [1], [0, 0, 1, 1], [], []>} : vector<8x5xbf16>, vector<5x8xbf16>, vector<8x8xf32> -> vector<8x8xf32>
    %218 = tpu.concatenate %169, %185, %201, %217 in 1 : vector<8x8xf32>, vector<8x8xf32>, vector<8x8xf32>, vector<8x8xf32> -> vector<8x32xf32>
    %219 = arith.truncf %218 : vector<8x32xf32> to vector<8x32xbf16>
    %cst_85 = arith.constant dense<0.000000e+00> : vector<8x32xf32>
    %220 = tpu.matmul %219, %136, %cst_85 {dimension_numbers = #tpu.dot_dimension_numbers<[1], [0], [0], [1], [0, 0, 1, 1], [], []>} : vector<8x32xbf16>, vector<32x32xbf16>, vector<8x32xf32> -> vector<8x32xf32>
    %221 = vector.broadcast %138 : vector<1x32xf32> to vector<8x32xf32>
    %222 = arith.addf %220, %221 : vector<8x32xf32>
    %223 = arith.addf %126, %222 : vector<8x32xf32>
    %c0_86 = arith.constant 0 : index
    %c0_87 = arith.constant 0 : index
    %c0_88 = arith.constant 0 : index
    %224 = vector.load %arg17[%c0_86, %c0_87, %c0_88] : memref<1x1x32xf32, #tpu.memory_space<vmem>>, vector<1x1x32xf32>
    %225 = vector.shape_cast %224 : vector<1x1x32xf32> to vector<1x32xf32>
    %c0_89 = arith.constant 0 : index
    %c0_90 = arith.constant 0 : index
    %c0_91 = arith.constant 0 : index
    %226 = vector.load %arg18[%c0_89, %c0_90, %c0_91] : memref<1x1x32xf32, #tpu.memory_space<vmem>>, vector<1x1x32xf32>
    %227 = vector.shape_cast %226 : vector<1x1x32xf32> to vector<1x32xf32>
    %cst_92 = arith.constant dense<0.000000e+00> : vector<8xf32>
    %228 = vector.multi_reduction <add>, %223, %cst_92 [1] : vector<8x32xf32> to vector<8xf32>
    %229 = vector.shape_cast %228 : vector<8xf32> to vector<8x1xf32>
    %cst_93 = arith.constant 3.200000e+01 : f32
    %230 = vector.broadcast %cst_93 : f32 to vector<8x1xf32>
    %231 = arith.divf %229, %230 : vector<8x1xf32>
    %232 = vector.broadcast %231 : vector<8x1xf32> to vector<8x32xf32>
    %233 = arith.subf %223, %232 : vector<8x32xf32>
    %234 = arith.mulf %233, %233 : vector<8x32xf32>
    %cst_94 = arith.constant dense<0.000000e+00> : vector<8xf32>
    %235 = vector.multi_reduction <add>, %234, %cst_94 [1] : vector<8x32xf32> to vector<8xf32>
    %236 = vector.shape_cast %235 : vector<8xf32> to vector<8x1xf32>
    %cst_95 = arith.constant 3.200000e+01 : f32
    %237 = vector.broadcast %cst_95 : f32 to vector<8x1xf32>
    %238 = arith.divf %236, %237 : vector<8x1xf32>
    %239 = vector.broadcast %231 : vector<8x1xf32> to vector<8x32xf32>
    %240 = arith.subf %223, %239 : vector<8x32xf32>
    %cst_96 = arith.constant 9.99999974E-6 : f32
    %241 = vector.broadcast %cst_96 : f32 to vector<8x1xf32>
    %242 = arith.addf %238, %241 : vector<8x1xf32>
    %243 = math.rsqrt %242 : vector<8x1xf32>
    %244 = vector.broadcast %243 : vector<8x1xf32> to vector<8x32xf32>
    %245 = arith.mulf %240, %244 : vector<8x32xf32>
    %246 = vector.broadcast %225 : vector<1x32xf32> to vector<8x32xf32>
    %247 = arith.mulf %245, %246 : vector<8x32xf32>
    %248 = vector.broadcast %227 : vector<1x32xf32> to vector<8x32xf32>
    %249 = arith.addf %247, %248 : vector<8x32xf32>
    %250 = arith.truncf %249 : vector<8x32xf32> to vector<8x32xbf16>
    %c0_97 = arith.constant 0 : index
    %c0_98 = arith.constant 0 : index
    %c0_99 = arith.constant 0 : index
    %251 = vector.load %arg19[%c0_97, %c0_98, %c0_99] : memref<1x32x64xbf16, #tpu.memory_space<vmem>>, vector<1x32x64xbf16>
    %252 = vector.shape_cast %251 : vector<1x32x64xbf16> to vector<32x64xbf16>
    %cst_100 = arith.constant dense<0.000000e+00> : vector<8x64xf32>
    %253 = tpu.matmul %250, %252, %cst_100 {dimension_numbers = #tpu.dot_dimension_numbers<[1], [0], [0], [1], [0, 0, 1, 1], [], []>} : vector<8x32xbf16>, vector<32x64xbf16>, vector<8x64xf32> -> vector<8x64xf32>
    %c0_101 = arith.constant 0 : index
    %c0_102 = arith.constant 0 : index
    %c0_103 = arith.constant 0 : index
    %254 = vector.load %arg20[%c0_101, %c0_102, %c0_103] : memref<1x1x64xf32, #tpu.memory_space<vmem>>, vector<1x1x64xf32>
    %255 = vector.shape_cast %254 : vector<1x1x64xf32> to vector<1x64xf32>
    %256 = vector.broadcast %255 : vector<1x64xf32> to vector<8x64xf32>
    %257 = arith.addf %253, %256 : vector<8x64xf32>
    %cst_104 = arith.constant 0.000000e+00 : f32
    %258 = vector.broadcast %cst_104 : f32 to vector<8x64xf32>
    %259 = arith.maximumf %257, %258 : vector<8x64xf32>
    %260 = arith.truncf %259 : vector<8x64xf32> to vector<8x64xbf16>
    %c0_105 = arith.constant 0 : index
    %c0_106 = arith.constant 0 : index
    %c0_107 = arith.constant 0 : index
    %261 = vector.load %arg21[%c0_105, %c0_106, %c0_107] : memref<1x64x32xbf16, #tpu.memory_space<vmem>>, vector<1x64x32xbf16>
    %262 = vector.shape_cast %261 : vector<1x64x32xbf16> to vector<64x32xbf16>
    %cst_108 = arith.constant dense<0.000000e+00> : vector<8x32xf32>
    %263 = tpu.matmul %260, %262, %cst_108 {dimension_numbers = #tpu.dot_dimension_numbers<[1], [0], [0], [1], [0, 0, 1, 1], [], []>} : vector<8x64xbf16>, vector<64x32xbf16>, vector<8x32xf32> -> vector<8x32xf32>
    %c0_109 = arith.constant 0 : index
    %c0_110 = arith.constant 0 : index
    %c0_111 = arith.constant 0 : index
    %264 = vector.load %arg22[%c0_109, %c0_110, %c0_111] : memref<1x1x32xf32, #tpu.memory_space<vmem>>, vector<1x1x32xf32>
    %265 = vector.shape_cast %264 : vector<1x1x32xf32> to vector<1x32xf32>
    %266 = vector.broadcast %265 : vector<1x32xf32> to vector<8x32xf32>
    %267 = arith.addf %263, %266 : vector<8x32xf32>
    %268 = arith.addf %249, %267 : vector<8x32xf32>
    %c0_112 = arith.constant 0 : index
    %c0_113 = arith.constant 0 : index
    %c0_114 = arith.constant 0 : index
    %269 = vector.load %arg23[%c0_112, %c0_113, %c0_114] : memref<1x1x32xf32, #tpu.memory_space<vmem>>, vector<1x1x32xf32>
    %270 = vector.shape_cast %269 : vector<1x1x32xf32> to vector<1x32xf32>
    %c0_115 = arith.constant 0 : index
    %c0_116 = arith.constant 0 : index
    %c0_117 = arith.constant 0 : index
    %271 = vector.load %arg24[%c0_115, %c0_116, %c0_117] : memref<1x1x32xf32, #tpu.memory_space<vmem>>, vector<1x1x32xf32>
    %272 = vector.shape_cast %271 : vector<1x1x32xf32> to vector<1x32xf32>
    %cst_118 = arith.constant dense<0.000000e+00> : vector<8xf32>
    %273 = vector.multi_reduction <add>, %268, %cst_118 [1] : vector<8x32xf32> to vector<8xf32>
    %274 = vector.shape_cast %273 : vector<8xf32> to vector<8x1xf32>
    %cst_119 = arith.constant 3.200000e+01 : f32
    %275 = vector.broadcast %cst_119 : f32 to vector<8x1xf32>
    %276 = arith.divf %274, %275 : vector<8x1xf32>
    %277 = vector.broadcast %276 : vector<8x1xf32> to vector<8x32xf32>
    %278 = arith.subf %268, %277 : vector<8x32xf32>
    %279 = arith.mulf %278, %278 : vector<8x32xf32>
    %cst_120 = arith.constant dense<0.000000e+00> : vector<8xf32>
    %280 = vector.multi_reduction <add>, %279, %cst_120 [1] : vector<8x32xf32> to vector<8xf32>
    %281 = vector.shape_cast %280 : vector<8xf32> to vector<8x1xf32>
    %cst_121 = arith.constant 3.200000e+01 : f32
    %282 = vector.broadcast %cst_121 : f32 to vector<8x1xf32>
    %283 = arith.divf %281, %282 : vector<8x1xf32>
    %284 = vector.broadcast %276 : vector<8x1xf32> to vector<8x32xf32>
    %285 = arith.subf %268, %284 : vector<8x32xf32>
    %cst_122 = arith.constant 9.99999974E-6 : f32
    %286 = vector.broadcast %cst_122 : f32 to vector<8x1xf32>
    %287 = arith.addf %283, %286 : vector<8x1xf32>
    %288 = math.rsqrt %287 : vector<8x1xf32>
    %289 = vector.broadcast %288 : vector<8x1xf32> to vector<8x32xf32>
    %290 = arith.mulf %285, %289 : vector<8x32xf32>
    %291 = vector.broadcast %270 : vector<1x32xf32> to vector<8x32xf32>
    %292 = arith.mulf %290, %291 : vector<8x32xf32>
    %293 = vector.broadcast %272 : vector<1x32xf32> to vector<8x32xf32>
    %294 = arith.addf %292, %293 : vector<8x32xf32>
    %c0_123 = arith.constant 0 : index
    %c0_124 = arith.constant 0 : index
    %295 = vector.load %arg28[%c0_123, %c0_124] : memref<8x32xf32, #tpu.memory_space<vmem>>, vector<8x32xf32>
    tpu.vector_store %arg28[%c0_123, %c0_124], %294 {strides = array<i32>} : memref<8x32xf32, #tpu.memory_space<vmem>>, vector<8x32xf32>,
    %c1_i32 = arith.constant 1 : i32
    %296 = arith.cmpi eq, %arg1, %c1_i32 : i32
    %297 = arith.extui %296 : i1 to i32
    %c0_i32_125 = arith.constant 0 : i32
    %298 = arith.cmpi ne, %297, %c0_i32_125 : i32
    scf.if %298 {
      %299 = arith.truncf %294 : vector<8x32xf32> to vector<8x32xbf16>
      %c0_126 = arith.constant 0 : index
      %c0_127 = arith.constant 0 : index
      %300 = vector.load %arg25[%c0_126, %c0_127] : memref<32x128xbf16, #tpu.memory_space<vmem>>, vector<32x128xbf16>
      %cst_128 = arith.constant dense<0.000000e+00> : vector<8x128xf32>
      %301 = tpu.matmul %299, %300, %cst_128 {dimension_numbers = #tpu.dot_dimension_numbers<[1], [0], [0], [1], [0, 0, 1, 1], [], []>} : vector<8x32xbf16>, vector<32x128xbf16>, vector<8x128xf32> -> vector<8x128xf32>
      %c0_129 = arith.constant 0 : index
      %c0_130 = arith.constant 0 : index
      %302 = vector.load %arg26[%c0_129, %c0_130] : memref<1x128xf32, #tpu.memory_space<vmem>>, vector<1x128xf32>
      %303 = vector.broadcast %302 : vector<1x128xf32> to vector<8x128xf32>
      %304 = arith.addf %301, %303 : vector<8x128xf32>
      %c0_131 = arith.constant 0 : index
      %c0_132 = arith.constant 0 : index
      %c0_133 = arith.constant 0 : index
      %305 = vector.load %arg27[%c0_131, %c0_132, %c0_133] : memref<1x8x128xf32, #tpu.memory_space<vmem>>, vector<1x8x128xf32>
      %306 = vector.shape_cast %305 : vector<1x8x128xf32> to vector<8x128xf32>
      %307 = vector.shape_cast %304 : vector<8x128xf32> to vector<1x8x128xf32>
      tpu.vector_store %arg27[%c0_131, %c0_132, %c0_133], %307 {strides = array<i32>} : memref<1x8x128xf32, #tpu.memory_space<vmem>>, vector<1x8x128xf32>,
    } else {
    }
    return
  }
  func.func @transform_0(%arg0: i32, %arg1: i32) -> (i32, i32, i32) {
    %c0_i32 = arith.constant 0 : i32
    %c0_i32_0 = arith.constant 0 : i32
    %c0_i32_1 = arith.constant 0 : i32
    return %arg0, %c0_i32, %c0_i32_0 : i32, i32, i32
  }
  func.func @transform_1(%arg0: i32, %arg1: i32) -> (i32, i32, i32) {
    %c0_i32 = arith.constant 0 : i32
    %c0_i32_0 = arith.constant 0 : i32
    %c0_i32_1 = arith.constant 0 : i32
    return %arg0, %c0_i32, %c0_i32_0 : i32, i32, i32
  }
  func.func @transform_2(%arg0: i32, %arg1: i32) -> (i32, i32) {
    %c0_i32 = arith.constant 0 : i32
    %c0_i32_0 = arith.constant 0 : i32
    %c0_i32_1 = arith.constant 0 : i32
    return %c0_i32, %c0_i32_0 : i32, i32
  }
  func.func @transform_3(%arg0: i32, %arg1: i32) -> (i32, i32, i32) {
    %c0_i32 = arith.constant 0 : i32
    %c0_i32_0 = arith.constant 0 : i32
    %c0_i32_1 = arith.constant 0 : i32
    return %arg1, %c0_i32, %c0_i32_0 : i32, i32, i32
  }
  func.func @transform_4(%arg0: i32, %arg1: i32) -> (i32, i32, i32) {
    %c0_i32 = arith.constant 0 : i32
    %c0_i32_0 = arith.constant 0 : i32
    %c0_i32_1 = arith.constant 0 : i32
    return %arg1, %c0_i32, %c0_i32_0 : i32, i32, i32
  }
  func.func @transform_5(%arg0: i32, %arg1: i32) -> (i32, i32, i32) {
    %c0_i32 = arith.constant 0 : i32
    %c0_i32_0 = arith.constant 0 : i32
    %c0_i32_1 = arith.constant 0 : i32
    return %arg1, %c0_i32, %c0_i32_0 : i32, i32, i32
  }
  func.func @transform_6(%arg0: i32, %arg1: i32) -> (i32, i32, i32) {
    %c0_i32 = arith.constant 0 : i32
    %c0_i32_0 = arith.constant 0 : i32
    %c0_i32_1 = arith.constant 0 : i32
    return %arg1, %c0_i32, %c0_i32_0 : i32, i32, i32
  }
  func.func @transform_7(%arg0: i32, %arg1: i32) -> (i32, i32, i32) {
    %c0_i32 = arith.constant 0 : i32
    %c0_i32_0 = arith.constant 0 : i32
    %c0_i32_1 = arith.constant 0 : i32
    return %arg1, %c0_i32, %c0_i32_0 : i32, i32, i32
  }
  func.func @transform_8(%arg0: i32, %arg1: i32) -> (i32, i32, i32) {
    %c0_i32 = arith.constant 0 : i32
    %c0_i32_0 = arith.constant 0 : i32
    %c0_i32_1 = arith.constant 0 : i32
    return %arg1, %c0_i32, %c0_i32_0 : i32, i32, i32
  }
  func.func @transform_9(%arg0: i32, %arg1: i32) -> (i32, i32, i32) {
    %c0_i32 = arith.constant 0 : i32
    %c0_i32_0 = arith.constant 0 : i32
    %c0_i32_1 = arith.constant 0 : i32
    return %arg1, %c0_i32, %c0_i32_0 : i32, i32, i32
  }
  func.func @transform_10(%arg0: i32, %arg1: i32) -> (i32, i32, i32) {
    %c0_i32 = arith.constant 0 : i32
    %c0_i32_0 = arith.constant 0 : i32
    %c0_i32_1 = arith.constant 0 : i32
    return %arg1, %c0_i32, %c0_i32_0 : i32, i32, i32
  }
  func.func @transform_11(%arg0: i32, %arg1: i32) -> (i32, i32, i32) {
    %c0_i32 = arith.constant 0 : i32
    %c0_i32_0 = arith.constant 0 : i32
    %c0_i32_1 = arith.constant 0 : i32
    return %arg1, %c0_i32, %c0_i32_0 : i32, i32, i32
  }
  func.func @transform_12(%arg0: i32, %arg1: i32) -> (i32, i32, i32) {
    %c0_i32 = arith.constant 0 : i32
    %c0_i32_0 = arith.constant 0 : i32
    %c0_i32_1 = arith.constant 0 : i32
    return %arg1, %c0_i32, %c0_i32_0 : i32, i32, i32
  }
  func.func @transform_13(%arg0: i32, %arg1: i32) -> (i32, i32, i32) {
    %c0_i32 = arith.constant 0 : i32
    %c0_i32_0 = arith.constant 0 : i32
    %c0_i32_1 = arith.constant 0 : i32
    return %arg1, %c0_i32, %c0_i32_0 : i32, i32, i32
  }
  func.func @transform_14(%arg0: i32, %arg1: i32) -> (i32, i32, i32) {
    %c0_i32 = arith.constant 0 : i32
    %c0_i32_0 = arith.constant 0 : i32
    %c0_i32_1 = arith.constant 0 : i32
    return %arg1, %c0_i32, %c0_i32_0 : i32, i32, i32
  }
  func.func @transform_15(%arg0: i32, %arg1: i32) -> (i32, i32, i32) {
    %c0_i32 = arith.constant 0 : i32
    %c0_i32_0 = arith.constant 0 : i32
    %c0_i32_1 = arith.constant 0 : i32
    return %arg1, %c0_i32, %c0_i32_0 : i32, i32, i32
  }
  func.func @transform_16(%arg0: i32, %arg1: i32) -> (i32, i32, i32) {
    %c0_i32 = arith.constant 0 : i32
    %c0_i32_0 = arith.constant 0 : i32
    %c0_i32_1 = arith.constant 0 : i32
    return %arg1, %c0_i32, %c0_i32_0 : i32, i32, i32
  }
  func.func @transform_17(%arg0: i32, %arg1: i32) -> (i32, i32, i32) {
    %c0_i32 = arith.constant 0 : i32
    %c0_i32_0 = arith.constant 0 : i32
    %c0_i32_1 = arith.constant 0 : i32
    return %arg1, %c0_i32, %c0_i32_0 : i32, i32, i32
  }
  func.func @transform_18(%arg0: i32, %arg1: i32) -> (i32, i32, i32) {
    %c0_i32 = arith.constant 0 : i32
    %c0_i32_0 = arith.constant 0 : i32
    %c0_i32_1 = arith.constant 0 : i32
    return %arg1, %c0_i32, %c0_i32_0 : i32, i32, i32
  }
  func.func @transform_19(%arg0: i32, %arg1: i32) -> (i32, i32, i32) {
    %c0_i32 = arith.constant 0 : i32
    %c0_i32_0 = arith.constant 0 : i32
    %c0_i32_1 = arith.constant 0 : i32
    return %arg1, %c0_i32, %c0_i32_0 : i32, i32, i32
  }
  func.func @transform_20(%arg0: i32, %arg1: i32) -> (i32, i32, i32) {
    %c0_i32 = arith.constant 0 : i32
    %c0_i32_0 = arith.constant 0 : i32
    %c0_i32_1 = arith.constant 0 : i32
    return %arg1, %c0_i32, %c0_i32_0 : i32, i32, i32
  }
  func.func @transform_21(%arg0: i32, %arg1: i32) -> (i32, i32, i32) {
    %c0_i32 = arith.constant 0 : i32
    %c0_i32_0 = arith.constant 0 : i32
    %c0_i32_1 = arith.constant 0 : i32
    return %arg1, %c0_i32, %c0_i32_0 : i32, i32, i32
  }
  func.func @transform_22(%arg0: i32, %arg1: i32) -> (i32, i32, i32) {
    %c0_i32 = arith.constant 0 : i32
    %c0_i32_0 = arith.constant 0 : i32
    %c0_i32_1 = arith.constant 0 : i32
    return %arg1, %c0_i32, %c0_i32_0 : i32, i32, i32
  }
  func.func @transform_23(%arg0: i32, %arg1: i32) -> (i32, i32) {
    %c0_i32 = arith.constant 0 : i32
    %c0_i32_0 = arith.constant 0 : i32
    %c0_i32_1 = arith.constant 0 : i32
    return %c0_i32, %c0_i32_0 : i32, i32
  }
  func.func @transform_24(%arg0: i32, %arg1: i32) -> (i32, i32) {
    %c0_i32 = arith.constant 0 : i32
    %c0_i32_0 = arith.constant 0 : i32
    %c0_i32_1 = arith.constant 0 : i32
    return %c0_i32, %c0_i32_0 : i32, i32
  }
  func.func @transform_25(%arg0: i32, %arg1: i32) -> (i32, i32, i32) {
    %c0_i32 = arith.constant 0 : i32
    %c0_i32_0 = arith.constant 0 : i32
    %c0_i32_1 = arith.constant 0 : i32
    return %arg0, %c0_i32, %c0_i32_0 : i32, i32, i32
  }
}

</mosaic_0001>

<llo_original>
// kernel: vit_captioning_forward.2
$region0: #{vit_captioning_forward.2}
  #allocation0 [shape = 'u32[]', space=smem, size = 0x4, offset = 0x4, fixed_abs, tag = 'smem constant byte address 0x4 - core index']
  #allocation1 [shape = 'u32[144,128]{1,0:T(1,128)}', space=vmem, size = 0x12000, scoped, tag = 'internal scratch']
  #allocation2 [shape = 'f32[5,32]{1,0:T(8,128)}', space=vmem, size = 0x1000, scoped, tag = 'scratch operand']
  %s0 = inlined_call_operand.vmem [shape: f32[2,4,256], index: 0, kind: input, shape index: {}]
  %s1 = inlined_call_operand.vmem [shape: bf16[256,32], index: 1, kind: input, shape index: {}]
  %s2 = inlined_call_operand.vmem [shape: f32[1,32], index: 2, kind: input, shape index: {}]
  %s3 = inlined_call_operand.vmem [shape: f32[1,32], index: 3, kind: input, shape index: {}]
  %s4 = inlined_call_operand.vmem [shape: f32[4,32], index: 4, kind: input, shape index: {}]
  %s5 = inlined_call_operand.vmem [shape: f32[2,1,32], index: 5, kind: input, shape index: {}]
  %s6 = inlined_call_operand.vmem [shape: f32[2,1,32], index: 6, kind: input, shape index: {}]
  %s7 = inlined_call_operand.vmem [shape: bf16[2,32,96], index: 7, kind: input, shape index: {}]
  %s8 = inlined_call_operand.vmem [shape: f32[2,1,96], index: 8, kind: input, shape index: {}]
  %s9 = inlined_call_operand.vmem [shape: bf16[2,32,32], index: 9, kind: input, shape index: {}]
  %s10 = inlined_call_operand.vmem [shape: f32[2,1,32], index: 10, kind: input, shape index: {}]
  %s11 = inlined_call_operand.vmem [shape: f32[2,1,32], index: 11, kind: input, shape index: {}]
  %s12 = inlined_call_operand.vmem [shape: f32[2,1,32], index: 12, kind: input, shape index: {}]
  %s13 = inlined_call_operand.vmem [shape: bf16[2,32,64], index: 13, kind: input, shape index: {}]
  %s14 = inlined_call_operand.vmem [shape: f32[2,1,64], index: 14, kind: input, shape index: {}]
  %s15 = inlined_call_operand.vmem [shape: bf16[2,64,32], index: 15, kind: input, shape index: {}]
  %s16 = inlined_call_operand.vmem [shape: f32[2,1,32], index: 16, kind: input, shape index: {}]
  %s17 = inlined_call_operand.vmem [shape: f32[1,32], index: 17, kind: input, shape index: {}]
  %s18 = inlined_call_operand.vmem [shape: f32[1,32], index: 18, kind: input, shape index: {}]
  %s19 = inlined_call_operand.vmem [shape: f32[2,5,32], index: 19, kind: output, shape index: {}]
  %s20 = sld [smem:[#allocation0]]
  $region117: #{vit_captioning_forward.2} parent=0
    _
  %s22 = ssub.s32 1, %s20
  %s23 = scalar_select 0, %s22, %s20
  loop: start=0, step=1, limit=6
  $region2: #{vit_captioning_forward.2} parent=0 // loop_pre_header
    _
  $region3: #{vit_captioning_forward.2} parent=0 // loop_header
    %s25 = sphi 0, %s29
    %p26 = scmp.ge.s32.totalorder %s25, 6
    %s32 = sphi 0, %s44
    %s33 = sphi 0, %s40
    %s34 = sphi 0, %s32
    %s35 = sphi 0, %s33
    %s36 = sphi 0, %s34
    %s37 = sphi 0, %s35
    %s47 = sphi 0, %s49
    %s50 = sphi 0, %s47
    %s51 = sphi 0, %s50
    %s67 = sphi 0, %s51
    %s71 = sphi 0, %s71
    %s73 = sphi 0, %s71
    %s74 = sphi 0, %s73
    %s88 = sphi 0, %s74
    %s92 = sphi 0, %s92
    %s94 = sphi 0, %s92
    %s95 = sphi 0, %s94
    %s109 = sphi 0, %s95
    %s113 = sphi 0, %s113
    %s115 = sphi 0, %s113
    %s116 = sphi 0, %s115
    %s130 = sphi 0, %s116
    %s134 = sphi 0, %s134
    %s136 = sphi 0, %s134
    %s137 = sphi 0, %s136
    %s151 = sphi 0, %s137
    %s157 = sphi 0, %s159
    %s160 = sphi 0, %s157
    %s161 = sphi 0, %s160
    %s177 = sphi 0, %s161
    %s183 = sphi 0, %s185
    %s186 = sphi 0, %s183
    %s187 = sphi 0, %s186
    %s203 = sphi 0, %s187
    %s209 = sphi 0, %s211
    %s212 = sphi 0, %s209
    %s213 = sphi 0, %s212
    %s229 = sphi 0, %s213
    %s235 = sphi 0, %s237
    %s238 = sphi 0, %s235
    %s239 = sphi 0, %s238
    %s255 = sphi 0, %s239
    %s261 = sphi 0, %s263
    %s264 = sphi 0, %s261
    %s265 = sphi 0, %s264
    %s281 = sphi 0, %s265
    %s287 = sphi 0, %s289
    %s290 = sphi 0, %s287
    %s291 = sphi 0, %s290
    %s307 = sphi 0, %s291
    %s313 = sphi 0, %s315
    %s316 = sphi 0, %s313
    %s317 = sphi 0, %s316
    %s333 = sphi 0, %s317
    %s339 = sphi 0, %s341
    %s342 = sphi 0, %s339
    %s343 = sphi 0, %s342
    %s359 = sphi 0, %s343
    %s365 = sphi 0, %s367
    %s368 = sphi 0, %s365
    %s369 = sphi 0, %s368
    %s385 = sphi 0, %s369
    %s391 = sphi 0, %s393
    %s394 = sphi 0, %s391
    %s395 = sphi 0, %s394
    %s411 = sphi 0, %s395
    %s417 = sphi 0, %s419
    %s420 = sphi 0, %s417
    %s421 = sphi 0, %s420
    %s437 = sphi 0, %s421
    %s443 = sphi 0, %s445
    %s446 = sphi 0, %s443
    %s447 = sphi 0, %s446
    %s463 = sphi 0, %s447
    %s467 = sphi 0, %s467
    %s469 = sphi 0, %s467
    %s470 = sphi 0, %s469
    %s484 = sphi 0, %s470
    %s488 = sphi 0, %s488
    %s490 = sphi 0, %s488
    %s491 = sphi 0, %s490
    %s505 = sphi 0, %s491
    %s511 = sphi 0, %s513
    %s514 = sphi 0, %s511
    %s515 = sphi 0, %s514
    %s531 = sphi 0, %s515
  $region4: #{vit_captioning_forward.2} parent=0 // loop_header_branch
    %28 = sbr.rel (%p26) target = $region8
  $region5: #{vit_captioning_forward.2} parent=0 // loop_body
    %s30 = ssub.s32 %s25, 1
    %s31 = ssub.s32 %s25, 2
    %s38 = sadd.s32 1, %s33
    %p39 = scmp.ge.s32.totalorder %s38, 2
    %s40 = scalar_select %p39, 0, %s38
    %s41 = sadd.s32 1, %s32
    %s42 = scalar_select %p39, %s41, %s32
    %p43 = scmp.ge.s32.totalorder %s42, 2
    %s44 = scalar_select %p43, 0, %s42
    %s45 = ssub.s32 %s32, %s44
    %p46 = scmp.eq.s32.totalorder %s45, 0
    %s48 = sadd.s32 %s47, 1
    %s49 = scalar_select %p46, %s47, %s48
    %p52 = pneg %p46
    %p53 = scmp.eq.s32.totalorder %s25, 3
    %p54 = por %p52, %p53
    %p55 = scmp.ne.s32.totalorder %s47, %s50
    %p56 = scmp.eq.s32.totalorder %s25, 0
    %p57 = por %p55, %p56
    %p58 = scmp.ne.s32.totalorder %s47, %s50
    %p59 = scmp.eq.s32.totalorder %s30, 3
    %p60 = por %p58, %p59
    %p61 = scmp.ne.s32.totalorder %s50, %s51
    %p62 = scmp.eq.s32.totalorder %s30, 0
    %p63 = por %p61, %p62
    %p64 = scmp.ne.s32.totalorder %s50, %s51
    %p65 = scmp.eq.s32.totalorder %s31, 3
    %p66 = por %p64, %p65
    %p68 = scmp.ne.s32.totalorder %s51, %s67
    %p69 = scmp.eq.s32.totalorder %s31, 0
    %p70 = por %p68, %p69
    %s72 = sadd.s32 %s71, 1
    %p75 = scmp.eq.s32.totalorder %s25, 3
    %p76 = scmp.ne.s32.totalorder %s71, %s73
    %p77 = scmp.eq.s32.totalorder %s25, 0
    %p78 = por %p76, %p77
    %p79 = scmp.ne.s32.totalorder %s71, %s73
    %p80 = scmp.eq.s32.totalorder %s30, 3
    %p81 = por %p79, %p80
    %p82 = scmp.ne.s32.totalorder %s73, %s74
    %p83 = scmp.eq.s32.totalorder %s30, 0
    %p84 = por %p82, %p83
    %p85 = scmp.ne.s32.totalorder %s73, %s74
    %p86 = scmp.eq.s32.totalorder %s31, 3
    %p87 = por %p85, %p86
    %p89 = scmp.ne.s32.totalorder %s74, %s88
    %p90 = scmp.eq.s32.totalorder %s31, 0
    %p91 = por %p89, %p90
    %s93 = sadd.s32 %s92, 1
    %p96 = scmp.eq.s32.totalorder %s25, 3
    %p97 = scmp.ne.s32.totalorder %s92, %s94
    %p98 = scmp.eq.s32.totalorder %s25, 0
    %p99 = por %p97, %p98
    %p100 = scmp.ne.s32.totalorder %s92, %s94
    %p101 = scmp.eq.s32.totalorder %s30, 3
    %p102 = por %p100, %p101
    %p103 = scmp.ne.s32.totalorder %s94, %s95
    %p104 = scmp.eq.s32.totalorder %s30, 0
    %p105 = por %p103, %p104
    %p106 = scmp.ne.s32.totalorder %s94, %s95
    %p107 = scmp.eq.s32.totalorder %s31, 3
    %p108 = por %p106, %p107
    %p110 = scmp.ne.s32.totalorder %s95, %s109
    %p111 = scmp.eq.s32.totalorder %s31, 0
    %p112 = por %p110, %p111
    %s114 = sadd.s32 %s113, 1
    %p117 = scmp.eq.s32.totalorder %s25, 3
    %p118 = scmp.ne.s32.totalorder %s113, %s115
    %p119 = scmp.eq.s32.totalorder %s25, 0
    %p120 = por %p118, %p119
    %p121 = scmp.ne.s32.totalorder %s113, %s115
    %p122 = scmp.eq.s32.totalorder %s30, 3
    %p123 = por %p121, %p122
    %p124 = scmp.ne.s32.totalorder %s115, %s116
    %p125 = scmp.eq.s32.totalorder %s30, 0
    %p126 = por %p124, %p125
    %p127 = scmp.ne.s32.totalorder %s115, %s116
    %p128 = scmp.eq.s32.totalorder %s31, 3
    %p129 = por %p127, %p128
    %p131 = scmp.ne.s32.totalorder %s116, %s130
    %p132 = scmp.eq.s32.totalorder %s31, 0
    %p133 = por %p131, %p132
    %s135 = sadd.s32 %s134, 1
    %p138 = scmp.eq.s32.totalorder %s25, 3
    %p139 = scmp.ne.s32.totalorder %s134, %s136
    %p140 = scmp.eq.s32.totalorder %s25, 0
    %p141 = por %p139, %p140
    %p142 = scmp.ne.s32.totalorder %s134, %s136
    %p143 = scmp.eq.s32.totalorder %s30, 3
    %p144 = por %p142, %p143
    %p145 = scmp.ne.s32.totalorder %s136, %s137
    %p146 = scmp.eq.s32.totalorder %s30, 0
    %p147 = por %p145, %p146
    %p148 = scmp.ne.s32.totalorder %s136, %s137
    %p149 = scmp.eq.s32.totalorder %s31, 3
    %p150 = por %p148, %p149
    %p152 = scmp.ne.s32.totalorder %s137, %s151
    %p153 = scmp.eq.s32.totalorder %s31, 0
    %p154 = por %p152, %p153
    %s155 = ssub.s32 %s33, %s40
    %p156 = scmp.eq.s32.totalorder %s155, 0
    %s158 = sadd.s32 %s157, 1
    %s159 = scalar_select %p156, %s157, %s158
    %p162 = pneg %p156
    %p163 = scmp.eq.s32.totalorder %s25, 3
    %p164 = por %p162, %p163
    %p165 = scmp.ne.s32.totalorder %s157, %s160
    %p166 = scmp.eq.s32.totalorder %s25, 0
    %p167 = por %p165, %p166
    %p168 = scmp.ne.s32.totalorder %s157, %s160
    %p169 = scmp.eq.s32.totalorder %s30, 3
    %p170 = por %p168, %p169
    %p171 = scmp.ne.s32.totalorder %s160, %s161
    %p172 = scmp.eq.s32.totalorder %s30, 0
    %p173 = por %p171, %p172
    %p174 = scmp.ne.s32.totalorder %s160, %s161
    %p175 = scmp.eq.s32.totalorder %s31, 3
    %p176 = por %p174, %p175
    %p178 = scmp.ne.s32.totalorder %s161, %s177
    %p179 = scmp.eq.s32.totalorder %s31, 0
    %p180 = por %p178, %p179
    %s181 = ssub.s32 %s33, %s40
    %p182 = scmp.eq.s32.totalorder %s181, 0
    %s184 = sadd.s32 %s183, 1
    %s185 = scalar_select %p182, %s183, %s184
    %p188 = pneg %p182
    %p189 = scmp.eq.s32.totalorder %s25, 3
    %p190 = por %p188, %p189
    %p191 = scmp.ne.s32.totalorder %s183, %s186
    %p192 = scmp.eq.s32.totalorder %s25, 0
    %p193 = por %p191, %p192
    %p194 = scmp.ne.s32.totalorder %s183, %s186
    %p195 = scmp.eq.s32.totalorder %s30, 3
    %p196 = por %p194, %p195
    %p197 = scmp.ne.s32.totalorder %s186, %s187
    %p198 = scmp.eq.s32.totalorder %s30, 0
    %p199 = por %p197, %p198
    %p200 = scmp.ne.s32.totalorder %s186, %s187
    %p201 = scmp.eq.s32.totalorder %s31, 3
    %p202 = por %p200, %p201
    %p204 = scmp.ne.s32.totalorder %s187, %s203
    %p205 = scmp.eq.s32.totalorder %s31, 0
    %p206 = por %p204, %p205
    %s207 = ssub.s32 %s33, %s40
    %p208 = scmp.eq.s32.totalorder %s207, 0
    %s210 = sadd.s32 %s209, 1
    %s211 = scalar_select %p208, %s209, %s210
    %p214 = pneg %p208
    %p215 = scmp.eq.s32.totalorder %s25, 3
    %p216 = por %p214, %p215
    %p217 = scmp.ne.s32.totalorder %s209, %s212
    %p218 = scmp.eq.s32.totalorder %s25, 0
    %p219 = por %p217, %p218
    %p220 = scmp.ne.s32.totalorder %s209, %s212
    %p221 = scmp.eq.s32.totalorder %s30, 3
    %p222 = por %p220, %p221
    %p223 = scmp.ne.s32.totalorder %s212, %s213
    %p224 = scmp.eq.s32.totalorder %s30, 0
    %p225 = por %p223, %p224
    %p226 = scmp.ne.s32.totalorder %s212, %s213
    %p227 = scmp.eq.s32.totalorder %s31, 3
    %p228 = por %p226, %p227
    %p230 = scmp.ne.s32.totalorder %s213, %s229
    %p231 = scmp.eq.s32.totalorder %s31, 0
    %p232 = por %p230, %p231
    %s233 = ssub.s32 %s33, %s40
    %p234 = scmp.eq.s32.totalorder %s233, 0
    %s236 = sadd.s32 %s235, 1
    %s237 = scalar_select %p234, %s235, %s236
    %p240 = pneg %p234
    %p241 = scmp.eq.s32.totalorder %s25, 3
    %p242 = por %p240, %p241
    %p243 = scmp.ne.s32.totalorder %s235, %s238
    %p244 = scmp.eq.s32.totalorder %s25, 0
    %p245 = por %p243, %p244
    %p246 = scmp.ne.s32.totalorder %s235, %s238
    %p247 = scmp.eq.s32.totalorder %s30, 3
    %p248 = por %p246, %p247
    %p249 = scmp.ne.s32.totalorder %s238, %s239
    %p250 = scmp.eq.s32.totalorder %s30, 0
    %p251 = por %p249, %p250
    %p252 = scmp.ne.s32.totalorder %s238, %s239
    %p253 = scmp.eq.s32.totalorder %s31, 3
    %p254 = por %p252, %p253
    %p256 = scmp.ne.s32.totalorder %s239, %s255
    %p257 = scmp.eq.s32.totalorder %s31, 0
    %p258 = por %p256, %p257
    %s259 = ssub.s32 %s33, %s40
    %p260 = scmp.eq.s32.totalorder %s259, 0
    %s262 = sadd.s32 %s261, 1
    %s263 = scalar_select %p260, %s261, %s262
    %p266 = pneg %p260
    %p267 = scmp.eq.s32.totalorder %s25, 3
    %p268 = por %p266, %p267
    %p269 = scmp.ne.s32.totalorder %s261, %s264
    %p270 = scmp.eq.s32.totalorder %s25, 0
    %p271 = por %p269, %p270
    %p272 = scmp.ne.s32.totalorder %s261, %s264
    %p273 = scmp.eq.s32.totalorder %s30, 3
    %p274 = por %p272, %p273
    %p275 = scmp.ne.s32.totalorder %s264, %s265
    %p276 = scmp.eq.s32.totalorder %s30, 0
    %p277 = por %p275, %p276
    %p278 = scmp.ne.s32.totalorder %s264, %s265
    %p279 = scmp.eq.s32.totalorder %s31, 3
    %p280 = por %p278, %p279
    %p282 = scmp.ne.s32.totalorder %s265, %s281
    %p283 = scmp.eq.s32.totalorder %s31, 0
    %p284 = por %p282, %p283
    %s285 = ssub.s32 %s33, %s40
    %p286 = scmp.eq.s32.totalorder %s285, 0
    %s288 = sadd.s32 %s287, 1
    %s289 = scalar_select %p286, %s287, %s288
    %p292 = pneg %p286
    %p293 = scmp.eq.s32.totalorder %s25, 3
    %p294 = por %p292, %p293
    %p295 = scmp.ne.s32.totalorder %s287, %s290
    %p296 = scmp.eq.s32.totalorder %s25, 0
    %p297 = por %p295, %p296
    %p298 = scmp.ne.s32.totalorder %s287, %s290
    %p299 = scmp.eq.s32.totalorder %s30, 3
    %p300 = por %p298, %p299
    %p301 = scmp.ne.s32.totalorder %s290, %s291
    %p302 = scmp.eq.s32.totalorder %s30, 0
    %p303 = por %p301, %p302
    %p304 = scmp.ne.s32.totalorder %s290, %s291
    %p305 = scmp.eq.s32.totalorder %s31, 3
    %p306 = por %p304, %p305
    %p308 = scmp.ne.s32.totalorder %s291, %s307
    %p309 = scmp.eq.s32.totalorder %s31, 0
    %p310 = por %p308, %p309
    %s311 = ssub.s32 %s33, %s40
    %p312 = scmp.eq.s32.totalorder %s311, 0
    %s314 = sadd.s32 %s313, 1
    %s315 = scalar_select %p312, %s313, %s314
    %p318 = pneg %p312
    %p319 = scmp.eq.s32.totalorder %s25, 3
    %p320 = por %p318, %p319
    %p321 = scmp.ne.s32.totalorder %s313, %s316
    %p322 = scmp.eq.s32.totalorder %s25, 0
    %p323 = por %p321, %p322
    %p324 = scmp.ne.s32.totalorder %s313, %s316
    %p325 = scmp.eq.s32.totalorder %s30, 3
    %p326 = por %p324, %p325
    %p327 = scmp.ne.s32.totalorder %s316, %s317
    %p328 = scmp.eq.s32.totalorder %s30, 0
    %p329 = por %p327, %p328
    %p330 = scmp.ne.s32.totalorder %s316, %s317
    %p331 = scmp.eq.s32.totalorder %s31, 3
    %p332 = por %p330, %p331
    %p334 = scmp.ne.s32.totalorder %s317, %s333
    %p335 = scmp.eq.s32.totalorder %s31, 0
    %p336 = por %p334, %p335
    %s337 = ssub.s32 %s33, %s40
    %p338 = scmp.eq.s32.totalorder %s337, 0
    %s340 = sadd.s32 %s339, 1
    %s341 = scalar_select %p338, %s339, %s340
    %p344 = pneg %p338
    %p345 = scmp.eq.s32.totalorder %s25, 3
    %p346 = por %p344, %p345
    %p347 = scmp.ne.s32.totalorder %s339, %s342
    %p348 = scmp.eq.s32.totalorder %s25, 0
    %p349 = por %p347, %p348
    %p350 = scmp.ne.s32.totalorder %s339, %s342
    %p351 = scmp.eq.s32.totalorder %s30, 3
    %p352 = por %p350, %p351
    %p353 = scmp.ne.s32.totalorder %s342, %s343
    %p354 = scmp.eq.s32.totalorder %s30, 0
    %p355 = por %p353, %p354
    %p356 = scmp.ne.s32.totalorder %s342, %s343
    %p357 = scmp.eq.s32.totalorder %s31, 3
    %p358 = por %p356, %p357
    %p360 = scmp.ne.s32.totalorder %s343, %s359
    %p361 = scmp.eq.s32.totalorder %s31, 0
    %p362 = por %p360, %p361
    %s363 = ssub.s32 %s33, %s40
    %p364 = scmp.eq.s32.totalorder %s363, 0
    %s366 = sadd.s32 %s365, 1
    %s367 = scalar_select %p364, %s365, %s366
    %p370 = pneg %p364
    %p371 = scmp.eq.s32.totalorder %s25, 3
    %p372 = por %p370, %p371
    %p373 = scmp.ne.s32.totalorder %s365, %s368
    %p374 = scmp.eq.s32.totalorder %s25, 0
    %p375 = por %p373, %p374
    %p376 = scmp.ne.s32.totalorder %s365, %s368
    %p377 = scmp.eq.s32.totalorder %s30, 3
    %p378 = por %p376, %p377
    %p379 = scmp.ne.s32.totalorder %s368, %s369
    %p380 = scmp.eq.s32.totalorder %s30, 0
    %p381 = por %p379, %p380
    %p382 = scmp.ne.s32.totalorder %s368, %s369
    %p383 = scmp.eq.s32.totalorder %s31, 3
    %p384 = por %p382, %p383
    %p386 = scmp.ne.s32.totalorder %s369, %s385
    %p387 = scmp.eq.s32.totalorder %s31, 0
    %p388 = por %p386, %p387
    %s389 = ssub.s32 %s33, %s40
    %p390 = scmp.eq.s32.totalorder %s389, 0
    %s392 = sadd.s32 %s391, 1
    %s393 = scalar_select %p390, %s391, %s392
    %p396 = pneg %p390
    %p397 = scmp.eq.s32.totalorder %s25, 3
    %p398 = por %p396, %p397
    %p399 = scmp.ne.s32.totalorder %s391, %s394
    %p400 = scmp.eq.s32.totalorder %s25, 0
    %p401 = por %p399, %p400
    %p402 = scmp.ne.s32.totalorder %s391, %s394
    %p403 = scmp.eq.s32.totalorder %s30, 3
    %p404 = por %p402, %p403
    %p405 = scmp.ne.s32.totalorder %s394, %s395
    %p406 = scmp.eq.s32.totalorder %s30, 0
    %p407 = por %p405, %p406
    %p408 = scmp.ne.s32.totalorder %s394, %s395
    %p409 = scmp.eq.s32.totalorder %s31, 3
    %p410 = por %p408, %p409
    %p412 = scmp.ne.s32.totalorder %s395, %s411
    %p413 = scmp.eq.s32.totalorder %s31, 0
    %p414 = por %p412, %p413
    %s415 = ssub.s32 %s33, %s40
    %p416 = scmp.eq.s32.totalorder %s415, 0
    %s418 = sadd.s32 %s417, 1
    %s419 = scalar_select %p416, %s417, %s418
    %p422 = pneg %p416
    %p423 = scmp.eq.s32.totalorder %s25, 3
    %p424 = por %p422, %p423
    %p425 = scmp.ne.s32.totalorder %s417, %s420
    %p426 = scmp.eq.s32.totalorder %s25, 0
    %p427 = por %p425, %p426
    %p428 = scmp.ne.s32.totalorder %s417, %s420
    %p429 = scmp.eq.s32.totalorder %s30, 3
    %p430 = por %p428, %p429
    %p431 = scmp.ne.s32.totalorder %s420, %s421
    %p432 = scmp.eq.s32.totalorder %s30, 0
    %p433 = por %p431, %p432
    %p434 = scmp.ne.s32.totalorder %s420, %s421
    %p435 = scmp.eq.s32.totalorder %s31, 3
    %p436 = por %p434, %p435
    %p438 = scmp.ne.s32.totalorder %s421, %s437
    %p439 = scmp.eq.s32.totalorder %s31, 0
    %p440 = por %p438, %p439
    %s441 = ssub.s32 %s33, %s40
    %p442 = scmp.eq.s32.totalorder %s441, 0
    %s444 = sadd.s32 %s443, 1
    %s445 = scalar_select %p442, %s443, %s444
    %p448 = pneg %p442
    %p449 = scmp.eq.s32.totalorder %s25, 3
    %p450 = por %p448, %p449
    %p451 = scmp.ne.s32.totalorder %s443, %s446
    %p452 = scmp.eq.s32.totalorder %s25, 0
    %p453 = por %p451, %p452
    %p454 = scmp.ne.s32.totalorder %s443, %s446
    %p455 = scmp.eq.s32.totalorder %s30, 3
    %p456 = por %p454, %p455
    %p457 = scmp.ne.s32.totalorder %s446, %s447
    %p458 = scmp.eq.s32.totalorder %s30, 0
    %p459 = por %p457, %p458
    %p460 = scmp.ne.s32.totalorder %s446, %s447
    %p461 = scmp.eq.s32.totalorder %s31, 3
    %p462 = por %p460, %p461
    %p464 = scmp.ne.s32.totalorder %s447, %s463
    %p465 = scmp.eq.s32.totalorder %s31, 0
    %p466 = por %p464, %p465
    %s468 = sadd.s32 %s467, 1
    %p471 = scmp.eq.s32.totalorder %s25, 3
    %p472 = scmp.ne.s32.totalorder %s467, %s469
    %p473 = scmp.eq.s32.totalorder %s25, 0
    %p474 = por %p472, %p473
    %p475 = scmp.ne.s32.totalorder %s467, %s469
    %p476 = scmp.eq.s32.totalorder %s30, 3
    %p477 = por %p475, %p476
    %p478 = scmp.ne.s32.totalorder %s469, %s470
    %p479 = scmp.eq.s32.totalorder %s30, 0
    %p480 = por %p478, %p479
    %p481 = scmp.ne.s32.totalorder %s469, %s470
    %p482 = scmp.eq.s32.totalorder %s31, 3
    %p483 = por %p481, %p482
    %p485 = scmp.ne.s32.totalorder %s470, %s484
    %p486 = scmp.eq.s32.totalorder %s31, 0
    %p487 = por %p485, %p486
    %s489 = sadd.s32 %s488, 1
    %p492 = scmp.eq.s32.totalorder %s25, 3
    %p493 = scmp.ne.s32.totalorder %s488, %s490
    %p494 = scmp.eq.s32.totalorder %s25, 0
    %p495 = por %p493, %p494
    %p496 = scmp.ne.s32.totalorder %s488, %s490
    %p497 = scmp.eq.s32.totalorder %s30, 3
    %p498 = por %p496, %p497
    %p499 = scmp.ne.s32.totalorder %s490, %s491
    %p500 = scmp.eq.s32.totalorder %s30, 0
    %p501 = por %p499, %p500
    %p502 = scmp.ne.s32.totalorder %s490, %s491
    %p503 = scmp.eq.s32.totalorder %s31, 3
    %p504 = por %p502, %p503
    %p506 = scmp.ne.s32.totalorder %s491, %s505
    %p507 = scmp.eq.s32.totalorder %s31, 0
    %p508 = por %p506, %p507
    %s509 = ssub.s32 %s32, %s44
    %p510 = scmp.eq.s32.totalorder %s509, 0
    %s512 = sadd.s32 %s511, 1
    %s513 = scalar_select %p510, %s511, %s512
    %p516 = pneg %p510
    %p517 = scmp.eq.s32.totalorder %s25, 3
    %p518 = por %p516, %p517
    %p519 = scmp.ne.s32.totalorder %s511, %s514
    %p520 = scmp.eq.s32.totalorder %s25, 0
    %p521 = por %p519, %p520
    %p522 = scmp.ne.s32.totalorder %s511, %s514
    %p523 = scmp.eq.s32.totalorder %s30, 3
    %p524 = por %p522, %p523
    %p525 = scmp.ne.s32.totalorder %s514, %s515
    %p526 = scmp.eq.s32.totalorder %s30, 0
    %p527 = por %p525, %p526
    %p528 = scmp.ne.s32.totalorder %s514, %s515
    %p529 = scmp.eq.s32.totalorder %s31, 3
    %p530 = por %p528, %p529
    %p532 = scmp.ne.s32.totalorder %s515, %s531
    %p533 = scmp.eq.s32.totalorder %s31, 0
    %p534 = por %p532, %p533
    %p535 = scmp.le.s32.totalorder 1, %s25
    %p536 = scmp.lt.s32.totalorder %s25, 5
    %p537 = pnand %p535, %p536
    %p538 = pneg %p537
    // Predicated region
    $region9: #{vit_captioning_forward.2} parent=5 // pred_check
      _
    $region10: #{vit_captioning_forward.2} parent=5 // pred_check_branch
      %540 = sbr.rel (%p537) target = $region12
    $region11: #{vit_captioning_forward.2} parent=5 // pred_region
      %s541 = ssub.s32 %s25, 1
      // Predicated region
      $region13: #{vit_captioning_forward.2} parent=11 // pred_check
        %p542 = pneg %p84
      $region14: #{vit_captioning_forward.2} parent=11 // pred_check_branch
        %544 = sbr.rel (%p542) target = $region16
      $region15: #{vit_captioning_forward.2} parent=11 // pred_region
        _
      $region16: #{vit_captioning_forward.2} parent=11 // pred_fallthru
        _
      // Predicated region
      $region17: #{vit_captioning_forward.2} parent=11 // pred_check
        %p545 = pneg %p105
      $region18: #{vit_captioning_forward.2} parent=11 // pred_check_branch
        %547 = sbr.rel (%p545) target = $region20
      $region19: #{vit_captioning_forward.2} parent=11 // pred_region
        _
      $region20: #{vit_captioning_forward.2} parent=11 // pred_fallthru
        _
      // Predicated region
      $region21: #{vit_captioning_forward.2} parent=11 // pred_check
        %p548 = pneg %p126
      $region22: #{vit_captioning_forward.2} parent=11 // pred_check_branch
        %550 = sbr.rel (%p548) target = $region24
      $region23: #{vit_captioning_forward.2} parent=11 // pred_region
        _
      $region24: #{vit_captioning_forward.2} parent=11 // pred_fallthru
        _
      // Predicated region
      $region25: #{vit_captioning_forward.2} parent=11 // pred_check
        %p551 = pneg %p147
      $region26: #{vit_captioning_forward.2} parent=11 // pred_check_branch
        %553 = sbr.rel (%p551) target = $region28
      $region27: #{vit_captioning_forward.2} parent=11 // pred_region
        _
      $region28: #{vit_captioning_forward.2} parent=11 // pred_fallthru
        _
      // Predicated region
      $region29: #{vit_captioning_forward.2} parent=11 // pred_check
        %p554 = pneg %p480
      $region30: #{vit_captioning_forward.2} parent=11 // pred_check_branch
        %556 = sbr.rel (%p554) target = $region32
      $region31: #{vit_captioning_forward.2} parent=11 // pred_region
        _
      $region32: #{vit_captioning_forward.2} parent=11 // pred_fallthru
        _
      // Predicated region
      $region33: #{vit_captioning_forward.2} parent=11 // pred_check
        %p557 = pneg %p501
      $region34: #{vit_captioning_forward.2} parent=11 // pred_check_branch
        %559 = sbr.rel (%p557) target = $region36
      $region35: #{vit_captioning_forward.2} parent=11 // pred_region
        _
      $region36: #{vit_captioning_forward.2} parent=11 // pred_fallthru
        _
    $region12: #{vit_captioning_forward.2} parent=5 // pred_fallthru
      _
    %p560 = scmp.lt.s32.totalorder %s25, 4
    // Predicated region
    $region37: #{vit_captioning_forward.2} parent=5 // pred_check
      %p561 = pneg %p560
    $region38: #{vit_captioning_forward.2} parent=5 // pred_check_branch
      %563 = sbr.rel (%p561) target = $region40
    $region39: #{vit_captioning_forward.2} parent=5 // pred_region
      // Predicated region
      $region41: #{vit_captioning_forward.2} parent=39 // pred_check
        %p564 = pneg %p57
      $region42: #{vit_captioning_forward.2} parent=39 // pred_check_branch
        %566 = sbr.rel (%p564) target = $region44
      $region43: #{vit_captioning_forward.2} parent=39 // pred_region
        %p567 = scmp.lt.s32.totalorder %s32, 1
        %s568 = scalar_select %p567, %s32, 1
        %s569 = smul.addr %s568, 2
        %s570 = smul.addr %s569, 4
        %s571 = scalar_lea.vmem %s0, %s570
      $region44: #{vit_captioning_forward.2} parent=39 // pred_fallthru
        _
      // Predicated region
      $region45: #{vit_captioning_forward.2} parent=39 // pred_check
        %p572 = pneg %p167
      $region46: #{vit_captioning_forward.2} parent=39 // pred_check_branch
        %574 = sbr.rel (%p572) target = $region48
      $region47: #{vit_captioning_forward.2} parent=39 // pred_region
        %p575 = scmp.lt.s32.totalorder %s33, 1
        %s576 = scalar_select %p575, %s33, 1
        %s577 = scalar_lea.vmem %s5, %s576
      $region48: #{vit_captioning_forward.2} parent=39 // pred_fallthru
        _
      // Predicated region
      $region49: #{vit_captioning_forward.2} parent=39 // pred_check
        %p578 = pneg %p193
      $region50: #{vit_captioning_forward.2} parent=39 // pred_check_branch
        %580 = sbr.rel (%p578) target = $region52
      $region51: #{vit_captioning_forward.2} parent=39 // pred_region
        %p581 = scmp.lt.s32.totalorder %s33, 1
        %s582 = scalar_select %p581, %s33, 1
        %s583 = scalar_lea.vmem %s6, %s582
      $region52: #{vit_captioning_forward.2} parent=39 // pred_fallthru
        _
      // Predicated region
      $region53: #{vit_captioning_forward.2} parent=39 // pred_check
        %p584 = pneg %p219
      $region54: #{vit_captioning_forward.2} parent=39 // pred_check_branch
        %586 = sbr.rel (%p584) target = $region56
      $region55: #{vit_captioning_forward.2} parent=39 // pred_region
        %p587 = scmp.lt.s32.totalorder %s33, 1
        %s588 = scalar_select %p587, %s33, 1
        %s589 = smul.addr %s588, 4
        %s590 = smul.addr %s589, 4
        %s591 = scalar_lea.vmem %s7, %s590
      $region56: #{vit_captioning_forward.2} parent=39 // pred_fallthru
        _
      // Predicated region
      $region57: #{vit_captioning_forward.2} parent=39 // pred_check
        %p592 = pneg %p245
      $region58: #{vit_captioning_forward.2} parent=39 // pred_check_branch
        %594 = sbr.rel (%p592) target = $region60
      $region59: #{vit_captioning_forward.2} parent=39 // pred_region
        %p595 = scmp.lt.s32.totalorder %s33, 1
        %s596 = scalar_select %p595, %s33, 1
        %s597 = scalar_lea.vmem %s8, %s596
      $region60: #{vit_captioning_forward.2} parent=39 // pred_fallthru
        _
      // Predicated region
      $region61: #{vit_captioning_forward.2} parent=39 // pred_check
        %p598 = pneg %p271
      $region62: #{vit_captioning_forward.2} parent=39 // pred_check_branch
        %600 = sbr.rel (%p598) target = $region64
      $region63: #{vit_captioning_forward.2} parent=39 // pred_region
        %p601 = scmp.lt.s32.totalorder %s33, 1
        %s602 = scalar_select %p601, %s33, 1
        %s603 = smul.addr %s602, 4
        %s604 = smul.addr %s603, 4
        %s605 = scalar_lea.vmem %s9, %s604
      $region64: #{vit_captioning_forward.2} parent=39 // pred_fallthru
        _
      // Predicated region
      $region65: #{vit_captioning_forward.2} parent=39 // pred_check
        %p606 = pneg %p297
      $region66: #{vit_captioning_forward.2} parent=39 // pred_check_branch
        %608 = sbr.rel (%p606) target = $region68
      $region67: #{vit_captioning_forward.2} parent=39 // pred_region
        %p609 = scmp.lt.s32.totalorder %s33, 1
        %s610 = scalar_select %p609, %s33, 1
        %s611 = scalar_lea.vmem %s10, %s610
      $region68: #{vit_captioning_forward.2} parent=39 // pred_fallthru
        _
      // Predicated region
      $region69: #{vit_captioning_forward.2} parent=39 // pred_check
        %p612 = pneg %p323
      $region70: #{vit_captioning_forward.2} parent=39 // pred_check_branch
        %614 = sbr.rel (%p612) target = $region72
      $region71: #{vit_captioning_forward.2} parent=39 // pred_region
        %p615 = scmp.lt.s32.totalorder %s33, 1
        %s616 = scalar_select %p615, %s33, 1
        %s617 = scalar_lea.vmem %s11, %s616
      $region72: #{vit_captioning_forward.2} parent=39 // pred_fallthru
        _
      // Predicated region
      $region73: #{vit_captioning_forward.2} parent=39 // pred_check
        %p618 = pneg %p349
      $region74: #{vit_captioning_forward.2} parent=39 // pred_check_branch
        %620 = sbr.rel (%p618) target = $region76
      $region75: #{vit_captioning_forward.2} parent=39 // pred_region
        %p621 = scmp.lt.s32.totalorder %s33, 1
        %s622 = scalar_select %p621, %s33, 1
        %s623 = scalar_lea.vmem %s12, %s622
      $region76: #{vit_captioning_forward.2} parent=39 // pred_fallthru
        _
      // Predicated region
      $region77: #{vit_captioning_forward.2} parent=39 // pred_check
        %p624 = pneg %p375
      $region78: #{vit_captioning_forward.2} parent=39 // pred_check_branch
        %626 = sbr.rel (%p624) target = $region80
      $region79: #{vit_captioning_forward.2} parent=39 // pred_region
        %p627 = scmp.lt.s32.totalorder %s33, 1
        %s628 = scalar_select %p627, %s33, 1
        %s629 = smul.addr %s628, 4
        %s630 = smul.addr %s629, 4
        %s631 = scalar_lea.vmem %s13, %s630
      $region80: #{vit_captioning_forward.2} parent=39 // pred_fallthru
        _
      // Predicated region
      $region81: #{vit_captioning_forward.2} parent=39 // pred_check
        %p632 = pneg %p401
      $region82: #{vit_captioning_forward.2} parent=39 // pred_check_branch
        %634 = sbr.rel (%p632) target = $region84
      $region83: #{vit_captioning_forward.2} parent=39 // pred_region
        %p635 = scmp.lt.s32.totalorder %s33, 1
        %s636 = scalar_select %p635, %s33, 1
        %s637 = scalar_lea.vmem %s14, %s636
      $region84: #{vit_captioning_forward.2} parent=39 // pred_fallthru
        _
      // Predicated region
      $region85: #{vit_captioning_forward.2} parent=39 // pred_check
        %p638 = pneg %p427
      $region86: #{vit_captioning_forward.2} parent=39 // pred_check_branch
        %640 = sbr.rel (%p638) target = $region88
      $region87: #{vit_captioning_forward.2} parent=39 // pred_region
        %p641 = scmp.lt.s32.totalorder %s33, 1
        %s642 = scalar_select %p641, %s33, 1
        %s643 = smul.addr %s642, 8
        %s644 = smul.addr %s643, 4
        %s645 = scalar_lea.vmem %s15, %s644
      $region88: #{vit_captioning_forward.2} parent=39 // pred_fallthru
        _
      // Predicated region
      $region89: #{vit_captioning_forward.2} parent=39 // pred_check
        %p646 = pneg %p453
      $region90: #{vit_captioning_forward.2} parent=39 // pred_check_branch
        %648 = sbr.rel (%p646) target = $region92
      $region91: #{vit_captioning_forward.2} parent=39 // pred_region
        %p649 = scmp.lt.s32.totalorder %s33, 1
        %s650 = scalar_select %p649, %s33, 1
        %s651 = scalar_lea.vmem %s16, %s650
      $region92: #{vit_captioning_forward.2} parent=39 // pred_fallthru
        _
    $region40: #{vit_captioning_forward.2} parent=5 // pred_fallthru
      _
    %p652 = scmp.le.s32.totalorder 1, %s25
    %p653 = scmp.lt.s32.totalorder %s25, 5
    %p654 = pnand %p652, %p653
    %p655 = pneg %p654
    // Predicated region
    $region93: #{vit_captioning_forward.2} parent=5 // pred_check
      _
    $region94: #{vit_captioning_forward.2} parent=5 // pred_check_branch
      %657 = sbr.rel (%p654) target = $region96
    $region95: #{vit_captioning_forward.2} parent=5 // pred_region
      %s658 = ssub.s32 %s25, 1
      %p659 = scmp.lt.s32.totalorder %s34, 1
      %s660 = scalar_select %p659, %s34, 1
      %s661 = smul.addr %s660, 2
      %s662 = smul.addr %s661, 4
      %s663 = scalar_lea.vmem %s0, %s662
      %p664 = pneg %p63
      %p665 = pneg %p60
      %p666 = pneg %p84
      %p667 = pneg %p81
      %p668 = pneg %p105
      %p669 = pneg %p102
      %p670 = pneg %p126
      %p671 = pneg %p123
      %p672 = pneg %p147
      %p673 = pneg %p144
      %p674 = scmp.lt.s32.totalorder %s35, 1
      %s675 = scalar_select %p674, %s35, 1
      %s676 = scalar_lea.vmem %s5, %s675
      %p677 = pneg %p173
      %p678 = pneg %p170
      %p679 = scmp.lt.s32.totalorder %s35, 1
      %s680 = scalar_select %p679, %s35, 1
      %s681 = scalar_lea.vmem %s6, %s680
      %p682 = pneg %p199
      %p683 = pneg %p196
      %p684 = scmp.lt.s32.totalorder %s35, 1
      %s685 = scalar_select %p684, %s35, 1
      %s686 = smul.addr %s685, 4
      %s687 = smul.addr %s686, 4
      %s688 = scalar_lea.vmem %s7, %s687
      %p689 = pneg %p225
      %p690 = pneg %p222
      %p691 = scmp.lt.s32.totalorder %s35, 1
      %s692 = scalar_select %p691, %s35, 1
      %s693 = scalar_lea.vmem %s8, %s692
      %p694 = pneg %p251
      %p695 = pneg %p248
      %p696 = scmp.lt.s32.totalorder %s35, 1
      %s697 = scalar_select %p696, %s35, 1
      %s698 = smul.addr %s697, 4
      %s699 = smul.addr %s698, 4
      %s700 = scalar_lea.vmem %s9, %s699
      %p701 = pneg %p277
      %p702 = pneg %p274
      %p703 = scmp.lt.s32.totalorder %s35, 1
      %s704 = scalar_select %p703, %s35, 1
      %s705 = scalar_lea.vmem %s10, %s704
      %p706 = pneg %p303
      %p707 = pneg %p300
      %p708 = scmp.lt.s32.totalorder %s35, 1
      %s709 = scalar_select %p708, %s35, 1
      %s710 = scalar_lea.vmem %s11, %s709
      %p711 = pneg %p329
      %p712 = pneg %p326
      %p713 = scmp.lt.s32.totalorder %s35, 1
      %s714 = scalar_select %p713, %s35, 1
      %s715 = scalar_lea.vmem %s12, %s714
      %p716 = pneg %p355
      %p717 = pneg %p352
      %p718 = scmp.lt.s32.totalorder %s35, 1
      %s719 = scalar_select %p718, %s35, 1
      %s720 = smul.addr %s719, 4
      %s721 = smul.addr %s720, 4
      %s722 = scalar_lea.vmem %s13, %s721
      %p723 = pneg %p381
      %p724 = pneg %p378
      %p725 = scmp.lt.s32.totalorder %s35, 1
      %s726 = scalar_select %p725, %s35, 1
      %s727 = scalar_lea.vmem %s14, %s726
      %p728 = pneg %p407
      %p729 = pneg %p404
      %p730 = scmp.lt.s32.totalorder %s35, 1
      %s731 = scalar_select %p730, %s35, 1
      %s732 = smul.addr %s731, 8
      %s733 = smul.addr %s732, 4
      %s734 = scalar_lea.vmem %s15, %s733
      %p735 = pneg %p433
      %p736 = pneg %p430
      %p737 = scmp.lt.s32.totalorder %s35, 1
      %s738 = scalar_select %p737, %s35, 1
      %s739 = scalar_lea.vmem %s16, %s738
      %p740 = pneg %p459
      %p741 = pneg %p456
      %p742 = pneg %p480
      %p743 = pneg %p477
      %p744 = pneg %p501
      %p745 = pneg %p498
      %p746 = pneg %p527
      %p747 = pneg %p524
      %p748 = scmp.lt.s32.totalorder %s34, 1
      %s749 = scalar_select %p748, %s34, 1
      %s750 = smul.addr %s749, 8
      %s751 = scalar_lea.vmem %s19, %s750
      %p752 = scmp.lt.s32.totalorder %s34, 1
      %s753 = scalar_select %p752, %s34, 1
      %s754 = smul.addr %s753, 2
      %s755 = smul.addr %s754, 4
      %s756 = scalar_lea.vmem %s0, %s755
      %p757 = scmp.lt.s32.totalorder %s35, 1
      %s758 = scalar_select %p757, %s35, 1
      %s759 = scalar_lea.vmem %s5, %s758
      %p760 = scmp.lt.s32.totalorder %s35, 1
      %s761 = scalar_select %p760, %s35, 1
      %s762 = scalar_lea.vmem %s6, %s761
      %p763 = scmp.lt.s32.totalorder %s35, 1
      %s764 = scalar_select %p763, %s35, 1
      %s765 = smul.addr %s764, 4
      %s766 = smul.addr %s765, 4
      %s767 = scalar_lea.vmem %s7, %s766
      %p768 = scmp.lt.s32.totalorder %s35, 1
      %s769 = scalar_select %p768, %s35, 1
      %s770 = scalar_lea.vmem %s8, %s769
      %p771 = scmp.lt.s32.totalorder %s35, 1
      %s772 = scalar_select %p771, %s35, 1
      %s773 = smul.addr %s772, 4
      %s774 = smul.addr %s773, 4
      %s775 = scalar_lea.vmem %s9, %s774
      %p776 = scmp.lt.s32.totalorder %s35, 1
      %s777 = scalar_select %p776, %s35, 1
      %s778 = scalar_lea.vmem %s10, %s777
      %p779 = scmp.lt.s32.totalorder %s35, 1
      %s780 = scalar_select %p779, %s35, 1
      %s781 = scalar_lea.vmem %s11, %s780
      %p782 = scmp.lt.s32.totalorder %s35, 1
      %s783 = scalar_select %p782, %s35, 1
      %s784 = scalar_lea.vmem %s12, %s783
      %p785 = scmp.lt.s32.totalorder %s35, 1
      %s786 = scalar_select %p785, %s35, 1
      %s787 = smul.addr %s786, 4
      %s788 = smul.addr %s787, 4
      %s789 = scalar_lea.vmem %s13, %s788
      %p790 = scmp.lt.s32.totalorder %s35, 1
      %s791 = scalar_select %p790, %s35, 1
      %s792 = scalar_lea.vmem %s14, %s791
      %p793 = scmp.lt.s32.totalorder %s35, 1
      %s794 = scalar_select %p793, %s35, 1
      %s795 = smul.addr %s794, 8
      %s796 = smul.addr %s795, 4
      %s797 = scalar_lea.vmem %s15, %s796
      %p798 = scmp.lt.s32.totalorder %s35, 1
      %s799 = scalar_select %p798, %s35, 1
      %s800 = scalar_lea.vmem %s16, %s799
      %p801 = scmp.lt.s32.totalorder %s34, 1
      %s802 = scalar_select %p801, %s34, 1
      %s803 = smul.addr %s802, 8
      %s804 = scalar_lea.vmem %s19, %s803
      %p806 = scmp.eq.s32.totalorder %s35, 0
      // Predicated region
      $region97: #{vit_captioning_forward.2} parent=95 // pred_check
        %p807 = pneg %p806
      $region98: #{vit_captioning_forward.2} parent=95 // pred_check_branch
        %809 = sbr.rel (%p807) target = $region100
      $region99: #{vit_captioning_forward.2} parent=95 // pred_region
        %v810 = vld [vmem:[%s756] sm:$0xff]
        %v812 = vcombine.high %v810, %v810
        %v814 = vpack.c.bf16 %v810, %v810
        %v815 = vpack.c.bf16 %v812, %v812
        %v816 = vld [vmem:[%s1] sm:$0xf]
        %v817 = vld [vmem:[%s1 + $0x4] sm:$0xf]
        %v818 = vld [vmem:[%s1 + $0x8] sm:$0xf]
        %v819 = vld [vmem:[%s1 + $0xc] sm:$0xf]
        %v820 = vld [vmem:[%s1 + $0x10] sm:$0xf]
        %v821 = vld [vmem:[%s1 + $0x14] sm:$0xf]
        %v822 = vld [vmem:[%s1 + $0x18] sm:$0xf]
        %v823 = vld [vmem:[%s1 + $0x1c] sm:$0xf]
        %v824 = vld [vmem:[%s1 + $0x20] sm:$0xf]
        %v825 = vld [vmem:[%s1 + $0x24] sm:$0xf]
        %v826 = vld [vmem:[%s1 + $0x28] sm:$0xf]
        %v827 = vld [vmem:[%s1 + $0x2c] sm:$0xf]
        %v828 = vld [vmem:[%s1 + $0x30] sm:$0xf]
        %v829 = vld [vmem:[%s1 + $0x34] sm:$0xf]
        %v830 = vld [vmem:[%s1 + $0x38] sm:$0xf]
        %v831 = vld [vmem:[%s1 + $0x3c] sm:$0xf]
        %v832 = vld [vmem:[%s1 + $0x40] sm:$0xf]
        %v833 = vld [vmem:[%s1 + $0x44] sm:$0xf]
        %v834 = vld [vmem:[%s1 + $0x48] sm:$0xf]
        %v835 = vld [vmem:[%s1 + $0x4c] sm:$0xf]
        %v836 = vld [vmem:[%s1 + $0x50] sm:$0xf]
        %v837 = vld [vmem:[%s1 + $0x54] sm:$0xf]
        %v838 = vld [vmem:[%s1 + $0x58] sm:$0xf]
        %v839 = vld [vmem:[%s1 + $0x5c] sm:$0xf]
        %v840 = vld [vmem:[%s1 + $0x60] sm:$0xf]
        %v841 = vld [vmem:[%s1 + $0x64] sm:$0xf]
        %v842 = vld [vmem:[%s1 + $0x68] sm:$0xf]
        %v843 = vld [vmem:[%s1 + $0x6c] sm:$0xf]
        %v844 = vld [vmem:[%s1 + $0x70] sm:$0xf]
        %v845 = vld [vmem:[%s1 + $0x74] sm:$0xf]
        %v846 = vld [vmem:[%s1 + $0x78] sm:$0xf]
        %v847 = vld [vmem:[%s1 + $0x7c] sm:$0xf]
        %v848 = vld [vmem:[%s2] sm:$0x1]
        %v850 = vlaneseq
        %v851 = vshrl.u32 %v850, 7
        %v852 = vsub.s32 0, %v851
        %v853 = vrot.slane %v848, %v852
        %v887 = vunpack.c.l.b16 %v816
        %v888 = vunpack.c.l.b16 %v817
        %v889 = vunpack.c.l.b16 %v818
        %v890 = vunpack.c.l.b16 %v819
        %v891 = vunpack.c.l.b16 %v820
        %v892 = vunpack.c.l.b16 %v821
        %v893 = vunpack.c.l.b16 %v822
        %v894 = vunpack.c.l.b16 %v823
        %v895 = vunpack.c.l.b16 %v824
        %v896 = vunpack.c.l.b16 %v825
        %v897 = vunpack.c.l.b16 %v826
        %v898 = vunpack.c.l.b16 %v827
        %v899 = vunpack.c.l.b16 %v828
        %v900 = vunpack.c.l.b16 %v829
        %v901 = vunpack.c.l.b16 %v830
        %v902 = vunpack.c.l.b16 %v831
        %v903 = vunpack.c.l.b16 %v832
        %v904 = vunpack.c.l.b16 %v833
        %v905 = vunpack.c.l.b16 %v834
        %v906 = vunpack.c.l.b16 %v835
        %v907 = vunpack.c.l.b16 %v836
        %v908 = vunpack.c.l.b16 %v837
        %v909 = vunpack.c.l.b16 %v838
        %v910 = vunpack.c.l.b16 %v839
        %v911 = vunpack.c.l.b16 %v840
        %v912 = vunpack.c.l.b16 %v841
        %v913 = vunpack.c.l.b16 %v842
        %v914 = vunpack.c.l.b16 %v843
        %v915 = vunpack.c.l.b16 %v844
        %v916 = vunpack.c.l.b16 %v845
        %v917 = vunpack.c.l.b16 %v846
        %v918 = vunpack.c.l.b16 %v847
        %v919 = vpack.c.b16 %v888, %v887
        %v920 = vpack.c.b16 %v890, %v889
        %v921 = vpack.c.b16 %v892, %v891
        %v922 = vpack.c.b16 %v894, %v893
        %v923 = vpack.c.b16 %v896, %v895
        %v924 = vpack.c.b16 %v898, %v897
        %v925 = vpack.c.b16 %v900, %v899
        %v926 = vpack.c.b16 %v902, %v901
        %v927 = vpack.c.b16 %v904, %v903
        %v928 = vpack.c.b16 %v906, %v905
        %v929 = vpack.c.b16 %v908, %v907
        %v930 = vpack.c.b16 %v910, %v909
        %v931 = vpack.c.b16 %v912, %v911
        %v932 = vpack.c.b16 %v914, %v913
        %v933 = vpack.c.b16 %v916, %v915
        %v934 = vpack.c.b16 %v918, %v917
        %951 = vmatprep.subr.bf16.mxu0 0
        %952 = vmatpush1.bf16.msra.mxu0 %v926
        %953 = vmatprep.subr.bf16.mxu0 0
        %954 = vmatpush1.bf16.msra.mxu0 %v925
        %955 = vmatprep.subr.bf16.mxu0 0
        %956 = vmatpush1.bf16.msra.mxu0 %v924
        %957 = vmatprep.subr.bf16.mxu0 0
        %958 = vmatpush1.bf16.msra.mxu0 %v923
        %959 = vmatprep.subr.bf16.mxu0 0
        %960 = vmatpush1.bf16.msra.mxu0 %v922
        %961 = vmatprep.subr.bf16.mxu0 0
        %962 = vmatpush1.bf16.msra.mxu0 %v921
        %963 = vmatprep.subr.bf16.mxu0 0
        %964 = vmatpush1.bf16.msra.mxu0 %v920
        %965 = vmatprep.subr.bf16.mxu0 0
        %966 = vmatpush1.bf16.msra.mxu0 %v919
        %967 = vmatprep.subr.bf16.mxu0 0
        %968 = vmatpush2.bf16.msra.mxu0 %v934
        %969 = vmatprep.subr.bf16.mxu0 0
        %970 = vmatpush2.bf16.msra.mxu0 %v933
        %971 = vmatprep.subr.bf16.mxu0 0
        %972 = vmatpush2.bf16.msra.mxu0 %v932
        %973 = vmatprep.subr.bf16.mxu0 0
        %974 = vmatpush2.bf16.msra.mxu0 %v931
        %975 = vmatprep.subr.bf16.mxu0 0
        %976 = vmatpush2.bf16.msra.mxu0 %v930
        %977 = vmatprep.subr.bf16.mxu0 0
        %978 = vmatpush2.bf16.msra.mxu0 %v929
        %979 = vmatprep.subr.bf16.mxu0 0
        %980 = vmatpush2.bf16.msra.mxu0 %v928
        %981 = vmatprep.subr.bf16.mxu0 0
        %982 = vmatpush2.bf16.msra.mxu0 %v927
        %983 = vmatprep.mubr.bf16.mxu0 %v815
        %984 = vmatmul.mubr.bf16.gmra.mxu0 %v814
        %v985 = vpop.f32.mrf.mxu0
        %v986 = vadd.f32 %v853, %v985
        %v987 = vpop.f32.mrf.mxu0
        %v988 = vpop.f32.mrf.mxu0
        %v989 = vpop.f32.mrf.mxu0
        %990 = vdwg.mxu0
        %v991 = vld [vmem:[%s3] sm:$0x1]
        %v992 = vld [vmem:[%s4] sm:$0xf]
        %v993 = vadd.f32 %v986, %v992
        %v995 = vrot.slane %v993, 7
        %vm997 = vcmask 1040384
        %v998 = vsel %vm997, %v991, %v995
        %vm999 = vcmask 258048
        %1000 = vst.msk [vmem:[#allocation2] sm:$0x1f] %vm999, %v998
      $region100: #{vit_captioning_forward.2} parent=95 // pred_fallthru
        _
      %v1001 = vld [vmem:[#allocation2] sm:$0x1f]
      %v1002 = vld [vmem:[%s759] sm:$0x1]
      %v1003 = vld [vmem:[%s762] sm:$0x1]
      %vm1004 = vcmask 258048
      %v1005 = vsel %vm1004, %v1001, 0.0
      %1006 = vadd.xlane.f32.xlu0 %v1005
      %v1007 = vpop.xlane.xlu0 %1006
      %v1008 = vrcp.pop 32.0
      %v1009 = vmul.f32 %v1007, %v1008
      %v1010 = vsub.f32 %v1001, %v1009
      %v1011 = vmul.f32 %v1010, %v1010
      %v1012 = vsel %vm1004, %v1011, 0.0
      %1013 = vadd.xlane.f32.xlu0 %v1012
      %v1014 = vpop.xlane.xlu0 %1013
      %v1015 = vmul.f32 %v1014, %v1008
      %v1016 = vadd.f32 %v1015, 1e-12
      %v1017 = vrsqrt.pop %v1016
      %v1018 = vmul.f32 %v1010, %v1017
      %v1020 = vlaneseq
      %v1021 = vshrl.u32 %v1020, 7
      %v1022 = vsub.s32 0, %v1021
      %v1023 = vrot.slane %v1002, %v1022
      %v1025 = vmul.f32 %v1018, %v1023
      %v1027 = vlaneseq
      %v1028 = vshrl.u32 %v1027, 7
      %v1029 = vsub.s32 0, %v1028
      %v1030 = vrot.slane %v1003, %v1029
      %v1032 = vadd.f32 %v1025, %v1030
      %v1033 = vld [vmem:[%s767] sm:$0xf]
      %v1034 = vld [vmem:[%s767 + $0x4] sm:$0xf]
      %v1035 = vld [vmem:[%s767 + $0x8] sm:$0xf]
      %v1036 = vld [vmem:[%s767 + $0xc] sm:$0xf]
      %v1037 = vld [vmem:[%s770] sm:$0x1]
      %v1038 = vld [vmem:[%s775] sm:$0xf]
      %v1039 = vld [vmem:[%s775 + $0x4] sm:$0xf]
      %v1040 = vld [vmem:[%s775 + $0x8] sm:$0xf]
      %v1041 = vld [vmem:[%s775 + $0xc] sm:$0xf]
      %v1042 = vld [vmem:[%s778] sm:$0x1]
      %v1043 = vpack.c.bf16 %v1032, %v1032
      %v1045 = vlaneseq
      %v1046 = vshrl.u32 %v1045, 7
      %v1047 = vsub.s32 0, %v1046
      %v1048 = vrot.slane %v1037, %v1047
      %v1054 = vunpack.c.l.b16 %v1033
      %v1055 = vunpack.c.l.b16 %v1034
      %v1056 = vunpack.c.l.b16 %v1035
      %v1057 = vunpack.c.l.b16 %v1036
      %v1058 = vpack.c.b16 %v1055, %v1054
      %v1059 = vpack.c.b16 %v1057, %v1056
      %vm1062 = vcmask 261120
      %v1064 = vsel %vm1062, %v1043, 0
      %1066 = vmatprep.subr.bf16.mxu0 0
      %1067 = vmatpush1.bf16.msra.mxu0 0
      %1068 = vmatprep.subr.bf16.mxu0 0
      %1069 = vmatpush1.bf16.msra.mxu0 0
      %1070 = vmatprep.subr.bf16.mxu0 0
      %1071 = vmatpush1.bf16.msra.mxu0 0
      %1072 = vmatprep.subr.bf16.mxu0 0
      %1073 = vmatpush1.bf16.msra.mxu0 0
      %1074 = vmatprep.subr.bf16.mxu0 0
      %1075 = vmatpush1.bf16.msra.mxu0 0
      %1076 = vmatprep.subr.bf16.mxu0 0
      %1077 = vmatpush1.bf16.msra.mxu0 0
      %1078 = vmatprep.subr.bf16.mxu0 0
      %1079 = vmatpush1.bf16.msra.mxu0 %v1059
      %1080 = vmatprep.subr.bf16.mxu0 0
      %1081 = vmatpush1.bf16.msra.mxu0 %v1058
      %1082 = vmatprep.subr.bf16.mxu0 0
      %1083 = vmatpush2.bf16.msra.mxu0 0
      %1084 = vmatprep.subr.bf16.mxu0 0
      %1085 = vmatpush2.bf16.msra.mxu0 0
      %1086 = vmatprep.subr.bf16.mxu0 0
      %1087 = vmatpush2.bf16.msra.mxu0 0
      %1088 = vmatprep.subr.bf16.mxu0 0
      %1089 = vmatpush2.bf16.msra.mxu0 0
      %1090 = vmatprep.subr.bf16.mxu0 0
      %1091 = vmatpush2.bf16.msra.mxu0 0
      %1092 = vmatprep.subr.bf16.mxu0 0
      %1093 = vmatpush2.bf16.msra.mxu0 0
      %1094 = vmatprep.subr.bf16.mxu0 0
      %1095 = vmatpush2.bf16.msra.mxu0 0
      %1096 = vmatprep.subr.bf16.mxu0 0
      %1097 = vmatpush2.bf16.msra.mxu0 0
      %1098 = vmatprep.mubr.bf16.mxu0 0
      %1099 = vmatmul.mubr.bf16.gmra.mxu0 %v1064
      %v1100 = vpop.f32.mrf.mxu0
      %v1101 = vadd.f32 %v1048, %v1100
      %v1102 = vpop.f32.mrf.mxu0
      %v1103 = vpop.f32.mrf.mxu0
      %v1104 = vpop.f32.mrf.mxu0
      %1105 = vdwg.mxu0
      %v1106 = vmul.f32 %v1101, 0.35355338
      %v1107 = vpack.c.bf16 %v1106, %v1106
      %v1108 = vpack.c.bf16 %v1101, %v1101
      %1110 = vrot.lane.b32.xlu0 %v1108, 96
      %v1111 = vpop.permute.xlu0 %1110
      %vm1112 = vcmask 64512
      %v1114 = vsel %vm1112, %v1107, 0
      %v1117 = vsel %vm1112, %v1111, 0
      %1119 = vmatprep.subr.bf16.mxu0 0
      %1120 = vmatpush1.bf16.xpose.msra.mxu0 0
      %1121 = vmatprep.subr.bf16.mxu0 0
      %1122 = vmatpush1.bf16.xpose.msra.mxu0 0
      %1123 = vmatprep.subr.bf16.mxu0 0
      %1124 = vmatpush1.bf16.xpose.msra.mxu0 0
      %1125 = vmatprep.subr.bf16.mxu0 0
      %1126 = vmatpush1.bf16.xpose.msra.mxu0 0
      %1127 = vmatprep.subr.bf16.mxu0 0
      %1128 = vmatpush1.bf16.xpose.msra.mxu0 0
      %1129 = vmatprep.subr.bf16.mxu0 0
      %1130 = vmatpush1.bf16.xpose.msra.mxu0 0
      %1131 = vmatprep.subr.bf16.mxu0 0
      %1132 = vmatpush1.bf16.xpose.msra.mxu0 0
      %1133 = vmatprep.subr.bf16.mxu0 0
      %1134 = vmatpush1.bf16.xpose.msra.mxu0 %v1117
      %1135 = vmatprep.subr.bf16.mxu0 0
      %1136 = vmatpush2.bf16.xpose.msra.mxu0 0
      %1137 = vmatprep.subr.bf16.mxu0 0
      %1138 = vmatpush2.bf16.xpose.msra.mxu0 0
      %1139 = vmatprep.subr.bf16.mxu0 0
      %1140 = vmatpush2.bf16.xpose.msra.mxu0 0
      %1141 = vmatprep.subr.bf16.mxu0 0
      %1142 = vmatpush2.bf16.xpose.msra.mxu0 0
      %1143 = vmatprep.subr.bf16.mxu0 0
      %1144 = vmatpush2.bf16.xpose.msra.mxu0 0
      %1145 = vmatprep.subr.bf16.mxu0 0
      %1146 = vmatpush2.bf16.xpose.msra.mxu0 0
      %1147 = vmatprep.subr.bf16.mxu0 0
      %1148 = vmatpush2.bf16.xpose.msra.mxu0 0
      %1149 = vmatprep.subr.bf16.mxu0 0
      %1150 = vmatpush2.bf16.xpose.msra.mxu0 0
      %1151 = vmatprep.mubr.bf16.mxu0 0
      %1152 = vmatmul.mubr.bf16.gmra.mxu0 %v1114
      %v1153 = vpop.f32.mrf.mxu0
      %v1154 = vadd.f32 0.0, %v1153
      %v1155 = vpop.f32.mrf.mxu0
      %v1156 = vpop.f32.mrf.mxu0
      %v1157 = vpop.f32.mrf.mxu0
      %1158 = vdwg.mxu0
      %vm1159 = vcmask 36864
      %v1160 = vsel %vm1159, %v1154, -inf
      %1161 = vmax.xlane.f32.xlu0 %v1160
      %v1162 = vpop.xlane.xlu0 %1161
      %v1163 = vsub.f32 %v1154, %v1162
      %v1164 = vmul.f32 %v1163, 1.442695
      %v1165 = vpow.pop %v1164
      %v1166 = vsel %vm1159, %v1165, 0.0
      %1167 = vadd.xlane.f32.xlu0 %v1166
      %v1168 = vpop.xlane.xlu0 %1167
      %v1169 = vrcp.pop %v1168
      %v1170 = vmul.f32 %v1165, %v1169
      %v1171 = vpack.c.bf16 %v1170, %v1170
      %1172 = vrot.lane.b32.xlu0 %v1108, 64
      %v1173 = vpop.permute.xlu0 %1172
      %vm1174 = vcmask 39936
      %v1176 = vsel %vm1174, %v1171, 0
      %vm1178 = vcmask 1041408
      %vm1179 = vcmask 1042432
      %v1180 = vsel %vm1178, 4294967295, 65535
      %v1181 = vsel %vm1179, %v1180, 0
      %v1183 = vand.u32 %v1173, %v1181
      %1185 = vmatprep.subr.bf16.mxu0 0
      %1186 = vmatpush1.bf16.msra.mxu0 0
      %1187 = vmatprep.subr.bf16.mxu0 0
      %1188 = vmatpush1.bf16.msra.mxu0 0
      %1189 = vmatprep.subr.bf16.mxu0 0
      %1190 = vmatpush1.bf16.msra.mxu0 0
      %1191 = vmatprep.subr.bf16.mxu0 0
      %1192 = vmatpush1.bf16.msra.mxu0 0
      %1193 = vmatprep.subr.bf16.mxu0 0
      %1194 = vmatpush1.bf16.msra.mxu0 0
      %1195 = vmatprep.subr.bf16.mxu0 0
      %1196 = vmatpush1.bf16.msra.mxu0 0
      %1197 = vmatprep.subr.bf16.mxu0 0
      %1198 = vmatpush1.bf16.msra.mxu0 0
      %1199 = vmatprep.subr.bf16.mxu0 0
      %1200 = vmatpush1.bf16.msra.mxu0 %v1183
      %1201 = vmatprep.subr.bf16.mxu0 0
      %1202 = vmatpush2.bf16.msra.mxu0 0
      %1203 = vmatprep.subr.bf16.mxu0 0
      %1204 = vmatpush2.bf16.msra.mxu0 0
      %1205 = vmatprep.subr.bf16.mxu0 0
      %1206 = vmatpush2.bf16.msra.mxu0 0
      %1207 = vmatprep.subr.bf16.mxu0 0
      %1208 = vmatpush2.bf16.msra.mxu0 0
      %1209 = vmatprep.subr.bf16.mxu0 0
      %1210 = vmatpush2.bf16.msra.mxu0 0
      %1211 = vmatprep.subr.bf16.mxu0 0
      %1212 = vmatpush2.bf16.msra.mxu0 0
      %1213 = vmatprep.subr.bf16.mxu0 0
      %1214 = vmatpush2.bf16.msra.mxu0 0
      %1215 = vmatprep.subr.bf16.mxu0 0
      %1216 = vmatpush2.bf16.msra.mxu0 0
      %1217 = vmatprep.mubr.bf16.mxu0 0
      %1218 = vmatmul.mubr.bf16.gmra.mxu0 %v1176
      %v1219 = vpop.f32.mrf.mxu0
      %v1220 = vadd.f32 0.0, %v1219
      %v1221 = vpop.f32.mrf.mxu0
      %v1222 = vpop.f32.mrf.mxu0
      %v1223 = vpop.f32.mrf.mxu0
      %1224 = vdwg.mxu0
      %1226 = vrot.lane.b32.xlu0 %v1107, 120
      %v1227 = vpop.permute.xlu0 %1226
      %1228 = vrot.lane.b32.xlu0 %v1108, 88
      %v1229 = vpop.permute.xlu0 %1228
      %v1231 = vsel %vm1112, %v1227, 0
      %v1234 = vsel %vm1112, %v1229, 0
      %1236 = vmatprep.subr.bf16.mxu0 0
      %1237 = vmatpush1.bf16.xpose.msra.mxu0 0
      %1238 = vmatprep.subr.bf16.mxu0 0
      %1239 = vmatpush1.bf16.xpose.msra.mxu0 0
      %1240 = vmatprep.subr.bf16.mxu0 0
      %1241 = vmatpush1.bf16.xpose.msra.mxu0 0
      %1242 = vmatprep.subr.bf16.mxu0 0
      %1243 = vmatpush1.bf16.xpose.msra.mxu0 0
      %1244 = vmatprep.subr.bf16.mxu0 0
      %1245 = vmatpush1.bf16.xpose.msra.mxu0 0
      %1246 = vmatprep.subr.bf16.mxu0 0
      %1247 = vmatpush1.bf16.xpose.msra.mxu0 0
      %1248 = vmatprep.subr.bf16.mxu0 0
      %1249 = vmatpush1.bf16.xpose.msra.mxu0 0
      %1250 = vmatprep.subr.bf16.mxu0 0
      %1251 = vmatpush1.bf16.xpose.msra.mxu0 %v1234
      %1252 = vmatprep.subr.bf16.mxu0 0
      %1253 = vmatpush2.bf16.xpose.msra.mxu0 0
      %1254 = vmatprep.subr.bf16.mxu0 0
      %1255 = vmatpush2.bf16.xpose.msra.mxu0 0
      %1256 = vmatprep.subr.bf16.mxu0 0
      %1257 = vmatpush2.bf16.xpose.msra.mxu0 0
      %1258 = vmatprep.subr.bf16.mxu0 0
      %1259 = vmatpush2.bf16.xpose.msra.mxu0 0
      %1260 = vmatprep.subr.bf16.mxu0 0
      %1261 = vmatpush2.bf16.xpose.msra.mxu0 0
      %1262 = vmatprep.subr.bf16.mxu0 0
      %1263 = vmatpush2.bf16.xpose.msra.mxu0 0
      %1264 = vmatprep.subr.bf16.mxu0 0
      %1265 = vmatpush2.bf16.xpose.msra.mxu0 0
      %1266 = vmatprep.subr.bf16.mxu0 0
      %1267 = vmatpush2.bf16.xpose.msra.mxu0 0
      %1268 = vmatprep.mubr.bf16.mxu0 0
      %1269 = vmatmul.mubr.bf16.gmra.mxu0 %v1231
      %v1270 = vpop.f32.mrf.mxu0
      %v1271 = vadd.f32 0.0, %v1270
      %v1272 = vpop.f32.mrf.mxu0
      %v1273 = vpop.f32.mrf.mxu0
      %v1274 = vpop.f32.mrf.mxu0
      %1275 = vdwg.mxu0
      %v1276 = vsel %vm1159, %v1271, -inf
      %1277 = vmax.xlane.f32.xlu0 %v1276
      %v1278 = vpop.xlane.xlu0 %1277
      %v1279 = vsub.f32 %v1271, %v1278
      %v1280 = vmul.f32 %v1279, 1.442695
      %v1281 = vpow.pop %v1280
      %v1282 = vsel %vm1159, %v1281, 0.0
      %1283 = vadd.xlane.f32.xlu0 %v1282
      %v1284 = vpop.xlane.xlu0 %1283
      %v1285 = vrcp.pop %v1284
      %v1286 = vmul.f32 %v1281, %v1285
      %v1287 = vpack.c.bf16 %v1286, %v1286
      %1288 = vrot.lane.b32.xlu0 %v1108, 56
      %v1289 = vpop.permute.xlu0 %1288
      %v1291 = vsel %vm1174, %v1287, 0
      %v1294 = vand.u32 %v1289, %v1181
      %1296 = vmatprep.subr.bf16.mxu0 0
      %1297 = vmatpush1.bf16.msra.mxu0 0
      %1298 = vmatprep.subr.bf16.mxu0 0
      %1299 = vmatpush1.bf16.msra.mxu0 0
      %1300 = vmatprep.subr.bf16.mxu0 0
      %1301 = vmatpush1.bf16.msra.mxu0 0
      %1302 = vmatprep.subr.bf16.mxu0 0
      %1303 = vmatpush1.bf16.msra.mxu0 0
      %1304 = vmatprep.subr.bf16.mxu0 0
      %1305 = vmatpush1.bf16.msra.mxu0 0
      %1306 = vmatprep.subr.bf16.mxu0 0
      %1307 = vmatpush1.bf16.msra.mxu0 0
      %1308 = vmatprep.subr.bf16.mxu0 0
      %1309 = vmatpush1.bf16.msra.mxu0 0
      %1310 = vmatprep.subr.bf16.mxu0 0
      %1311 = vmatpush1.bf16.msra.mxu0 %v1294
      %1312 = vmatprep.subr.bf16.mxu0 0
      %1313 = vmatpush2.bf16.msra.mxu0 0
      %1314 = vmatprep.subr.bf16.mxu0 0
      %1315 = vmatpush2.bf16.msra.mxu0 0
      %1316 = vmatprep.subr.bf16.mxu0 0
      %1317 = vmatpush2.bf16.msra.mxu0 0
      %1318 = vmatprep.subr.bf16.mxu0 0
      %1319 = vmatpush2.bf16.msra.mxu0 0
      %1320 = vmatprep.subr.bf16.mxu0 0
      %1321 = vmatpush2.bf16.msra.mxu0 0
      %1322 = vmatprep.subr.bf16.mxu0 0
      %1323 = vmatpush2.bf16.msra.mxu0 0
      %1324 = vmatprep.subr.bf16.mxu0 0
      %1325 = vmatpush2.bf16.msra.mxu0 0
      %1326 = vmatprep.subr.bf16.mxu0 0
      %1327 = vmatpush2.bf16.msra.mxu0 0
      %1328 = vmatprep.mubr.bf16.mxu0 0
      %1329 = vmatmul.mubr.bf16.gmra.mxu0 %v1291
      %v1330 = vpop.f32.mrf.mxu0
      %v1331 = vadd.f32 0.0, %v1330
      %v1332 = vpop.f32.mrf.mxu0
      %v1333 = vpop.f32.mrf.mxu0
      %v1334 = vpop.f32.mrf.mxu0
      %1335 = vdwg.mxu0
      %1336 = vrot.lane.b32.xlu0 %v1107, 112
      %v1337 = vpop.permute.xlu0 %1336
      %1338 = vrot.lane.b32.xlu0 %v1108, 80
      %v1339 = vpop.permute.xlu0 %1338
      %v1341 = vsel %vm1112, %v1337, 0
      %v1344 = vsel %vm1112, %v1339, 0
      %1346 = vmatprep.subr.bf16.mxu0 0
      %1347 = vmatpush1.bf16.xpose.msra.mxu0 0
      %1348 = vmatprep.subr.bf16.mxu0 0
      %1349 = vmatpush1.bf16.xpose.msra.mxu0 0
      %1350 = vmatprep.subr.bf16.mxu0 0
      %1351 = vmatpush1.bf16.xpose.msra.mxu0 0
      %1352 = vmatprep.subr.bf16.mxu0 0
      %1353 = vmatpush1.bf16.xpose.msra.mxu0 0
      %1354 = vmatprep.subr.bf16.mxu0 0
      %1355 = vmatpush1.bf16.xpose.msra.mxu0 0
      %1356 = vmatprep.subr.bf16.mxu0 0
      %1357 = vmatpush1.bf16.xpose.msra.mxu0 0
      %1358 = vmatprep.subr.bf16.mxu0 0
      %1359 = vmatpush1.bf16.xpose.msra.mxu0 0
      %1360 = vmatprep.subr.bf16.mxu0 0
      %1361 = vmatpush1.bf16.xpose.msra.mxu0 %v1344
      %1362 = vmatprep.subr.bf16.mxu0 0
      %1363 = vmatpush2.bf16.xpose.msra.mxu0 0
      %1364 = vmatprep.subr.bf16.mxu0 0
      %1365 = vmatpush2.bf16.xpose.msra.mxu0 0
      %1366 = vmatprep.subr.bf16.mxu0 0
      %1367 = vmatpush2.bf16.xpose.msra.mxu0 0
      %1368 = vmatprep.subr.bf16.mxu0 0
      %1369 = vmatpush2.bf16.xpose.msra.mxu0 0
      %1370 = vmatprep.subr.bf16.mxu0 0
      %1371 = vmatpush2.bf16.xpose.msra.mxu0 0
      %1372 = vmatprep.subr.bf16.mxu0 0
      %1373 = vmatpush2.bf16.xpose.msra.mxu0 0
      %1374 = vmatprep.subr.bf16.mxu0 0
      %1375 = vmatpush2.bf16.xpose.msra.mxu0 0
      %1376 = vmatprep.subr.bf16.mxu0 0
      %1377 = vmatpush2.bf16.xpose.msra.mxu0 0
      %1378 = vmatprep.mubr.bf16.mxu0 0
      %1379 = vmatmul.mubr.bf16.gmra.mxu0 %v1341
      %v1380 = vpop.f32.mrf.mxu0
      %v1381 = vadd.f32 0.0, %v1380
      %v1382 = vpop.f32.mrf.mxu0
      %v1383 = vpop.f32.mrf.mxu0
      %v1384 = vpop.f32.mrf.mxu0
      %1385 = vdwg.mxu0
      %v1386 = vsel %vm1159, %v1381, -inf
      %1387 = vmax.xlane.f32.xlu0 %v1386
      %v1388 = vpop.xlane.xlu0 %1387
      %v1389 = vsub.f32 %v1381, %v1388
      %v1390 = vmul.f32 %v1389, 1.442695
      %v1391 = vpow.pop %v1390
      %v1392 = vsel %vm1159, %v1391, 0.0
      %1393 = vadd.xlane.f32.xlu0 %v1392
      %v1394 = vpop.xlane.xlu0 %1393
      %v1395 = vrcp.pop %v1394
      %v1396 = vmul.f32 %v1391, %v1395
      %v1397 = vpack.c.bf16 %v1396, %v1396
      %1398 = vrot.lane.b32.xlu0 %v1108, 48
      %v1399 = vpop.permute.xlu0 %1398
      %v1401 = vsel %vm1174, %v1397, 0
      %v1404 = vand.u32 %v1399, %v1181
      %1406 = vmatprep.subr.bf16.mxu0 0
      %1407 = vmatpush1.bf16.msra.mxu0 0
      %1408 = vmatprep.subr.bf16.mxu0 0
      %1409 = vmatpush1.bf16.msra.mxu0 0
      %1410 = vmatprep.subr.bf16.mxu0 0
      %1411 = vmatpush1.bf16.msra.mxu0 0
      %1412 = vmatprep.subr.bf16.mxu0 0
      %1413 = vmatpush1.bf16.msra.mxu0 0
      %1414 = vmatprep.subr.bf16.mxu0 0
      %1415 = vmatpush1.bf16.msra.mxu0 0
      %1416 = vmatprep.subr.bf16.mxu0 0
      %1417 = vmatpush1.bf16.msra.mxu0 0
      %1418 = vmatprep.subr.bf16.mxu0 0
      %1419 = vmatpush1.bf16.msra.mxu0 0
      %1420 = vmatprep.subr.bf16.mxu0 0
      %1421 = vmatpush1.bf16.msra.mxu0 %v1404
      %1422 = vmatprep.subr.bf16.mxu0 0
      %1423 = vmatpush2.bf16.msra.mxu0 0
      %1424 = vmatprep.subr.bf16.mxu0 0
      %1425 = vmatpush2.bf16.msra.mxu0 0
      %1426 = vmatprep.subr.bf16.mxu0 0
      %1427 = vmatpush2.bf16.msra.mxu0 0
      %1428 = vmatprep.subr.bf16.mxu0 0
      %1429 = vmatpush2.bf16.msra.mxu0 0
      %1430 = vmatprep.subr.bf16.mxu0 0
      %1431 = vmatpush2.bf16.msra.mxu0 0
      %1432 = vmatprep.subr.bf16.mxu0 0
      %1433 = vmatpush2.bf16.msra.mxu0 0
      %1434 = vmatprep.subr.bf16.mxu0 0
      %1435 = vmatpush2.bf16.msra.mxu0 0
      %1436 = vmatprep.subr.bf16.mxu0 0
      %1437 = vmatpush2.bf16.msra.mxu0 0
      %1438 = vmatprep.mubr.bf16.mxu0 0
      %1439 = vmatmul.mubr.bf16.gmra.mxu0 %v1401
      %v1440 = vpop.f32.mrf.mxu0
      %v1441 = vadd.f32 0.0, %v1440
      %v1442 = vpop.f32.mrf.mxu0
      %v1443 = vpop.f32.mrf.mxu0
      %v1444 = vpop.f32.mrf.mxu0
      %1445 = vdwg.mxu0
      %1446 = vrot.lane.b32.xlu0 %v1107, 104
      %v1447 = vpop.permute.xlu0 %1446
      %1448 = vrot.lane.b32.xlu0 %v1108, 72
      %v1449 = vpop.permute.xlu0 %1448
      %v1451 = vsel %vm1112, %v1447, 0
      %v1454 = vsel %vm1112, %v1449, 0
      %1456 = vmatprep.subr.bf16.mxu0 0
      %1457 = vmatpush1.bf16.xpose.msra.mxu0 0
      %1458 = vmatprep.subr.bf16.mxu0 0
      %1459 = vmatpush1.bf16.xpose.msra.mxu0 0
      %1460 = vmatprep.subr.bf16.mxu0 0
      %1461 = vmatpush1.bf16.xpose.msra.mxu0 0
      %1462 = vmatprep.subr.bf16.mxu0 0
      %1463 = vmatpush1.bf16.xpose.msra.mxu0 0
      %1464 = vmatprep.subr.bf16.mxu0 0
      %1465 = vmatpush1.bf16.xpose.msra.mxu0 0
      %1466 = vmatprep.subr.bf16.mxu0 0
      %1467 = vmatpush1.bf16.xpose.msra.mxu0 0
      %1468 = vmatprep.subr.bf16.mxu0 0
      %1469 = vmatpush1.bf16.xpose.msra.mxu0 0
      %1470 = vmatprep.subr.bf16.mxu0 0
      %1471 = vmatpush1.bf16.xpose.msra.mxu0 %v1454
      %1472 = vmatprep.subr.bf16.mxu0 0
      %1473 = vmatpush2.bf16.xpose.msra.mxu0 0
      %1474 = vmatprep.subr.bf16.mxu0 0
      %1475 = vmatpush2.bf16.xpose.msra.mxu0 0
      %1476 = vmatprep.subr.bf16.mxu0 0
      %1477 = vmatpush2.bf16.xpose.msra.mxu0 0
      %1478 = vmatprep.subr.bf16.mxu0 0
      %1479 = vmatpush2.bf16.xpose.msra.mxu0 0
      %1480 = vmatprep.subr.bf16.mxu0 0
      %1481 = vmatpush2.bf16.xpose.msra.mxu0 0
      %1482 = vmatprep.subr.bf16.mxu0 0
      %1483 = vmatpush2.bf16.xpose.msra.mxu0 0
      %1484 = vmatprep.subr.bf16.mxu0 0
      %1485 = vmatpush2.bf16.xpose.msra.mxu0 0
      %1486 = vmatprep.subr.bf16.mxu0 0
      %1487 = vmatpush2.bf16.xpose.msra.mxu0 0
      %1488 = vmatprep.mubr.bf16.mxu0 0
      %1489 = vmatmul.mubr.bf16.gmra.mxu0 %v1451
      %v1490 = vpop.f32.mrf.mxu0
      %v1491 = vadd.f32 0.0, %v1490
      %v1492 = vpop.f32.mrf.mxu0
      %v1493 = vpop.f32.mrf.mxu0
      %v1494 = vpop.f32.mrf.mxu0
      %1495 = vdwg.mxu0
      %v1496 = vsel %vm1159, %v1491, -inf
      %1497 = vmax.xlane.f32.xlu0 %v1496
      %v1498 = vpop.xlane.xlu0 %1497
      %v1499 = vsub.f32 %v1491, %v1498
      %v1500 = vmul.f32 %v1499, 1.442695
      %v1501 = vpow.pop %v1500
      %v1502 = vsel %vm1159, %v1501, 0.0
      %1503 = vadd.xlane.f32.xlu0 %v1502
      %v1504 = vpop.xlane.xlu0 %1503
      %v1505 = vrcp.pop %v1504
      %v1506 = vmul.f32 %v1501, %v1505
      %v1507 = vpack.c.bf16 %v1506, %v1506
      %1508 = vrot.lane.b32.xlu0 %v1108, 40
      %v1509 = vpop.permute.xlu0 %1508
      %v1511 = vsel %vm1174, %v1507, 0
      %v1514 = vand.u32 %v1509, %v1181
      %1516 = vmatprep.subr.bf16.mxu0 0
      %1517 = vmatpush1.bf16.msra.mxu0 0
      %1518 = vmatprep.subr.bf16.mxu0 0
      %1519 = vmatpush1.bf16.msra.mxu0 0
      %1520 = vmatprep.subr.bf16.mxu0 0
      %1521 = vmatpush1.bf16.msra.mxu0 0
      %1522 = vmatprep.subr.bf16.mxu0 0
      %1523 = vmatpush1.bf16.msra.mxu0 0
      %1524 = vmatprep.subr.bf16.mxu0 0
      %1525 = vmatpush1.bf16.msra.mxu0 0
      %1526 = vmatprep.subr.bf16.mxu0 0
      %1527 = vmatpush1.bf16.msra.mxu0 0
      %1528 = vmatprep.subr.bf16.mxu0 0
      %1529 = vmatpush1.bf16.msra.mxu0 0
      %1530 = vmatprep.subr.bf16.mxu0 0
      %1531 = vmatpush1.bf16.msra.mxu0 %v1514
      %1532 = vmatprep.subr.bf16.mxu0 0
      %1533 = vmatpush2.bf16.msra.mxu0 0
      %1534 = vmatprep.subr.bf16.mxu0 0
      %1535 = vmatpush2.bf16.msra.mxu0 0
      %1536 = vmatprep.subr.bf16.mxu0 0
      %1537 = vmatpush2.bf16.msra.mxu0 0
      %1538 = vmatprep.subr.bf16.mxu0 0
      %1539 = vmatpush2.bf16.msra.mxu0 0
      %1540 = vmatprep.subr.bf16.mxu0 0
      %1541 = vmatpush2.bf16.msra.mxu0 0
      %1542 = vmatprep.subr.bf16.mxu0 0
      %1543 = vmatpush2.bf16.msra.mxu0 0
      %1544 = vmatprep.subr.bf16.mxu0 0
      %1545 = vmatpush2.bf16.msra.mxu0 0
      %1546 = vmatprep.subr.bf16.mxu0 0
      %1547 = vmatpush2.bf16.msra.mxu0 0
      %1548 = vmatprep.mubr.bf16.mxu0 0
      %1549 = vmatmul.mubr.bf16.gmra.mxu0 %v1511
      %v1550 = vpop.f32.mrf.mxu0
      %v1551 = vadd.f32 0.0, %v1550
      %v1552 = vpop.f32.mrf.mxu0
      %v1553 = vpop.f32.mrf.mxu0
      %v1554 = vpop.f32.mrf.mxu0
      %1555 = vdwg.mxu0
      %1557 = vrot.lane.b32.xlu0 %v1331, 8
      %v1558 = vpop.permute.xlu0 %1557
      %1561 = vrot.lane.b32.xlu0 %v1441, 16
      %v1562 = vpop.permute.xlu0 %1561
      %1565 = vrot.lane.b32.xlu0 %v1551, 24
      %v1566 = vpop.permute.xlu0 %1565
      %v1568 = vsel %vm1112, %v1220, %v1558
      %vm1569 = vcmask 130048
      %v1570 = vsel %vm1569, %v1568, %v1562
      %vm1571 = vcmask 195584
      %v1572 = vsel %vm1571, %v1570, %v1566
      %v1573 = vpack.c.bf16 %v1572, %v1572
      %v1575 = vlaneseq
      %v1576 = vshrl.u32 %v1575, 7
      %v1577 = vsub.s32 0, %v1576
      %v1578 = vrot.slane %v1042, %v1577
      %v1584 = vunpack.c.l.b16 %v1038
      %v1585 = vunpack.c.l.b16 %v1039
      %v1586 = vunpack.c.l.b16 %v1040
      %v1587 = vunpack.c.l.b16 %v1041
      %v1588 = vpack.c.b16 %v1585, %v1584
      %v1589 = vpack.c.b16 %v1587, %v1586
      %v1593 = vsel %vm1062, %v1573, 0
      %1595 = vmatprep.subr.bf16.mxu0 0
      %1596 = vmatpush1.bf16.msra.mxu0 0
      %1597 = vmatprep.subr.bf16.mxu0 0
      %1598 = vmatpush1.bf16.msra.mxu0 0
      %1599 = vmatprep.subr.bf16.mxu0 0
      %1600 = vmatpush1.bf16.msra.mxu0 0
      %1601 = vmatprep.subr.bf16.mxu0 0
      %1602 = vmatpush1.bf16.msra.mxu0 0
      %1603 = vmatprep.subr.bf16.mxu0 0
      %1604 = vmatpush1.bf16.msra.mxu0 0
      %1605 = vmatprep.subr.bf16.mxu0 0
      %1606 = vmatpush1.bf16.msra.mxu0 0
      %1607 = vmatprep.subr.bf16.mxu0 0
      %1608 = vmatpush1.bf16.msra.mxu0 %v1589
      %1609 = vmatprep.subr.bf16.mxu0 0
      %1610 = vmatpush1.bf16.msra.mxu0 %v1588
      %1611 = vmatprep.subr.bf16.mxu0 0
      %1612 = vmatpush2.bf16.msra.mxu0 0
      %1613 = vmatprep.subr.bf16.mxu0 0
      %1614 = vmatpush2.bf16.msra.mxu0 0
      %1615 = vmatprep.subr.bf16.mxu0 0
      %1616 = vmatpush2.bf16.msra.mxu0 0
      %1617 = vmatprep.subr.bf16.mxu0 0
      %1618 = vmatpush2.bf16.msra.mxu0 0
      %1619 = vmatprep.subr.bf16.mxu0 0
      %1620 = vmatpush2.bf16.msra.mxu0 0
      %1621 = vmatprep.subr.bf16.mxu0 0
      %1622 = vmatpush2.bf16.msra.mxu0 0
      %1623 = vmatprep.subr.bf16.mxu0 0
      %1624 = vmatpush2.bf16.msra.mxu0 0
      %1625 = vmatprep.subr.bf16.mxu0 0
      %1626 = vmatpush2.bf16.msra.mxu0 0
      %1627 = vmatprep.mubr.bf16.mxu0 0
      %1628 = vmatmul.mubr.bf16.gmra.mxu0 %v1593
      %v1629 = vpop.f32.mrf.mxu0
      %v1630 = vadd.f32 %v1578, %v1629
      %v1631 = vpop.f32.mrf.mxu0
      %v1632 = vpop.f32.mrf.mxu0
      %v1633 = vpop.f32.mrf.mxu0
      %1634 = vdwg.mxu0
      %v1635 = vadd.f32 %v1001, %v1630
      %v1636 = vld [vmem:[%s781] sm:$0x1]
      %v1637 = vld [vmem:[%s784] sm:$0x1]
      %v1638 = vsel %vm1004, %v1635, 0.0
      %1639 = vadd.xlane.f32.xlu0 %v1638
      %v1640 = vpop.xlane.xlu0 %1639
      %v1641 = vmul.f32 %v1640, %v1008
      %v1642 = vsub.f32 %v1635, %v1641
      %v1643 = vmul.f32 %v1642, %v1642
      %v1644 = vsel %vm1004, %v1643, 0.0
      %1645 = vadd.xlane.f32.xlu0 %v1644
      %v1646 = vpop.xlane.xlu0 %1645
      %v1647 = vmul.f32 %v1646, %v1008
      %v1648 = vadd.f32 %v1647, 1e-12
      %v1649 = vrsqrt.pop %v1648
      %v1650 = vmul.f32 %v1642, %v1649
      %v1652 = vlaneseq
      %v1653 = vshrl.u32 %v1652, 7
      %v1654 = vsub.s32 0, %v1653
      %v1655 = vrot.slane %v1636, %v1654
      %v1657 = vmul.f32 %v1650, %v1655
      %v1659 = vlaneseq
      %v1660 = vshrl.u32 %v1659, 7
      %v1661 = vsub.s32 0, %v1660
      %v1662 = vrot.slane %v1637, %v1661
      %v1664 = vadd.f32 %v1657, %v1662
      %v1665 = vpack.c.bf16 %v1664, %v1664
      %v1666 = vld [vmem:[%s789] sm:$0xf]
      %v1667 = vld [vmem:[%s789 + $0x4] sm:$0xf]
      %v1668 = vld [vmem:[%s789 + $0x8] sm:$0xf]
      %v1669 = vld [vmem:[%s789 + $0xc] sm:$0xf]
      %v1670 = vld [vmem:[%s792] sm:$0x1]
      %v1672 = vlaneseq
      %v1673 = vshrl.u32 %v1672, 7
      %v1674 = vsub.s32 0, %v1673
      %v1675 = vrot.slane %v1670, %v1674
      %v1681 = vunpack.c.l.b16 %v1666
      %v1682 = vunpack.c.l.b16 %v1667
      %v1683 = vunpack.c.l.b16 %v1668
      %v1684 = vunpack.c.l.b16 %v1669
      %v1685 = vpack.c.b16 %v1682, %v1681
      %v1686 = vpack.c.b16 %v1684, %v1683
      %v1690 = vsel %vm1062, %v1665, 0
      %1692 = vmatprep.subr.bf16.mxu0 0
      %1693 = vmatpush1.bf16.msra.mxu0 0
      %1694 = vmatprep.subr.bf16.mxu0 0
      %1695 = vmatpush1.bf16.msra.mxu0 0
      %1696 = vmatprep.subr.bf16.mxu0 0
      %1697 = vmatpush1.bf16.msra.mxu0 0
      %1698 = vmatprep.subr.bf16.mxu0 0
      %1699 = vmatpush1.bf16.msra.mxu0 0
      %1700 = vmatprep.subr.bf16.mxu0 0
      %1701 = vmatpush1.bf16.msra.mxu0 0
      %1702 = vmatprep.subr.bf16.mxu0 0
      %1703 = vmatpush1.bf16.msra.mxu0 0
      %1704 = vmatprep.subr.bf16.mxu0 0
      %1705 = vmatpush1.bf16.msra.mxu0 %v1686
      %1706 = vmatprep.subr.bf16.mxu0 0
      %1707 = vmatpush1.bf16.msra.mxu0 %v1685
      %1708 = vmatprep.subr.bf16.mxu0 0
      %1709 = vmatpush2.bf16.msra.mxu0 0
      %1710 = vmatprep.subr.bf16.mxu0 0
      %1711 = vmatpush2.bf16.msra.mxu0 0
      %1712 = vmatprep.subr.bf16.mxu0 0
      %1713 = vmatpush2.bf16.msra.mxu0 0
      %1714 = vmatprep.subr.bf16.mxu0 0
      %1715 = vmatpush2.bf16.msra.mxu0 0
      %1716 = vmatprep.subr.bf16.mxu0 0
      %1717 = vmatpush2.bf16.msra.mxu0 0
      %1718 = vmatprep.subr.bf16.mxu0 0
      %1719 = vmatpush2.bf16.msra.mxu0 0
      %1720 = vmatprep.subr.bf16.mxu0 0
      %1721 = vmatpush2.bf16.msra.mxu0 0
      %1722 = vmatprep.subr.bf16.mxu0 0
      %1723 = vmatpush2.bf16.msra.mxu0 0
      %1724 = vmatprep.mubr.bf16.mxu0 0
      %1725 = vmatmul.mubr.bf16.gmra.mxu0 %v1690
      %v1726 = vpop.f32.mrf.mxu0
      %v1727 = vadd.f32 %v1675, %v1726
      %v1728 = vpop.f32.mrf.mxu0
      %v1729 = vpop.f32.mrf.mxu0
      %v1730 = vpop.f32.mrf.mxu0
      %1731 = vdwg.mxu0
      %v1732 = vmul.f32 %v1727, %v1727
      %v1733 = vmul.f32 %v1727, %v1732
      %v1734 = vmul.f32 %v1733, 0.044715
      %v1735 = vadd.f32 %v1727, %v1734
      %v1736 = vmul.f32 %v1735, 0.7978846
      %v1737 = vtanh.pop %v1736
      %v1738 = vadd.f32 %v1737, 1.0
      %v1739 = vmul.f32 %v1738, 0.5
      %v1740 = vmul.f32 %v1727, %v1739
      %v1741 = vpack.c.bf16 %v1740, %v1740
      %v1742 = vld [vmem:[%s797] sm:$0xf]
      %v1743 = vld [vmem:[%s797 + $0x4] sm:$0xf]
      %v1744 = vld [vmem:[%s797 + $0x8] sm:$0xf]
      %v1745 = vld [vmem:[%s797 + $0xc] sm:$0xf]
      %v1746 = vld [vmem:[%s797 + $0x10] sm:$0xf]
      %v1747 = vld [vmem:[%s797 + $0x14] sm:$0xf]
      %v1748 = vld [vmem:[%s797 + $0x18] sm:$0xf]
      %v1749 = vld [vmem:[%s797 + $0x1c] sm:$0xf]
      %v1750 = vld [vmem:[%s800] sm:$0x1]
      %v1752 = vlaneseq
      %v1753 = vshrl.u32 %v1752, 7
      %v1754 = vsub.s32 0, %v1753
      %v1755 = vrot.slane %v1750, %v1754
      %v1765 = vunpack.c.l.b16 %v1742
      %v1766 = vunpack.c.l.b16 %v1743
      %v1767 = vunpack.c.l.b16 %v1744
      %v1768 = vunpack.c.l.b16 %v1745
      %v1769 = vunpack.c.l.b16 %v1746
      %v1770 = vunpack.c.l.b16 %v1747
      %v1771 = vunpack.c.l.b16 %v1748
      %v1772 = vunpack.c.l.b16 %v1749
      %v1773 = vpack.c.b16 %v1766, %v1765
      %v1774 = vpack.c.b16 %v1768, %v1767
      %v1775 = vpack.c.b16 %v1770, %v1769
      %v1776 = vpack.c.b16 %v1772, %v1771
      %vm1781 = vcmask 523264
      %v1783 = vsel %vm1781, %v1741, 0
      %1785 = vmatprep.subr.bf16.mxu0 0
      %1786 = vmatpush1.bf16.msra.mxu0 0
      %1787 = vmatprep.subr.bf16.mxu0 0
      %1788 = vmatpush1.bf16.msra.mxu0 0
      %1789 = vmatprep.subr.bf16.mxu0 0
      %1790 = vmatpush1.bf16.msra.mxu0 0
      %1791 = vmatprep.subr.bf16.mxu0 0
      %1792 = vmatpush1.bf16.msra.mxu0 0
      %1793 = vmatprep.subr.bf16.mxu0 0
      %1794 = vmatpush1.bf16.msra.mxu0 %v1776
      %1795 = vmatprep.subr.bf16.mxu0 0
      %1796 = vmatpush1.bf16.msra.mxu0 %v1775
      %1797 = vmatprep.subr.bf16.mxu0 0
      %1798 = vmatpush1.bf16.msra.mxu0 %v1774
      %1799 = vmatprep.subr.bf16.mxu0 0
      %1800 = vmatpush1.bf16.msra.mxu0 %v1773
      %1801 = vmatprep.subr.bf16.mxu0 0
      %1802 = vmatpush2.bf16.msra.mxu0 0
      %1803 = vmatprep.subr.bf16.mxu0 0
      %1804 = vmatpush2.bf16.msra.mxu0 0
      %1805 = vmatprep.subr.bf16.mxu0 0
      %1806 = vmatpush2.bf16.msra.mxu0 0
      %1807 = vmatprep.subr.bf16.mxu0 0
      %1808 = vmatpush2.bf16.msra.mxu0 0
      %1809 = vmatprep.subr.bf16.mxu0 0
      %1810 = vmatpush2.bf16.msra.mxu0 0
      %1811 = vmatprep.subr.bf16.mxu0 0
      %1812 = vmatpush2.bf16.msra.mxu0 0
      %1813 = vmatprep.subr.bf16.mxu0 0
      %1814 = vmatpush2.bf16.msra.mxu0 0
      %1815 = vmatprep.subr.bf16.mxu0 0
      %1816 = vmatpush2.bf16.msra.mxu0 0
      %1817 = vmatprep.mubr.bf16.mxu0 0
      %1818 = vmatmul.mubr.bf16.gmra.mxu0 %v1783
      %v1819 = vpop.f32.mrf.mxu0
      %v1820 = vadd.f32 %v1755, %v1819
      %v1821 = vpop.f32.mrf.mxu0
      %v1822 = vpop.f32.mrf.mxu0
      %v1823 = vpop.f32.mrf.mxu0
      %1824 = vdwg.mxu0
      %v1825 = vadd.f32 %v1635, %v1820
      %1826 = vst.msk [vmem:[#allocation2] sm:$0x1f] %vm1004, %v1825
      %p1827 = scmp.eq.s32.totalorder %s35, 1
      // Predicated region
      $region101: #{vit_captioning_forward.2} parent=95 // pred_check
        %p1828 = pneg %p1827
      $region102: #{vit_captioning_forward.2} parent=95 // pred_check_branch
        %1830 = sbr.rel (%p1828) target = $region104
      $region103: #{vit_captioning_forward.2} parent=95 // pred_region
        %v1831 = vld [vmem:[%s17] sm:$0x1]
        %v1832 = vld [vmem:[%s18] sm:$0x1]
        %v1833 = vsel %vm1004, %v1825, 0.0
        %1834 = vadd.xlane.f32.xlu0 %v1833
        %v1835 = vpop.xlane.xlu0 %1834
        %v1836 = vmul.f32 %v1835, %v1008
        %v1837 = vsub.f32 %v1825, %v1836
        %v1838 = vmul.f32 %v1837, %v1837
        %v1839 = vsel %vm1004, %v1838, 0.0
        %1840 = vadd.xlane.f32.xlu0 %v1839
        %v1841 = vpop.xlane.xlu0 %1840
        %v1842 = vmul.f32 %v1841, %v1008
        %v1843 = vadd.f32 %v1842, 1e-12
        %v1844 = vrsqrt.pop %v1843
        %v1845 = vmul.f32 %v1837, %v1844
        %v1847 = vlaneseq
        %v1848 = vshrl.u32 %v1847, 7
        %v1849 = vsub.s32 0, %v1848
        %v1850 = vrot.slane %v1831, %v1849
        %v1852 = vmul.f32 %v1845, %v1850
        %v1854 = vlaneseq
        %v1855 = vshrl.u32 %v1854, 7
        %v1856 = vsub.s32 0, %v1855
        %v1857 = vrot.slane %v1832, %v1856
        %v1859 = vadd.f32 %v1852, %v1857
        %1860 = vst.msk [vmem:[%s804] sm:$0x1f] %vm1004, %v1859
      $region104: #{vit_captioning_forward.2} parent=95 // pred_fallthru
        _
      %p1861 = scmp.lt.s32.totalorder %s34, 1
      %s1862 = scalar_select %p1861, %s34, 1
      %s1863 = smul.addr %s1862, 8
      %s1864 = scalar_lea.vmem %s19, %s1863
      // Predicated region
      $region105: #{vit_captioning_forward.2} parent=95 // pred_check
        %p1865 = pneg %p524
      $region106: #{vit_captioning_forward.2} parent=95 // pred_check_branch
        %1867 = sbr.rel (%p1865) target = $region108
      $region107: #{vit_captioning_forward.2} parent=95 // pred_region
        _
      $region108: #{vit_captioning_forward.2} parent=95 // pred_fallthru
        _
    $region96: #{vit_captioning_forward.2} parent=5 // pred_fallthru
      _
    %p1868 = scmp.le.s32.totalorder 2, %s25
    // Predicated region
    $region109: #{vit_captioning_forward.2} parent=5 // pred_check
      %p1869 = pneg %p1868
    $region110: #{vit_captioning_forward.2} parent=5 // pred_check_branch
      %1871 = sbr.rel (%p1869) target = $region112
    $region111: #{vit_captioning_forward.2} parent=5 // pred_region
      %s1872 = ssub.s32 %s25, 2
      // Predicated region
      $region113: #{vit_captioning_forward.2} parent=111 // pred_check
        %p1873 = pneg %p530
      $region114: #{vit_captioning_forward.2} parent=111 // pred_check_branch
        %1875 = sbr.rel (%p1873) target = $region116
      $region115: #{vit_captioning_forward.2} parent=111 // pred_region
        %p1876 = scmp.lt.s32.totalorder %s36, 1
        %s1877 = scalar_select %p1876, %s36, 1
        %s1878 = smul.addr %s1877, 8
        %s1879 = scalar_lea.vmem %s19, %s1878
      $region116: #{vit_captioning_forward.2} parent=111 // pred_fallthru
        _
    $region112: #{vit_captioning_forward.2} parent=5 // pred_fallthru
      _
  $region6: #{vit_captioning_forward.2} parent=0 // loop_footer
    %s29 = sadd.s32 1, %s25
  $region7: #{vit_captioning_forward.2} parent=0 // loop_footer_branch
    %24 = sbr.rel target = $region3
  $region8: #{vit_captioning_forward.2} parent=0 // loop_exit
    _

// kernel: vit_captioning_forward.3
$region0: #{vit_captioning_forward.3}
  #allocation0 [shape = 'u32[]', space=smem, size = 0x4, offset = 0x4, fixed_abs, tag = 'smem constant byte address 0x4 - core index']
  #allocation1 [shape = 'u32[144,128]{1,0:T(1,128)}', space=vmem, size = 0x12000, scoped, tag = 'internal scratch']
  #allocation2 [shape = 'f32[8,32]{1,0:T(8,128)}', space=vmem, size = 0x1000, scoped, tag = 'scratch operand']
  %s0 = inlined_call_operand.vmem [shape: f32[2,8,32], index: 0, kind: input, shape index: {}]
  %s1 = inlined_call_operand.vmem [shape: f32[2,5,32], index: 1, kind: input, shape index: {}]
  %s2 = inlined_call_operand.vmem [shape: f32[8,8], index: 2, kind: input, shape index: {}]
  %s3 = inlined_call_operand.vmem [shape: bf16[2,32,96], index: 3, kind: input, shape index: {}]
  %s4 = inlined_call_operand.vmem [shape: f32[2,1,96], index: 4, kind: input, shape index: {}]
  %s5 = inlined_call_operand.vmem [shape: bf16[2,32,32], index: 5, kind: input, shape index: {}]
  %s6 = inlined_call_operand.vmem [shape: f32[2,1,32], index: 6, kind: input, shape index: {}]
  %s7 = inlined_call_operand.vmem [shape: f32[2,1,32], index: 7, kind: input, shape index: {}]
  %s8 = inlined_call_operand.vmem [shape: f32[2,1,32], index: 8, kind: input, shape index: {}]
  %s9 = inlined_call_operand.vmem [shape: bf16[2,32,32], index: 9, kind: input, shape index: {}]
  %s10 = inlined_call_operand.vmem [shape: f32[2,1,32], index: 10, kind: input, shape index: {}]
  %s11 = inlined_call_operand.vmem [shape: bf16[2,32,64], index: 11, kind: input, shape index: {}]
  %s12 = inlined_call_operand.vmem [shape: f32[2,1,64], index: 12, kind: input, shape index: {}]
  %s13 = inlined_call_operand.vmem [shape: bf16[2,32,32], index: 13, kind: input, shape index: {}]
  %s14 = inlined_call_operand.vmem [shape: f32[2,1,32], index: 14, kind: input, shape index: {}]
  %s15 = inlined_call_operand.vmem [shape: f32[2,1,32], index: 15, kind: input, shape index: {}]
  %s16 = inlined_call_operand.vmem [shape: f32[2,1,32], index: 16, kind: input, shape index: {}]
  %s17 = inlined_call_operand.vmem [shape: bf16[2,32,64], index: 17, kind: input, shape index: {}]
  %s18 = inlined_call_operand.vmem [shape: f32[2,1,64], index: 18, kind: input, shape index: {}]
  %s19 = inlined_call_operand.vmem [shape: bf16[2,64,32], index: 19, kind: input, shape index: {}]
  %s20 = inlined_call_operand.vmem [shape: f32[2,1,32], index: 20, kind: input, shape index: {}]
  %s21 = inlined_call_operand.vmem [shape: f32[2,1,32], index: 21, kind: input, shape index: {}]
  %s22 = inlined_call_operand.vmem [shape: f32[2,1,32], index: 22, kind: input, shape index: {}]
  %s23 = inlined_call_operand.vmem [shape: bf16[32,128], index: 23, kind: input, shape index: {}]
  %s24 = inlined_call_operand.vmem [shape: f32[1,128], index: 24, kind: input, shape index: {}]
  %s25 = inlined_call_operand.hbm [shape: f32[2,8,128], index: 25, kind: output, shape index: {}]
  %s26 = sld [smem:[#allocation0]]
  $region141: #{vit_captioning_forward.3} parent=0
    _
  %s28 = ssub.s32 1, %s26
  %s29 = scalar_select 0, %s28, %s26
  $region1: #{vit_captioning_forward.3} parent=0
    #allocation3 [shape = 'u8[8192]{0}', space=vmem, size = 0x2000, scoped, tag = 'output window, operand 0']
    #allocation4 [shape = 's32[2]{0}', space=sflag, size = 0x8, scoped, tag = 'scoped memory for vit_captioning_forward.3']
    %30 = vsyncpa [#allocation4], 0
    %s31 = scalar_lea.sflag [#allocation4], 1
    %32 = vsyncpa %s31, 0
    loop: start=0, step=1, limit=6
    $region2: #{vit_captioning_forward.3} parent=1 // loop_pre_header
      _
    $region3: #{vit_captioning_forward.3} parent=1 // loop_header
      %s34 = sphi 0, %s38
      %p35 = scmp.ge.s32.totalorder %s34, 6
      %s41 = sphi 0, %s53
      %s42 = sphi 0, %s49
      %s43 = sphi 0, %s41
      %s44 = sphi 0, %s42
      %s45 = sphi 0, %s43
      %s46 = sphi 0, %s44
      %s56 = sphi 0, %s58
      %s59 = sphi 0, %s56
      %s60 = sphi 0, %s59
      %s76 = sphi 0, %s60
      %s82 = sphi 0, %s84
      %s85 = sphi 0, %s82
      %s86 = sphi 0, %s85
      %s102 = sphi 0, %s86
      %s106 = sphi 0, %s106
      %s108 = sphi 0, %s106
      %s109 = sphi 0, %s108
      %s123 = sphi 0, %s109
      %s129 = sphi 0, %s131
      %s132 = sphi 0, %s129
      %s133 = sphi 0, %s132
      %s149 = sphi 0, %s133
      %s155 = sphi 0, %s157
      %s158 = sphi 0, %s155
      %s159 = sphi 0, %s158
      %s175 = sphi 0, %s159
      %s181 = sphi 0, %s183
      %s184 = sphi 0, %s181
      %s185 = sphi 0, %s184
      %s201 = sphi 0, %s185
      %s207 = sphi 0, %s209
      %s210 = sphi 0, %s207
      %s211 = sphi 0, %s210
      %s227 = sphi 0, %s211
      %s233 = sphi 0, %s235
      %s236 = sphi 0, %s233
      %s237 = sphi 0, %s236
      %s253 = sphi 0, %s237
      %s259 = sphi 0, %s261
      %s262 = sphi 0, %s259
      %s263 = sphi 0, %s262
      %s279 = sphi 0, %s263
      %s285 = sphi 0, %s287
      %s288 = sphi 0, %s285
      %s289 = sphi 0, %s288
      %s305 = sphi 0, %s289
      %s311 = sphi 0, %s313
      %s314 = sphi 0, %s311
      %s315 = sphi 0, %s314
      %s331 = sphi 0, %s315
      %s337 = sphi 0, %s339
      %s340 = sphi 0, %s337
      %s341 = sphi 0, %s340
      %s357 = sphi 0, %s341
      %s363 = sphi 0, %s365
      %s366 = sphi 0, %s363
      %s367 = sphi 0, %s366
      %s383 = sphi 0, %s367
      %s389 = sphi 0, %s391
      %s392 = sphi 0, %s389
      %s393 = sphi 0, %s392
      %s409 = sphi 0, %s393
      %s415 = sphi 0, %s417
      %s418 = sphi 0, %s415
      %s419 = sphi 0, %s418
      %s435 = sphi 0, %s419
      %s441 = sphi 0, %s443
      %s444 = sphi 0, %s441
      %s445 = sphi 0, %s444
      %s461 = sphi 0, %s445
      %s467 = sphi 0, %s469
      %s470 = sphi 0, %s467
      %s471 = sphi 0, %s470
      %s487 = sphi 0, %s471
      %s493 = sphi 0, %s495
      %s496 = sphi 0, %s493
      %s497 = sphi 0, %s496
      %s513 = sphi 0, %s497
      %s519 = sphi 0, %s521
      %s522 = sphi 0, %s519
      %s523 = sphi 0, %s522
      %s539 = sphi 0, %s523
      %s545 = sphi 0, %s547
      %s548 = sphi 0, %s545
      %s549 = sphi 0, %s548
      %s565 = sphi 0, %s549
      %s571 = sphi 0, %s573
      %s574 = sphi 0, %s571
      %s575 = sphi 0, %s574
      %s591 = sphi 0, %s575
      %s597 = sphi 0, %s599
      %s600 = sphi 0, %s597
      %s601 = sphi 0, %s600
      %s617 = sphi 0, %s601
      %s623 = sphi 0, %s625
      %s626 = sphi 0, %s623
      %s627 = sphi 0, %s626
      %s643 = sphi 0, %s627
      %s647 = sphi 0, %s647
      %s649 = sphi 0, %s647
      %s650 = sphi 0, %s649
      %s664 = sphi 0, %s650
      %s668 = sphi 0, %s668
      %s670 = sphi 0, %s668
      %s671 = sphi 0, %s670
      %s685 = sphi 0, %s671
      %s691 = sphi 0, %s693
      %s694 = sphi 0, %s691
      %s695 = sphi 0, %s694
      %s711 = sphi 0, %s695
    $region4: #{vit_captioning_forward.3} parent=1 // loop_header_branch
      %37 = sbr.rel (%p35) target = $region8
    $region5: #{vit_captioning_forward.3} parent=1 // loop_body
      %s39 = ssub.s32 %s34, 1
      %s40 = ssub.s32 %s34, 2
      %s47 = sadd.s32 1, %s42
      %p48 = scmp.ge.s32.totalorder %s47, 2
      %s49 = scalar_select %p48, 0, %s47
      %s50 = sadd.s32 1, %s41
      %s51 = scalar_select %p48, %s50, %s41
      %p52 = scmp.ge.s32.totalorder %s51, 2
      %s53 = scalar_select %p52, 0, %s51
      %s54 = ssub.s32 %s41, %s53
      %p55 = scmp.eq.s32.totalorder %s54, 0
      %s57 = sadd.s32 %s56, 1
      %s58 = scalar_select %p55, %s56, %s57
      %p61 = pneg %p55
      %p62 = scmp.eq.s32.totalorder %s34, 3
      %p63 = por %p61, %p62
      %p64 = scmp.ne.s32.totalorder %s56, %s59
      %p65 = scmp.eq.s32.totalorder %s34, 0
      %p66 = por %p64, %p65
      %p67 = scmp.ne.s32.totalorder %s56, %s59
      %p68 = scmp.eq.s32.totalorder %s39, 3
      %p69 = por %p67, %p68
      %p70 = scmp.ne.s32.totalorder %s59, %s60
      %p71 = scmp.eq.s32.totalorder %s39, 0
      %p72 = por %p70, %p71
      %p73 = scmp.ne.s32.totalorder %s59, %s60
      %p74 = scmp.eq.s32.totalorder %s40, 3
      %p75 = por %p73, %p74
      %p77 = scmp.ne.s32.totalorder %s60, %s76
      %p78 = scmp.eq.s32.totalorder %s40, 0
      %p79 = por %p77, %p78
      %s80 = ssub.s32 %s41, %s53
      %p81 = scmp.eq.s32.totalorder %s80, 0
      %s83 = sadd.s32 %s82, 1
      %s84 = scalar_select %p81, %s82, %s83
      %p87 = pneg %p81
      %p88 = scmp.eq.s32.totalorder %s34, 3
      %p89 = por %p87, %p88
      %p90 = scmp.ne.s32.totalorder %s82, %s85
      %p91 = scmp.eq.s32.totalorder %s34, 0
      %p92 = por %p90, %p91
      %p93 = scmp.ne.s32.totalorder %s82, %s85
      %p94 = scmp.eq.s32.totalorder %s39, 3
      %p95 = por %p93, %p94
      %p96 = scmp.ne.s32.totalorder %s85, %s86
      %p97 = scmp.eq.s32.totalorder %s39, 0
      %p98 = por %p96, %p97
      %p99 = scmp.ne.s32.totalorder %s85, %s86
      %p100 = scmp.eq.s32.totalorder %s40, 3
      %p101 = por %p99, %p100
      %p103 = scmp.ne.s32.totalorder %s86, %s102
      %p104 = scmp.eq.s32.totalorder %s40, 0
      %p105 = por %p103, %p104
      %s107 = sadd.s32 %s106, 1
      %p110 = scmp.eq.s32.totalorder %s34, 3
      %p111 = scmp.ne.s32.totalorder %s106, %s108
      %p112 = scmp.eq.s32.totalorder %s34, 0
      %p113 = por %p111, %p112
      %p114 = scmp.ne.s32.totalorder %s106, %s108
      %p115 = scmp.eq.s32.totalorder %s39, 3
      %p116 = por %p114, %p115
      %p117 = scmp.ne.s32.totalorder %s108, %s109
      %p118 = scmp.eq.s32.totalorder %s39, 0
      %p119 = por %p117, %p118
      %p120 = scmp.ne.s32.totalorder %s108, %s109
      %p121 = scmp.eq.s32.totalorder %s40, 3
      %p122 = por %p120, %p121
      %p124 = scmp.ne.s32.totalorder %s109, %s123
      %p125 = scmp.eq.s32.totalorder %s40, 0
      %p126 = por %p124, %p125
      %s127 = ssub.s32 %s42, %s49
      %p128 = scmp.eq.s32.totalorder %s127, 0
      %s130 = sadd.s32 %s129, 1
      %s131 = scalar_select %p128, %s129, %s130
      %p134 = pneg %p128
      %p135 = scmp.eq.s32.totalorder %s34, 3
      %p136 = por %p134, %p135
      %p137 = scmp.ne.s32.totalorder %s129, %s132
      %p138 = scmp.eq.s32.totalorder %s34, 0
      %p139 = por %p137, %p138
      %p140 = scmp.ne.s32.totalorder %s129, %s132
      %p141 = scmp.eq.s32.totalorder %s39, 3
      %p142 = por %p140, %p141
      %p143 = scmp.ne.s32.totalorder %s132, %s133
      %p144 = scmp.eq.s32.totalorder %s39, 0
      %p145 = por %p143, %p144
      %p146 = scmp.ne.s32.totalorder %s132, %s133
      %p147 = scmp.eq.s32.totalorder %s40, 3
      %p148 = por %p146, %p147
      %p150 = scmp.ne.s32.totalorder %s133, %s149
      %p151 = scmp.eq.s32.totalorder %s40, 0
      %p152 = por %p150, %p151
      %s153 = ssub.s32 %s42, %s49
      %p154 = scmp.eq.s32.totalorder %s153, 0
      %s156 = sadd.s32 %s155, 1
      %s157 = scalar_select %p154, %s155, %s156
      %p160 = pneg %p154
      %p161 = scmp.eq.s32.totalorder %s34, 3
      %p162 = por %p160, %p161
      %p163 = scmp.ne.s32.totalorder %s155, %s158
      %p164 = scmp.eq.s32.totalorder %s34, 0
      %p165 = por %p163, %p164
      %p166 = scmp.ne.s32.totalorder %s155, %s158
      %p167 = scmp.eq.s32.totalorder %s39, 3
      %p168 = por %p166, %p167
      %p169 = scmp.ne.s32.totalorder %s158, %s159
      %p170 = scmp.eq.s32.totalorder %s39, 0
      %p171 = por %p169, %p170
      %p172 = scmp.ne.s32.totalorder %s158, %s159
      %p173 = scmp.eq.s32.totalorder %s40, 3
      %p174 = por %p172, %p173
      %p176 = scmp.ne.s32.totalorder %s159, %s175
      %p177 = scmp.eq.s32.totalorder %s40, 0
      %p178 = por %p176, %p177
      %s179 = ssub.s32 %s42, %s49
      %p180 = scmp.eq.s32.totalorder %s179, 0
      %s182 = sadd.s32 %s181, 1
      %s183 = scalar_select %p180, %s181, %s182
      %p186 = pneg %p180
      %p187 = scmp.eq.s32.totalorder %s34, 3
      %p188 = por %p186, %p187
      %p189 = scmp.ne.s32.totalorder %s181, %s184
      %p190 = scmp.eq.s32.totalorder %s34, 0
      %p191 = por %p189, %p190
      %p192 = scmp.ne.s32.totalorder %s181, %s184
      %p193 = scmp.eq.s32.totalorder %s39, 3
      %p194 = por %p192, %p193
      %p195 = scmp.ne.s32.totalorder %s184, %s185
      %p196 = scmp.eq.s32.totalorder %s39, 0
      %p197 = por %p195, %p196
      %p198 = scmp.ne.s32.totalorder %s184, %s185
      %p199 = scmp.eq.s32.totalorder %s40, 3
      %p200 = por %p198, %p199
      %p202 = scmp.ne.s32.totalorder %s185, %s201
      %p203 = scmp.eq.s32.totalorder %s40, 0
      %p204 = por %p202, %p203
      %s205 = ssub.s32 %s42, %s49
      %p206 = scmp.eq.s32.totalorder %s205, 0
      %s208 = sadd.s32 %s207, 1
      %s209 = scalar_select %p206, %s207, %s208
      %p212 = pneg %p206
      %p213 = scmp.eq.s32.totalorder %s34, 3
      %p214 = por %p212, %p213
      %p215 = scmp.ne.s32.totalorder %s207, %s210
      %p216 = scmp.eq.s32.totalorder %s34, 0
      %p217 = por %p215, %p216
      %p218 = scmp.ne.s32.totalorder %s207, %s210
      %p219 = scmp.eq.s32.totalorder %s39, 3
      %p220 = por %p218, %p219
      %p221 = scmp.ne.s32.totalorder %s210, %s211
      %p222 = scmp.eq.s32.totalorder %s39, 0
      %p223 = por %p221, %p222
      %p224 = scmp.ne.s32.totalorder %s210, %s211
      %p225 = scmp.eq.s32.totalorder %s40, 3
      %p226 = por %p224, %p225
      %p228 = scmp.ne.s32.totalorder %s211, %s227
      %p229 = scmp.eq.s32.totalorder %s40, 0
      %p230 = por %p228, %p229
      %s231 = ssub.s32 %s42, %s49
      %p232 = scmp.eq.s32.totalorder %s231, 0
      %s234 = sadd.s32 %s233, 1
      %s235 = scalar_select %p232, %s233, %s234
      %p238 = pneg %p232
      %p239 = scmp.eq.s32.totalorder %s34, 3
      %p240 = por %p238, %p239
      %p241 = scmp.ne.s32.totalorder %s233, %s236
      %p242 = scmp.eq.s32.totalorder %s34, 0
      %p243 = por %p241, %p242
      %p244 = scmp.ne.s32.totalorder %s233, %s236
      %p245 = scmp.eq.s32.totalorder %s39, 3
      %p246 = por %p244, %p245
      %p247 = scmp.ne.s32.totalorder %s236, %s237
      %p248 = scmp.eq.s32.totalorder %s39, 0
      %p249 = por %p247, %p248
      %p250 = scmp.ne.s32.totalorder %s236, %s237
      %p251 = scmp.eq.s32.totalorder %s40, 3
      %p252 = por %p250, %p251
      %p254 = scmp.ne.s32.totalorder %s237, %s253
      %p255 = scmp.eq.s32.totalorder %s40, 0
      %p256 = por %p254, %p255
      %s257 = ssub.s32 %s42, %s49
      %p258 = scmp.eq.s32.totalorder %s257, 0
      %s260 = sadd.s32 %s259, 1
      %s261 = scalar_select %p258, %s259, %s260
      %p264 = pneg %p258
      %p265 = scmp.eq.s32.totalorder %s34, 3
      %p266 = por %p264, %p265
      %p267 = scmp.ne.s32.totalorder %s259, %s262
      %p268 = scmp.eq.s32.totalorder %s34, 0
      %p269 = por %p267, %p268
      %p270 = scmp.ne.s32.totalorder %s259, %s262
      %p271 = scmp.eq.s32.totalorder %s39, 3
      %p272 = por %p270, %p271
      %p273 = scmp.ne.s32.totalorder %s262, %s263
      %p274 = scmp.eq.s32.totalorder %s39, 0
      %p275 = por %p273, %p274
      %p276 = scmp.ne.s32.totalorder %s262, %s263
      %p277 = scmp.eq.s32.totalorder %s40, 3
      %p278 = por %p276, %p277
      %p280 = scmp.ne.s32.totalorder %s263, %s279
      %p281 = scmp.eq.s32.totalorder %s40, 0
      %p282 = por %p280, %p281
      %s283 = ssub.s32 %s42, %s49
      %p284 = scmp.eq.s32.totalorder %s283, 0
      %s286 = sadd.s32 %s285, 1
      %s287 = scalar_select %p284, %s285, %s286
      %p290 = pneg %p284
      %p291 = scmp.eq.s32.totalorder %s34, 3
      %p292 = por %p290, %p291
      %p293 = scmp.ne.s32.totalorder %s285, %s288
      %p294 = scmp.eq.s32.totalorder %s34, 0
      %p295 = por %p293, %p294
      %p296 = scmp.ne.s32.totalorder %s285, %s288
      %p297 = scmp.eq.s32.totalorder %s39, 3
      %p298 = por %p296, %p297
      %p299 = scmp.ne.s32.totalorder %s288, %s289
      %p300 = scmp.eq.s32.totalorder %s39, 0
      %p301 = por %p299, %p300
      %p302 = scmp.ne.s32.totalorder %s288, %s289
      %p303 = scmp.eq.s32.totalorder %s40, 3
      %p304 = por %p302, %p303
      %p306 = scmp.ne.s32.totalorder %s289, %s305
      %p307 = scmp.eq.s32.totalorder %s40, 0
      %p308 = por %p306, %p307
      %s309 = ssub.s32 %s42, %s49
      %p310 = scmp.eq.s32.totalorder %s309, 0
      %s312 = sadd.s32 %s311, 1
      %s313 = scalar_select %p310, %s311, %s312
      %p316 = pneg %p310
      %p317 = scmp.eq.s32.totalorder %s34, 3
      %p318 = por %p316, %p317
      %p319 = scmp.ne.s32.totalorder %s311, %s314
      %p320 = scmp.eq.s32.totalorder %s34, 0
      %p321 = por %p319, %p320
      %p322 = scmp.ne.s32.totalorder %s311, %s314
      %p323 = scmp.eq.s32.totalorder %s39, 3
      %p324 = por %p322, %p323
      %p325 = scmp.ne.s32.totalorder %s314, %s315
      %p326 = scmp.eq.s32.totalorder %s39, 0
      %p327 = por %p325, %p326
      %p328 = scmp.ne.s32.totalorder %s314, %s315
      %p329 = scmp.eq.s32.totalorder %s40, 3
      %p330 = por %p328, %p329
      %p332 = scmp.ne.s32.totalorder %s315, %s331
      %p333 = scmp.eq.s32.totalorder %s40, 0
      %p334 = por %p332, %p333
      %s335 = ssub.s32 %s42, %s49
      %p336 = scmp.eq.s32.totalorder %s335, 0
      %s338 = sadd.s32 %s337, 1
      %s339 = scalar_select %p336, %s337, %s338
      %p342 = pneg %p336
      %p343 = scmp.eq.s32.totalorder %s34, 3
      %p344 = por %p342, %p343
      %p345 = scmp.ne.s32.totalorder %s337, %s340
      %p346 = scmp.eq.s32.totalorder %s34, 0
      %p347 = por %p345, %p346
      %p348 = scmp.ne.s32.totalorder %s337, %s340
      %p349 = scmp.eq.s32.totalorder %s39, 3
      %p350 = por %p348, %p349
      %p351 = scmp.ne.s32.totalorder %s340, %s341
      %p352 = scmp.eq.s32.totalorder %s39, 0
      %p353 = por %p351, %p352
      %p354 = scmp.ne.s32.totalorder %s340, %s341
      %p355 = scmp.eq.s32.totalorder %s40, 3
      %p356 = por %p354, %p355
      %p358 = scmp.ne.s32.totalorder %s341, %s357
      %p359 = scmp.eq.s32.totalorder %s40, 0
      %p360 = por %p358, %p359
      %s361 = ssub.s32 %s42, %s49
      %p362 = scmp.eq.s32.totalorder %s361, 0
      %s364 = sadd.s32 %s363, 1
      %s365 = scalar_select %p362, %s363, %s364
      %p368 = pneg %p362
      %p369 = scmp.eq.s32.totalorder %s34, 3
      %p370 = por %p368, %p369
      %p371 = scmp.ne.s32.totalorder %s363, %s366
      %p372 = scmp.eq.s32.totalorder %s34, 0
      %p373 = por %p371, %p372
      %p374 = scmp.ne.s32.totalorder %s363, %s366
      %p375 = scmp.eq.s32.totalorder %s39, 3
      %p376 = por %p374, %p375
      %p377 = scmp.ne.s32.totalorder %s366, %s367
      %p378 = scmp.eq.s32.totalorder %s39, 0
      %p379 = por %p377, %p378
      %p380 = scmp.ne.s32.totalorder %s366, %s367
      %p381 = scmp.eq.s32.totalorder %s40, 3
      %p382 = por %p380, %p381
      %p384 = scmp.ne.s32.totalorder %s367, %s383
      %p385 = scmp.eq.s32.totalorder %s40, 0
      %p386 = por %p384, %p385
      %s387 = ssub.s32 %s42, %s49
      %p388 = scmp.eq.s32.totalorder %s387, 0
      %s390 = sadd.s32 %s389, 1
      %s391 = scalar_select %p388, %s389, %s390
      %p394 = pneg %p388
      %p395 = scmp.eq.s32.totalorder %s34, 3
      %p396 = por %p394, %p395
      %p397 = scmp.ne.s32.totalorder %s389, %s392
      %p398 = scmp.eq.s32.totalorder %s34, 0
      %p399 = por %p397, %p398
      %p400 = scmp.ne.s32.totalorder %s389, %s392
      %p401 = scmp.eq.s32.totalorder %s39, 3
      %p402 = por %p400, %p401
      %p403 = scmp.ne.s32.totalorder %s392, %s393
      %p404 = scmp.eq.s32.totalorder %s39, 0
      %p405 = por %p403, %p404
      %p406 = scmp.ne.s32.totalorder %s392, %s393
      %p407 = scmp.eq.s32.totalorder %s40, 3
      %p408 = por %p406, %p407
      %p410 = scmp.ne.s32.totalorder %s393, %s409
      %p411 = scmp.eq.s32.totalorder %s40, 0
      %p412 = por %p410, %p411
      %s413 = ssub.s32 %s42, %s49
      %p414 = scmp.eq.s32.totalorder %s413, 0
      %s416 = sadd.s32 %s415, 1
      %s417 = scalar_select %p414, %s415, %s416
      %p420 = pneg %p414
      %p421 = scmp.eq.s32.totalorder %s34, 3
      %p422 = por %p420, %p421
      %p423 = scmp.ne.s32.totalorder %s415, %s418
      %p424 = scmp.eq.s32.totalorder %s34, 0
      %p425 = por %p423, %p424
      %p426 = scmp.ne.s32.totalorder %s415, %s418
      %p427 = scmp.eq.s32.totalorder %s39, 3
      %p428 = por %p426, %p427
      %p429 = scmp.ne.s32.totalorder %s418, %s419
      %p430 = scmp.eq.s32.totalorder %s39, 0
      %p431 = por %p429, %p430
      %p432 = scmp.ne.s32.totalorder %s418, %s419
      %p433 = scmp.eq.s32.totalorder %s40, 3
      %p434 = por %p432, %p433
      %p436 = scmp.ne.s32.totalorder %s419, %s435
      %p437 = scmp.eq.s32.totalorder %s40, 0
      %p438 = por %p436, %p437
      %s439 = ssub.s32 %s42, %s49
      %p440 = scmp.eq.s32.totalorder %s439, 0
      %s442 = sadd.s32 %s441, 1
      %s443 = scalar_select %p440, %s441, %s442
      %p446 = pneg %p440
      %p447 = scmp.eq.s32.totalorder %s34, 3
      %p448 = por %p446, %p447
      %p449 = scmp.ne.s32.totalorder %s441, %s444
      %p450 = scmp.eq.s32.totalorder %s34, 0
      %p451 = por %p449, %p450
      %p452 = scmp.ne.s32.totalorder %s441, %s444
      %p453 = scmp.eq.s32.totalorder %s39, 3
      %p454 = por %p452, %p453
      %p455 = scmp.ne.s32.totalorder %s444, %s445
      %p456 = scmp.eq.s32.totalorder %s39, 0
      %p457 = por %p455, %p456
      %p458 = scmp.ne.s32.totalorder %s444, %s445
      %p459 = scmp.eq.s32.totalorder %s40, 3
      %p460 = por %p458, %p459
      %p462 = scmp.ne.s32.totalorder %s445, %s461
      %p463 = scmp.eq.s32.totalorder %s40, 0
      %p464 = por %p462, %p463
      %s465 = ssub.s32 %s42, %s49
      %p466 = scmp.eq.s32.totalorder %s465, 0
      %s468 = sadd.s32 %s467, 1
      %s469 = scalar_select %p466, %s467, %s468
      %p472 = pneg %p466
      %p473 = scmp.eq.s32.totalorder %s34, 3
      %p474 = por %p472, %p473
      %p475 = scmp.ne.s32.totalorder %s467, %s470
      %p476 = scmp.eq.s32.totalorder %s34, 0
      %p477 = por %p475, %p476
      %p478 = scmp.ne.s32.totalorder %s467, %s470
      %p479 = scmp.eq.s32.totalorder %s39, 3
      %p480 = por %p478, %p479
      %p481 = scmp.ne.s32.totalorder %s470, %s471
      %p482 = scmp.eq.s32.totalorder %s39, 0
      %p483 = por %p481, %p482
      %p484 = scmp.ne.s32.totalorder %s470, %s471
      %p485 = scmp.eq.s32.totalorder %s40, 3
      %p486 = por %p484, %p485
      %p488 = scmp.ne.s32.totalorder %s471, %s487
      %p489 = scmp.eq.s32.totalorder %s40, 0
      %p490 = por %p488, %p489
      %s491 = ssub.s32 %s42, %s49
      %p492 = scmp.eq.s32.totalorder %s491, 0
      %s494 = sadd.s32 %s493, 1
      %s495 = scalar_select %p492, %s493, %s494
      %p498 = pneg %p492
      %p499 = scmp.eq.s32.totalorder %s34, 3
      %p500 = por %p498, %p499
      %p501 = scmp.ne.s32.totalorder %s493, %s496
      %p502 = scmp.eq.s32.totalorder %s34, 0
      %p503 = por %p501, %p502
      %p504 = scmp.ne.s32.totalorder %s493, %s496
      %p505 = scmp.eq.s32.totalorder %s39, 3
      %p506 = por %p504, %p505
      %p507 = scmp.ne.s32.totalorder %s496, %s497
      %p508 = scmp.eq.s32.totalorder %s39, 0
      %p509 = por %p507, %p508
      %p510 = scmp.ne.s32.totalorder %s496, %s497
      %p511 = scmp.eq.s32.totalorder %s40, 3
      %p512 = por %p510, %p511
      %p514 = scmp.ne.s32.totalorder %s497, %s513
      %p515 = scmp.eq.s32.totalorder %s40, 0
      %p516 = por %p514, %p515
      %s517 = ssub.s32 %s42, %s49
      %p518 = scmp.eq.s32.totalorder %s517, 0
      %s520 = sadd.s32 %s519, 1
      %s521 = scalar_select %p518, %s519, %s520
      %p524 = pneg %p518
      %p525 = scmp.eq.s32.totalorder %s34, 3
      %p526 = por %p524, %p525
      %p527 = scmp.ne.s32.totalorder %s519, %s522
      %p528 = scmp.eq.s32.totalorder %s34, 0
      %p529 = por %p527, %p528
      %p530 = scmp.ne.s32.totalorder %s519, %s522
      %p531 = scmp.eq.s32.totalorder %s39, 3
      %p532 = por %p530, %p531
      %p533 = scmp.ne.s32.totalorder %s522, %s523
      %p534 = scmp.eq.s32.totalorder %s39, 0
      %p535 = por %p533, %p534
      %p536 = scmp.ne.s32.totalorder %s522, %s523
      %p537 = scmp.eq.s32.totalorder %s40, 3
      %p538 = por %p536, %p537
      %p540 = scmp.ne.s32.totalorder %s523, %s539
      %p541 = scmp.eq.s32.totalorder %s40, 0
      %p542 = por %p540, %p541
      %s543 = ssub.s32 %s42, %s49
      %p544 = scmp.eq.s32.totalorder %s543, 0
      %s546 = sadd.s32 %s545, 1
      %s547 = scalar_select %p544, %s545, %s546
      %p550 = pneg %p544
      %p551 = scmp.eq.s32.totalorder %s34, 3
      %p552 = por %p550, %p551
      %p553 = scmp.ne.s32.totalorder %s545, %s548
      %p554 = scmp.eq.s32.totalorder %s34, 0
      %p555 = por %p553, %p554
      %p556 = scmp.ne.s32.totalorder %s545, %s548
      %p557 = scmp.eq.s32.totalorder %s39, 3
      %p558 = por %p556, %p557
      %p559 = scmp.ne.s32.totalorder %s548, %s549
      %p560 = scmp.eq.s32.totalorder %s39, 0
      %p561 = por %p559, %p560
      %p562 = scmp.ne.s32.totalorder %s548, %s549
      %p563 = scmp.eq.s32.totalorder %s40, 3
      %p564 = por %p562, %p563
      %p566 = scmp.ne.s32.totalorder %s549, %s565
      %p567 = scmp.eq.s32.totalorder %s40, 0
      %p568 = por %p566, %p567
      %s569 = ssub.s32 %s42, %s49
      %p570 = scmp.eq.s32.totalorder %s569, 0
      %s572 = sadd.s32 %s571, 1
      %s573 = scalar_select %p570, %s571, %s572
      %p576 = pneg %p570
      %p577 = scmp.eq.s32.totalorder %s34, 3
      %p578 = por %p576, %p577
      %p579 = scmp.ne.s32.totalorder %s571, %s574
      %p580 = scmp.eq.s32.totalorder %s34, 0
      %p581 = por %p579, %p580
      %p582 = scmp.ne.s32.totalorder %s571, %s574
      %p583 = scmp.eq.s32.totalorder %s39, 3
      %p584 = por %p582, %p583
      %p585 = scmp.ne.s32.totalorder %s574, %s575
      %p586 = scmp.eq.s32.totalorder %s39, 0
      %p587 = por %p585, %p586
      %p588 = scmp.ne.s32.totalorder %s574, %s575
      %p589 = scmp.eq.s32.totalorder %s40, 3
      %p590 = por %p588, %p589
      %p592 = scmp.ne.s32.totalorder %s575, %s591
      %p593 = scmp.eq.s32.totalorder %s40, 0
      %p594 = por %p592, %p593
      %s595 = ssub.s32 %s42, %s49
      %p596 = scmp.eq.s32.totalorder %s595, 0
      %s598 = sadd.s32 %s597, 1
      %s599 = scalar_select %p596, %s597, %s598
      %p602 = pneg %p596
      %p603 = scmp.eq.s32.totalorder %s34, 3
      %p604 = por %p602, %p603
      %p605 = scmp.ne.s32.totalorder %s597, %s600
      %p606 = scmp.eq.s32.totalorder %s34, 0
      %p607 = por %p605, %p606
      %p608 = scmp.ne.s32.totalorder %s597, %s600
      %p609 = scmp.eq.s32.totalorder %s39, 3
      %p610 = por %p608, %p609
      %p611 = scmp.ne.s32.totalorder %s600, %s601
      %p612 = scmp.eq.s32.totalorder %s39, 0
      %p613 = por %p611, %p612
      %p614 = scmp.ne.s32.totalorder %s600, %s601
      %p615 = scmp.eq.s32.totalorder %s40, 3
      %p616 = por %p614, %p615
      %p618 = scmp.ne.s32.totalorder %s601, %s617
      %p619 = scmp.eq.s32.totalorder %s40, 0
      %p620 = por %p618, %p619
      %s621 = ssub.s32 %s42, %s49
      %p622 = scmp.eq.s32.totalorder %s621, 0
      %s624 = sadd.s32 %s623, 1
      %s625 = scalar_select %p622, %s623, %s624
      %p628 = pneg %p622
      %p629 = scmp.eq.s32.totalorder %s34, 3
      %p630 = por %p628, %p629
      %p631 = scmp.ne.s32.totalorder %s623, %s626
      %p632 = scmp.eq.s32.totalorder %s34, 0
      %p633 = por %p631, %p632
      %p634 = scmp.ne.s32.totalorder %s623, %s626
      %p635 = scmp.eq.s32.totalorder %s39, 3
      %p636 = por %p634, %p635
      %p637 = scmp.ne.s32.totalorder %s626, %s627
      %p638 = scmp.eq.s32.totalorder %s39, 0
      %p639 = por %p637, %p638
      %p640 = scmp.ne.s32.totalorder %s626, %s627
      %p641 = scmp.eq.s32.totalorder %s40, 3
      %p642 = por %p640, %p641
      %p644 = scmp.ne.s32.totalorder %s627, %s643
      %p645 = scmp.eq.s32.totalorder %s40, 0
      %p646 = por %p644, %p645
      %s648 = sadd.s32 %s647, 1
      %p651 = scmp.eq.s32.totalorder %s34, 3
      %p652 = scmp.ne.s32.totalorder %s647, %s649
      %p653 = scmp.eq.s32.totalorder %s34, 0
      %p654 = por %p652, %p653
      %p655 = scmp.ne.s32.totalorder %s647, %s649
      %p656 = scmp.eq.s32.totalorder %s39, 3
      %p657 = por %p655, %p656
      %p658 = scmp.ne.s32.totalorder %s649, %s650
      %p659 = scmp.eq.s32.totalorder %s39, 0
      %p660 = por %p658, %p659
      %p661 = scmp.ne.s32.totalorder %s649, %s650
      %p662 = scmp.eq.s32.totalorder %s40, 3
      %p663 = por %p661, %p662
      %p665 = scmp.ne.s32.totalorder %s650, %s664
      %p666 = scmp.eq.s32.totalorder %s40, 0
      %p667 = por %p665, %p666
      %s669 = sadd.s32 %s668, 1
      %p672 = scmp.eq.s32.totalorder %s34, 3
      %p673 = scmp.ne.s32.totalorder %s668, %s670
      %p674 = scmp.eq.s32.totalorder %s34, 0
      %p675 = por %p673, %p674
      %p676 = scmp.ne.s32.totalorder %s668, %s670
      %p677 = scmp.eq.s32.totalorder %s39, 3
      %p678 = por %p676, %p677
      %p679 = scmp.ne.s32.totalorder %s670, %s671
      %p680 = scmp.eq.s32.totalorder %s39, 0
      %p681 = por %p679, %p680
      %p682 = scmp.ne.s32.totalorder %s670, %s671
      %p683 = scmp.eq.s32.totalorder %s40, 3
      %p684 = por %p682, %p683
      %p686 = scmp.ne.s32.totalorder %s671, %s685
      %p687 = scmp.eq.s32.totalorder %s40, 0
      %p688 = por %p686, %p687
      %s689 = ssub.s32 %s41, %s53
      %p690 = scmp.eq.s32.totalorder %s689, 0
      %s692 = sadd.s32 %s691, 1
      %s693 = scalar_select %p690, %s691, %s692
      %p696 = pneg %p690
      %p697 = scmp.eq.s32.totalorder %s34, 3
      %p698 = por %p696, %p697
      %p699 = scmp.ne.s32.totalorder %s691, %s694
      %p700 = scmp.eq.s32.totalorder %s34, 0
      %p701 = por %p699, %p700
      %p702 = scmp.ne.s32.totalorder %s691, %s694
      %p703 = scmp.eq.s32.totalorder %s39, 3
      %p704 = por %p702, %p703
      %p705 = scmp.ne.s32.totalorder %s694, %s695
      %p706 = scmp.eq.s32.totalorder %s39, 0
      %p707 = por %p705, %p706
      %p708 = scmp.ne.s32.totalorder %s694, %s695
      %p709 = scmp.eq.s32.totalorder %s40, 3
      %p710 = por %p708, %p709
      %p712 = scmp.ne.s32.totalorder %s695, %s711
      %p713 = scmp.eq.s32.totalorder %s40, 0
      %p714 = por %p712, %p713
      %p715 = scmp.le.s32.totalorder 1, %s34
      %p716 = scmp.lt.s32.totalorder %s34, 5
      %p717 = pnand %p715, %p716
      %p718 = pneg %p717
      // Predicated region
      $region9: #{vit_captioning_forward.3} parent=5 // pred_check
        _
      $region10: #{vit_captioning_forward.3} parent=5 // pred_check_branch
        %720 = sbr.rel (%p717) target = $region12
      $region11: #{vit_captioning_forward.3} parent=5 // pred_region
        %s721 = ssub.s32 %s34, 1
        // Predicated region
        $region13: #{vit_captioning_forward.3} parent=11 // pred_check
          %p722 = pneg %p119
        $region14: #{vit_captioning_forward.3} parent=11 // pred_check_branch
          %724 = sbr.rel (%p722) target = $region16
        $region15: #{vit_captioning_forward.3} parent=11 // pred_region
          _
        $region16: #{vit_captioning_forward.3} parent=11 // pred_fallthru
          _
        // Predicated region
        $region17: #{vit_captioning_forward.3} parent=11 // pred_check
          %p725 = pneg %p660
        $region18: #{vit_captioning_forward.3} parent=11 // pred_check_branch
          %727 = sbr.rel (%p725) target = $region20
        $region19: #{vit_captioning_forward.3} parent=11 // pred_region
          _
        $region20: #{vit_captioning_forward.3} parent=11 // pred_fallthru
          _
        // Predicated region
        $region21: #{vit_captioning_forward.3} parent=11 // pred_check
          %p728 = pneg %p681
        $region22: #{vit_captioning_forward.3} parent=11 // pred_check_branch
          %730 = sbr.rel (%p728) target = $region24
        $region23: #{vit_captioning_forward.3} parent=11 // pred_region
          _
        $region24: #{vit_captioning_forward.3} parent=11 // pred_fallthru
          _
      $region12: #{vit_captioning_forward.3} parent=5 // pred_fallthru
        _
      %p731 = scmp.lt.s32.totalorder %s34, 4
      // Predicated region
      $region25: #{vit_captioning_forward.3} parent=5 // pred_check
        %p732 = pneg %p731
      $region26: #{vit_captioning_forward.3} parent=5 // pred_check_branch
        %734 = sbr.rel (%p732) target = $region28
      $region27: #{vit_captioning_forward.3} parent=5 // pred_region
        // Predicated region
        $region29: #{vit_captioning_forward.3} parent=27 // pred_check
          %p735 = pneg %p66
        $region30: #{vit_captioning_forward.3} parent=27 // pred_check_branch
          %737 = sbr.rel (%p735) target = $region32
        $region31: #{vit_captioning_forward.3} parent=27 // pred_region
          %p738 = scmp.lt.s32.totalorder %s41, 1
          %s739 = scalar_select %p738, %s41, 1
          %s740 = smul.addr %s739, 8
          %s741 = scalar_lea.vmem %s0, %s740
        $region32: #{vit_captioning_forward.3} parent=27 // pred_fallthru
          _
        // Predicated region
        $region33: #{vit_captioning_forward.3} parent=27 // pred_check
          %p742 = pneg %p92
        $region34: #{vit_captioning_forward.3} parent=27 // pred_check_branch
          %744 = sbr.rel (%p742) target = $region36
        $region35: #{vit_captioning_forward.3} parent=27 // pred_region
          %p745 = scmp.lt.s32.totalorder %s41, 1
          %s746 = scalar_select %p745, %s41, 1
          %s747 = smul.addr %s746, 8
          %s748 = scalar_lea.vmem %s1, %s747
        $region36: #{vit_captioning_forward.3} parent=27 // pred_fallthru
          _
        // Predicated region
        $region37: #{vit_captioning_forward.3} parent=27 // pred_check
          %p749 = pneg %p139
        $region38: #{vit_captioning_forward.3} parent=27 // pred_check_branch
          %751 = sbr.rel (%p749) target = $region40
        $region39: #{vit_captioning_forward.3} parent=27 // pred_region
          %p752 = scmp.lt.s32.totalorder %s42, 1
          %s753 = scalar_select %p752, %s42, 1
          %s754 = smul.addr %s753, 4
          %s755 = smul.addr %s754, 4
          %s756 = scalar_lea.vmem %s3, %s755
        $region40: #{vit_captioning_forward.3} parent=27 // pred_fallthru
          _
        // Predicated region
        $region41: #{vit_captioning_forward.3} parent=27 // pred_check
          %p757 = pneg %p165
        $region42: #{vit_captioning_forward.3} parent=27 // pred_check_branch
          %759 = sbr.rel (%p757) target = $region44
        $region43: #{vit_captioning_forward.3} parent=27 // pred_region
          %p760 = scmp.lt.s32.totalorder %s42, 1
          %s761 = scalar_select %p760, %s42, 1
          %s762 = scalar_lea.vmem %s4, %s761
        $region44: #{vit_captioning_forward.3} parent=27 // pred_fallthru
          _
        // Predicated region
        $region45: #{vit_captioning_forward.3} parent=27 // pred_check
          %p763 = pneg %p191
        $region46: #{vit_captioning_forward.3} parent=27 // pred_check_branch
          %765 = sbr.rel (%p763) target = $region48
        $region47: #{vit_captioning_forward.3} parent=27 // pred_region
          %p766 = scmp.lt.s32.totalorder %s42, 1
          %s767 = scalar_select %p766, %s42, 1
          %s768 = smul.addr %s767, 4
          %s769 = smul.addr %s768, 4
          %s770 = scalar_lea.vmem %s5, %s769
        $region48: #{vit_captioning_forward.3} parent=27 // pred_fallthru
          _
        // Predicated region
        $region49: #{vit_captioning_forward.3} parent=27 // pred_check
          %p771 = pneg %p217
        $region50: #{vit_captioning_forward.3} parent=27 // pred_check_branch
          %773 = sbr.rel (%p771) target = $region52
        $region51: #{vit_captioning_forward.3} parent=27 // pred_region
          %p774 = scmp.lt.s32.totalorder %s42, 1
          %s775 = scalar_select %p774, %s42, 1
          %s776 = scalar_lea.vmem %s6, %s775
        $region52: #{vit_captioning_forward.3} parent=27 // pred_fallthru
          _
        // Predicated region
        $region53: #{vit_captioning_forward.3} parent=27 // pred_check
          %p777 = pneg %p243
        $region54: #{vit_captioning_forward.3} parent=27 // pred_check_branch
          %779 = sbr.rel (%p777) target = $region56
        $region55: #{vit_captioning_forward.3} parent=27 // pred_region
          %p780 = scmp.lt.s32.totalorder %s42, 1
          %s781 = scalar_select %p780, %s42, 1
          %s782 = scalar_lea.vmem %s7, %s781
        $region56: #{vit_captioning_forward.3} parent=27 // pred_fallthru
          _
        // Predicated region
        $region57: #{vit_captioning_forward.3} parent=27 // pred_check
          %p783 = pneg %p269
        $region58: #{vit_captioning_forward.3} parent=27 // pred_check_branch
          %785 = sbr.rel (%p783) target = $region60
        $region59: #{vit_captioning_forward.3} parent=27 // pred_region
          %p786 = scmp.lt.s32.totalorder %s42, 1
          %s787 = scalar_select %p786, %s42, 1
          %s788 = scalar_lea.vmem %s8, %s787
        $region60: #{vit_captioning_forward.3} parent=27 // pred_fallthru
          _
        // Predicated region
        $region61: #{vit_captioning_forward.3} parent=27 // pred_check
          %p789 = pneg %p295
        $region62: #{vit_captioning_forward.3} parent=27 // pred_check_branch
          %791 = sbr.rel (%p789) target = $region64
        $region63: #{vit_captioning_forward.3} parent=27 // pred_region
          %p792 = scmp.lt.s32.totalorder %s42, 1
          %s793 = scalar_select %p792, %s42, 1
          %s794 = smul.addr %s793, 4
          %s795 = smul.addr %s794, 4
          %s796 = scalar_lea.vmem %s9, %s795
        $region64: #{vit_captioning_forward.3} parent=27 // pred_fallthru
          _
        // Predicated region
        $region65: #{vit_captioning_forward.3} parent=27 // pred_check
          %p797 = pneg %p321
        $region66: #{vit_captioning_forward.3} parent=27 // pred_check_branch
          %799 = sbr.rel (%p797) target = $region68
        $region67: #{vit_captioning_forward.3} parent=27 // pred_region
          %p800 = scmp.lt.s32.totalorder %s42, 1
          %s801 = scalar_select %p800, %s42, 1
          %s802 = scalar_lea.vmem %s10, %s801
        $region68: #{vit_captioning_forward.3} parent=27 // pred_fallthru
          _
        // Predicated region
        $region69: #{vit_captioning_forward.3} parent=27 // pred_check
          %p803 = pneg %p347
        $region70: #{vit_captioning_forward.3} parent=27 // pred_check_branch
          %805 = sbr.rel (%p803) target = $region72
        $region71: #{vit_captioning_forward.3} parent=27 // pred_region
          %p806 = scmp.lt.s32.totalorder %s42, 1
          %s807 = scalar_select %p806, %s42, 1
          %s808 = smul.addr %s807, 4
          %s809 = smul.addr %s808, 4
          %s810 = scalar_lea.vmem %s11, %s809
        $region72: #{vit_captioning_forward.3} parent=27 // pred_fallthru
          _
        // Predicated region
        $region73: #{vit_captioning_forward.3} parent=27 // pred_check
          %p811 = pneg %p373
        $region74: #{vit_captioning_forward.3} parent=27 // pred_check_branch
          %813 = sbr.rel (%p811) target = $region76
        $region75: #{vit_captioning_forward.3} parent=27 // pred_region
          %p814 = scmp.lt.s32.totalorder %s42, 1
          %s815 = scalar_select %p814, %s42, 1
          %s816 = scalar_lea.vmem %s12, %s815
        $region76: #{vit_captioning_forward.3} parent=27 // pred_fallthru
          _
        // Predicated region
        $region77: #{vit_captioning_forward.3} parent=27 // pred_check
          %p817 = pneg %p399
        $region78: #{vit_captioning_forward.3} parent=27 // pred_check_branch
          %819 = sbr.rel (%p817) target = $region80
        $region79: #{vit_captioning_forward.3} parent=27 // pred_region
          %p820 = scmp.lt.s32.totalorder %s42, 1
          %s821 = scalar_select %p820, %s42, 1
          %s822 = smul.addr %s821, 4
          %s823 = smul.addr %s822, 4
          %s824 = scalar_lea.vmem %s13, %s823
        $region80: #{vit_captioning_forward.3} parent=27 // pred_fallthru
          _
        // Predicated region
        $region81: #{vit_captioning_forward.3} parent=27 // pred_check
          %p825 = pneg %p425
        $region82: #{vit_captioning_forward.3} parent=27 // pred_check_branch
          %827 = sbr.rel (%p825) target = $region84
        $region83: #{vit_captioning_forward.3} parent=27 // pred_region
          %p828 = scmp.lt.s32.totalorder %s42, 1
          %s829 = scalar_select %p828, %s42, 1
          %s830 = scalar_lea.vmem %s14, %s829
        $region84: #{vit_captioning_forward.3} parent=27 // pred_fallthru
          _
        // Predicated region
        $region85: #{vit_captioning_forward.3} parent=27 // pred_check
          %p831 = pneg %p451
        $region86: #{vit_captioning_forward.3} parent=27 // pred_check_branch
          %833 = sbr.rel (%p831) target = $region88
        $region87: #{vit_captioning_forward.3} parent=27 // pred_region
          %p834 = scmp.lt.s32.totalorder %s42, 1
          %s835 = scalar_select %p834, %s42, 1
          %s836 = scalar_lea.vmem %s15, %s835
        $region88: #{vit_captioning_forward.3} parent=27 // pred_fallthru
          _
        // Predicated region
        $region89: #{vit_captioning_forward.3} parent=27 // pred_check
          %p837 = pneg %p477
        $region90: #{vit_captioning_forward.3} parent=27 // pred_check_branch
          %839 = sbr.rel (%p837) target = $region92
        $region91: #{vit_captioning_forward.3} parent=27 // pred_region
          %p840 = scmp.lt.s32.totalorder %s42, 1
          %s841 = scalar_select %p840, %s42, 1
          %s842 = scalar_lea.vmem %s16, %s841
        $region92: #{vit_captioning_forward.3} parent=27 // pred_fallthru
          _
        // Predicated region
        $region93: #{vit_captioning_forward.3} parent=27 // pred_check
          %p843 = pneg %p503
        $region94: #{vit_captioning_forward.3} parent=27 // pred_check_branch
          %845 = sbr.rel (%p843) target = $region96
        $region95: #{vit_captioning_forward.3} parent=27 // pred_region
          %p846 = scmp.lt.s32.totalorder %s42, 1
          %s847 = scalar_select %p846, %s42, 1
          %s848 = smul.addr %s847, 4
          %s849 = smul.addr %s848, 4
          %s850 = scalar_lea.vmem %s17, %s849
        $region96: #{vit_captioning_forward.3} parent=27 // pred_fallthru
          _
        // Predicated region
        $region97: #{vit_captioning_forward.3} parent=27 // pred_check
          %p851 = pneg %p529
        $region98: #{vit_captioning_forward.3} parent=27 // pred_check_branch
          %853 = sbr.rel (%p851) target = $region100
        $region99: #{vit_captioning_forward.3} parent=27 // pred_region
          %p854 = scmp.lt.s32.totalorder %s42, 1
          %s855 = scalar_select %p854, %s42, 1
          %s856 = scalar_lea.vmem %s18, %s855
        $region100: #{vit_captioning_forward.3} parent=27 // pred_fallthru
          _
        // Predicated region
        $region101: #{vit_captioning_forward.3} parent=27 // pred_check
          %p857 = pneg %p555
        $region102: #{vit_captioning_forward.3} parent=27 // pred_check_branch
          %859 = sbr.rel (%p857) target = $region104
        $region103: #{vit_captioning_forward.3} parent=27 // pred_region
          %p860 = scmp.lt.s32.totalorder %s42, 1
          %s861 = scalar_select %p860, %s42, 1
          %s862 = smul.addr %s861, 8
          %s863 = smul.addr %s862, 4
          %s864 = scalar_lea.vmem %s19, %s863
        $region104: #{vit_captioning_forward.3} parent=27 // pred_fallthru
          _
        // Predicated region
        $region105: #{vit_captioning_forward.3} parent=27 // pred_check
          %p865 = pneg %p581
        $region106: #{vit_captioning_forward.3} parent=27 // pred_check_branch
          %867 = sbr.rel (%p865) target = $region108
        $region107: #{vit_captioning_forward.3} parent=27 // pred_region
          %p868 = scmp.lt.s32.totalorder %s42, 1
          %s869 = scalar_select %p868, %s42, 1
          %s870 = scalar_lea.vmem %s20, %s869
        $region108: #{vit_captioning_forward.3} parent=27 // pred_fallthru
          _
        // Predicated region
        $region109: #{vit_captioning_forward.3} parent=27 // pred_check
          %p871 = pneg %p607
        $region110: #{vit_captioning_forward.3} parent=27 // pred_check_branch
          %873 = sbr.rel (%p871) target = $region112
        $region111: #{vit_captioning_forward.3} parent=27 // pred_region
          %p874 = scmp.lt.s32.totalorder %s42, 1
          %s875 = scalar_select %p874, %s42, 1
          %s876 = scalar_lea.vmem %s21, %s875
        $region112: #{vit_captioning_forward.3} parent=27 // pred_fallthru
          _
        // Predicated region
        $region113: #{vit_captioning_forward.3} parent=27 // pred_check
          %p877 = pneg %p633
        $region114: #{vit_captioning_forward.3} parent=27 // pred_check_branch
          %879 = sbr.rel (%p877) target = $region116
        $region115: #{vit_captioning_forward.3} parent=27 // pred_region
          %p880 = scmp.lt.s32.totalorder %s42, 1
          %s881 = scalar_select %p880, %s42, 1
          %s882 = scalar_lea.vmem %s22, %s881
        $region116: #{vit_captioning_forward.3} parent=27 // pred_fallthru
          _
      $region28: #{vit_captioning_forward.3} parent=5 // pred_fallthru
        _
      %p883 = scmp.le.s32.totalorder 1, %s34
      %p884 = scmp.lt.s32.totalorder %s34, 5
      %p885 = pnand %p883, %p884
      %p886 = pneg %p885
      // Predicated region
      $region117: #{vit_captioning_forward.3} parent=5 // pred_check
        _
      $region118: #{vit_captioning_forward.3} parent=5 // pred_check_branch
        %888 = sbr.rel (%p885) target = $region120
      $region119: #{vit_captioning_forward.3} parent=5 // pred_region
        %s889 = ssub.s32 %s34, 1
        %p890 = scmp.lt.s32.totalorder %s43, 1
        %s891 = scalar_select %p890, %s43, 1
        %s892 = smul.addr %s891, 8
        %s893 = scalar_lea.vmem %s0, %s892
        %p894 = pneg %p72
        %p895 = pneg %p69
        %p896 = scmp.lt.s32.totalorder %s43, 1
        %s897 = scalar_select %p896, %s43, 1
        %s898 = smul.addr %s897, 8
        %s899 = scalar_lea.vmem %s1, %s898
        %p900 = pneg %p98
        %p901 = pneg %p95
        %p902 = pneg %p119
        %p903 = pneg %p116
        %p904 = scmp.lt.s32.totalorder %s44, 1
        %s905 = scalar_select %p904, %s44, 1
        %s906 = smul.addr %s905, 4
        %s907 = smul.addr %s906, 4
        %s908 = scalar_lea.vmem %s3, %s907
        %p909 = pneg %p145
        %p910 = pneg %p142
        %p911 = scmp.lt.s32.totalorder %s44, 1
        %s912 = scalar_select %p911, %s44, 1
        %s913 = scalar_lea.vmem %s4, %s912
        %p914 = pneg %p171
        %p915 = pneg %p168
        %p916 = scmp.lt.s32.totalorder %s44, 1
        %s917 = scalar_select %p916, %s44, 1
        %s918 = smul.addr %s917, 4
        %s919 = smul.addr %s918, 4
        %s920 = scalar_lea.vmem %s5, %s919
        %p921 = pneg %p197
        %p922 = pneg %p194
        %p923 = scmp.lt.s32.totalorder %s44, 1
        %s924 = scalar_select %p923, %s44, 1
        %s925 = scalar_lea.vmem %s6, %s924
        %p926 = pneg %p223
        %p927 = pneg %p220
        %p928 = scmp.lt.s32.totalorder %s44, 1
        %s929 = scalar_select %p928, %s44, 1
        %s930 = scalar_lea.vmem %s7, %s929
        %p931 = pneg %p249
        %p932 = pneg %p246
        %p933 = scmp.lt.s32.totalorder %s44, 1
        %s934 = scalar_select %p933, %s44, 1
        %s935 = scalar_lea.vmem %s8, %s934
        %p936 = pneg %p275
        %p937 = pneg %p272
        %p938 = scmp.lt.s32.totalorder %s44, 1
        %s939 = scalar_select %p938, %s44, 1
        %s940 = smul.addr %s939, 4
        %s941 = smul.addr %s940, 4
        %s942 = scalar_lea.vmem %s9, %s941
        %p943 = pneg %p301
        %p944 = pneg %p298
        %p945 = scmp.lt.s32.totalorder %s44, 1
        %s946 = scalar_select %p945, %s44, 1
        %s947 = scalar_lea.vmem %s10, %s946
        %p948 = pneg %p327
        %p949 = pneg %p324
        %p950 = scmp.lt.s32.totalorder %s44, 1
        %s951 = scalar_select %p950, %s44, 1
        %s952 = smul.addr %s951, 4
        %s953 = smul.addr %s952, 4
        %s954 = scalar_lea.vmem %s11, %s953
        %p955 = pneg %p353
        %p956 = pneg %p350
        %p957 = scmp.lt.s32.totalorder %s44, 1
        %s958 = scalar_select %p957, %s44, 1
        %s959 = scalar_lea.vmem %s12, %s958
        %p960 = pneg %p379
        %p961 = pneg %p376
        %p962 = scmp.lt.s32.totalorder %s44, 1
        %s963 = scalar_select %p962, %s44, 1
        %s964 = smul.addr %s963, 4
        %s965 = smul.addr %s964, 4
        %s966 = scalar_lea.vmem %s13, %s965
        %p967 = pneg %p405
        %p968 = pneg %p402
        %p969 = scmp.lt.s32.totalorder %s44, 1
        %s970 = scalar_select %p969, %s44, 1
        %s971 = scalar_lea.vmem %s14, %s970
        %p972 = pneg %p431
        %p973 = pneg %p428
        %p974 = scmp.lt.s32.totalorder %s44, 1
        %s975 = scalar_select %p974, %s44, 1
        %s976 = scalar_lea.vmem %s15, %s975
        %p977 = pneg %p457
        %p978 = pneg %p454
        %p979 = scmp.lt.s32.totalorder %s44, 1
        %s980 = scalar_select %p979, %s44, 1
        %s981 = scalar_lea.vmem %s16, %s980
        %p982 = pneg %p483
        %p983 = pneg %p480
        %p984 = scmp.lt.s32.totalorder %s44, 1
        %s985 = scalar_select %p984, %s44, 1
        %s986 = smul.addr %s985, 4
        %s987 = smul.addr %s986, 4
        %s988 = scalar_lea.vmem %s17, %s987
        %p989 = pneg %p509
        %p990 = pneg %p506
        %p991 = scmp.lt.s32.totalorder %s44, 1
        %s992 = scalar_select %p991, %s44, 1
        %s993 = scalar_lea.vmem %s18, %s992
        %p994 = pneg %p535
        %p995 = pneg %p532
        %p996 = scmp.lt.s32.totalorder %s44, 1
        %s997 = scalar_select %p996, %s44, 1
        %s998 = smul.addr %s997, 8
        %s999 = smul.addr %s998, 4
        %s1000 = scalar_lea.vmem %s19, %s999
        %p1001 = pneg %p561
        %p1002 = pneg %p558
        %p1003 = scmp.lt.s32.totalorder %s44, 1
        %s1004 = scalar_select %p1003, %s44, 1
        %s1005 = scalar_lea.vmem %s20, %s1004
        %p1006 = pneg %p587
        %p1007 = pneg %p584
        %p1008 = scmp.lt.s32.totalorder %s44, 1
        %s1009 = scalar_select %p1008, %s44, 1
        %s1010 = scalar_lea.vmem %s21, %s1009
        %p1011 = pneg %p613
        %p1012 = pneg %p610
        %p1013 = scmp.lt.s32.totalorder %s44, 1
        %s1014 = scalar_select %p1013, %s44, 1
        %s1015 = scalar_lea.vmem %s22, %s1014
        %p1016 = pneg %p639
        %p1017 = pneg %p636
        %p1018 = pneg %p660
        %p1019 = pneg %p657
        %p1020 = pneg %p681
        %p1021 = pneg %p678
        %p1022 = pneg %p707
        %p1023 = pneg %p704
        %s1024 = sand.u32 %s694, 1
        %s1025 = scalar_lea.sflag [#allocation4], %s1024
        %s1026 = sand.u32 %s694, 1
        %s1027 = smul.addr %s1026, 8
        %s1028 = scalar_lea.vmem [#allocation3], %s1027
        %p1029 = scmp.lt.s32.totalorder %s43, 1
        %s1030 = scalar_select %p1029, %s43, 1
        %s1031 = smul.addr %s1030, 8
        %s1032 = scalar_lea.vmem %s0, %s1031
        %p1033 = scmp.lt.s32.totalorder %s43, 1
        %s1034 = scalar_select %p1033, %s43, 1
        %s1035 = smul.addr %s1034, 8
        %s1036 = scalar_lea.vmem %s1, %s1035
        %p1037 = scmp.lt.s32.totalorder %s44, 1
        %s1038 = scalar_select %p1037, %s44, 1
        %s1039 = smul.addr %s1038, 4
        %s1040 = smul.addr %s1039, 4
        %s1041 = scalar_lea.vmem %s3, %s1040
        %p1042 = scmp.lt.s32.totalorder %s44, 1
        %s1043 = scalar_select %p1042, %s44, 1
        %s1044 = scalar_lea.vmem %s4, %s1043
        %p1045 = scmp.lt.s32.totalorder %s44, 1
        %s1046 = scalar_select %p1045, %s44, 1
        %s1047 = smul.addr %s1046, 4
        %s1048 = smul.addr %s1047, 4
        %s1049 = scalar_lea.vmem %s5, %s1048
        %p1050 = scmp.lt.s32.totalorder %s44, 1
        %s1051 = scalar_select %p1050, %s44, 1
        %s1052 = scalar_lea.vmem %s6, %s1051
        %p1053 = scmp.lt.s32.totalorder %s44, 1
        %s1054 = scalar_select %p1053, %s44, 1
        %s1055 = scalar_lea.vmem %s7, %s1054
        %p1056 = scmp.lt.s32.totalorder %s44, 1
        %s1057 = scalar_select %p1056, %s44, 1
        %s1058 = scalar_lea.vmem %s8, %s1057
        %p1059 = scmp.lt.s32.totalorder %s44, 1
        %s1060 = scalar_select %p1059, %s44, 1
        %s1061 = smul.addr %s1060, 4
        %s1062 = smul.addr %s1061, 4
        %s1063 = scalar_lea.vmem %s9, %s1062
        %p1064 = scmp.lt.s32.totalorder %s44, 1
        %s1065 = scalar_select %p1064, %s44, 1
        %s1066 = scalar_lea.vmem %s10, %s1065
        %p1067 = scmp.lt.s32.totalorder %s44, 1
        %s1068 = scalar_select %p1067, %s44, 1
        %s1069 = smul.addr %s1068, 4
        %s1070 = smul.addr %s1069, 4
        %s1071 = scalar_lea.vmem %s11, %s1070
        %p1072 = scmp.lt.s32.totalorder %s44, 1
        %s1073 = scalar_select %p1072, %s44, 1
        %s1074 = scalar_lea.vmem %s12, %s1073
        %p1075 = scmp.lt.s32.totalorder %s44, 1
        %s1076 = scalar_select %p1075, %s44, 1
        %s1077 = smul.addr %s1076, 4
        %s1078 = smul.addr %s1077, 4
        %s1079 = scalar_lea.vmem %s13, %s1078
        %p1080 = scmp.lt.s32.totalorder %s44, 1
        %s1081 = scalar_select %p1080, %s44, 1
        %s1082 = scalar_lea.vmem %s14, %s1081
        %p1083 = scmp.lt.s32.totalorder %s44, 1
        %s1084 = scalar_select %p1083, %s44, 1
        %s1085 = scalar_lea.vmem %s15, %s1084
        %p1086 = scmp.lt.s32.totalorder %s44, 1
        %s1087 = scalar_select %p1086, %s44, 1
        %s1088 = scalar_lea.vmem %s16, %s1087
        %p1089 = scmp.lt.s32.totalorder %s44, 1
        %s1090 = scalar_select %p1089, %s44, 1
        %s1091 = smul.addr %s1090, 4
        %s1092 = smul.addr %s1091, 4
        %s1093 = scalar_lea.vmem %s17, %s1092
        %p1094 = scmp.lt.s32.totalorder %s44, 1
        %s1095 = scalar_select %p1094, %s44, 1
        %s1096 = scalar_lea.vmem %s18, %s1095
        %p1097 = scmp.lt.s32.totalorder %s44, 1
        %s1098 = scalar_select %p1097, %s44, 1
        %s1099 = smul.addr %s1098, 8
        %s1100 = smul.addr %s1099, 4
        %s1101 = scalar_lea.vmem %s19, %s1100
        %p1102 = scmp.lt.s32.totalorder %s44, 1
        %s1103 = scalar_select %p1102, %s44, 1
        %s1104 = scalar_lea.vmem %s20, %s1103
        %p1105 = scmp.lt.s32.totalorder %s44, 1
        %s1106 = scalar_select %p1105, %s44, 1
        %s1107 = scalar_lea.vmem %s21, %s1106
        %p1108 = scmp.lt.s32.totalorder %s44, 1
        %s1109 = scalar_select %p1108, %s44, 1
        %s1110 = scalar_lea.vmem %s22, %s1109
        %p1112 = scmp.eq.s32.totalorder %s44, 0
        // Predicated region
        $region121: #{vit_captioning_forward.3} parent=119 // pred_check
          %p1113 = pneg %p1112
        $region122: #{vit_captioning_forward.3} parent=119 // pred_check_branch
          %1115 = sbr.rel (%p1113) target = $region124
        $region123: #{vit_captioning_forward.3} parent=119 // pred_region
          %v1116 = vld [vmem:[%s1032] sm:$0xff]
          %vm1117 = vcmask 261120
          %1118 = vst.msk [vmem:[#allocation2] sm:$0xff] %vm1117, %v1116
        $region124: #{vit_captioning_forward.3} parent=119 // pred_fallthru
          _
        %v1119 = vld [vmem:[#allocation2] sm:$0xff]
        %v1120 = vld [vmem:[%s1036] sm:$0x1f]
        %v1121 = vld [vmem:[%s2] sm:$0xff]
        %v1122 = vld [vmem:[%s1041] sm:$0xf]
        %v1123 = vld [vmem:[%s1041 + $0x4] sm:$0xf]
        %v1124 = vld [vmem:[%s1041 + $0x8] sm:$0xf]
        %v1125 = vld [vmem:[%s1041 + $0xc] sm:$0xf]
        %v1126 = vld [vmem:[%s1044] sm:$0x1]
        %v1127 = vld [vmem:[%s1049] sm:$0xf]
        %v1128 = vld [vmem:[%s1049 + $0x4] sm:$0xf]
        %v1129 = vld [vmem:[%s1049 + $0x8] sm:$0xf]
        %v1130 = vld [vmem:[%s1049 + $0xc] sm:$0xf]
        %v1131 = vld [vmem:[%s1052] sm:$0x1]
        %v1132 = vpack.c.bf16 %v1119, %v1119
        %v1134 = vlaneseq
        %v1135 = vshrl.u32 %v1134, 7
        %v1136 = vsub.s32 0, %v1135
        %v1137 = vrot.slane %v1126, %v1136
        %v1143 = vunpack.c.l.b16 %v1122
        %v1144 = vunpack.c.l.b16 %v1123
        %v1145 = vunpack.c.l.b16 %v1124
        %v1146 = vunpack.c.l.b16 %v1125
        %v1147 = vpack.c.b16 %v1144, %v1143
        %v1148 = vpack.c.b16 %v1146, %v1145
        %vm1151 = vcmask 261120
        %v1153 = vsel %vm1151, %v1132, 0
        %1155 = vmatprep.subr.bf16.mxu0 0
        %1156 = vmatpush1.bf16.msra.mxu0 0
        %1157 = vmatprep.subr.bf16.mxu0 0
        %1158 = vmatpush1.bf16.msra.mxu0 0
        %1159 = vmatprep.subr.bf16.mxu0 0
        %1160 = vmatpush1.bf16.msra.mxu0 0
        %1161 = vmatprep.subr.bf16.mxu0 0
        %1162 = vmatpush1.bf16.msra.mxu0 0
        %1163 = vmatprep.subr.bf16.mxu0 0
        %1164 = vmatpush1.bf16.msra.mxu0 0
        %1165 = vmatprep.subr.bf16.mxu0 0
        %1166 = vmatpush1.bf16.msra.mxu0 0
        %1167 = vmatprep.subr.bf16.mxu0 0
        %1168 = vmatpush1.bf16.msra.mxu0 %v1148
        %1169 = vmatprep.subr.bf16.mxu0 0
        %1170 = vmatpush1.bf16.msra.mxu0 %v1147
        %1171 = vmatprep.subr.bf16.mxu0 0
        %1172 = vmatpush2.bf16.msra.mxu0 0
        %1173 = vmatprep.subr.bf16.mxu0 0
        %1174 = vmatpush2.bf16.msra.mxu0 0
        %1175 = vmatprep.subr.bf16.mxu0 0
        %1176 = vmatpush2.bf16.msra.mxu0 0
        %1177 = vmatprep.subr.bf16.mxu0 0
        %1178 = vmatpush2.bf16.msra.mxu0 0
        %1179 = vmatprep.subr.bf16.mxu0 0
        %1180 = vmatpush2.bf16.msra.mxu0 0
        %1181 = vmatprep.subr.bf16.mxu0 0
        %1182 = vmatpush2.bf16.msra.mxu0 0
        %1183 = vmatprep.subr.bf16.mxu0 0
        %1184 = vmatpush2.bf16.msra.mxu0 0
        %1185 = vmatprep.subr.bf16.mxu0 0
        %1186 = vmatpush2.bf16.msra.mxu0 0
        %1187 = vmatprep.mubr.bf16.mxu0 0
        %1188 = vmatmul.mubr.bf16.gmra.mxu0 %v1153
        %v1189 = vpop.f32.mrf.mxu0
        %v1190 = vadd.f32 %v1137, %v1189
        %v1191 = vpop.f32.mrf.mxu0
        %v1192 = vpop.f32.mrf.mxu0
        %v1193 = vpop.f32.mrf.mxu0
        %1194 = vdwg.mxu0
        %v1195 = vmul.f32 %v1190, 0.35355338
        %v1196 = vpack.c.bf16 %v1195, %v1195
        %v1197 = vpack.c.bf16 %v1190, %v1190
        %1199 = vrot.lane.b32.xlu0 %v1197, 96
        %v1200 = vpop.permute.xlu0 %1199
        %vm1201 = vcmask 64512
        %v1203 = vsel %vm1201, %v1196, 0
        %v1206 = vsel %vm1201, %v1200, 0
        %1208 = vmatprep.subr.bf16.mxu0 0
        %1209 = vmatpush1.bf16.xpose.msra.mxu0 0
        %1210 = vmatprep.subr.bf16.mxu0 0
        %1211 = vmatpush1.bf16.xpose.msra.mxu0 0
        %1212 = vmatprep.subr.bf16.mxu0 0
        %1213 = vmatpush1.bf16.xpose.msra.mxu0 0
        %1214 = vmatprep.subr.bf16.mxu0 0
        %1215 = vmatpush1.bf16.xpose.msra.mxu0 0
        %1216 = vmatprep.subr.bf16.mxu0 0
        %1217 = vmatpush1.bf16.xpose.msra.mxu0 0
        %1218 = vmatprep.subr.bf16.mxu0 0
        %1219 = vmatpush1.bf16.xpose.msra.mxu0 0
        %1220 = vmatprep.subr.bf16.mxu0 0
        %1221 = vmatpush1.bf16.xpose.msra.mxu0 0
        %1222 = vmatprep.subr.bf16.mxu0 0
        %1223 = vmatpush1.bf16.xpose.msra.mxu0 %v1206
        %1224 = vmatprep.subr.bf16.mxu0 0
        %1225 = vmatpush2.bf16.xpose.msra.mxu0 0
        %1226 = vmatprep.subr.bf16.mxu0 0
        %1227 = vmatpush2.bf16.xpose.msra.mxu0 0
        %1228 = vmatprep.subr.bf16.mxu0 0
        %1229 = vmatpush2.bf16.xpose.msra.mxu0 0
        %1230 = vmatprep.subr.bf16.mxu0 0
        %1231 = vmatpush2.bf16.xpose.msra.mxu0 0
        %1232 = vmatprep.subr.bf16.mxu0 0
        %1233 = vmatpush2.bf16.xpose.msra.mxu0 0
        %1234 = vmatprep.subr.bf16.mxu0 0
        %1235 = vmatpush2.bf16.xpose.msra.mxu0 0
        %1236 = vmatprep.subr.bf16.mxu0 0
        %1237 = vmatpush2.bf16.xpose.msra.mxu0 0
        %1238 = vmatprep.subr.bf16.mxu0 0
        %1239 = vmatpush2.bf16.xpose.msra.mxu0 0
        %1240 = vmatprep.mubr.bf16.mxu0 0
        %1241 = vmatmul.mubr.bf16.gmra.mxu0 %v1203
        %v1242 = vpop.f32.mrf.mxu0
        %v1243 = vadd.f32 %v1121, %v1242
        %v1244 = vpop.f32.mrf.mxu0
        %v1245 = vpop.f32.mrf.mxu0
        %v1246 = vpop.f32.mrf.mxu0
        %1247 = vdwg.mxu0
        %v1248 = vsel %vm1201, %v1243, -inf
        %1249 = vmax.xlane.f32.xlu0 %v1248
        %v1250 = vpop.xlane.xlu0 %1249
        %v1251 = vsub.f32 %v1243, %v1250
        %v1252 = vmul.f32 %v1251, 1.442695
        %v1253 = vpow.pop %v1252
        %v1254 = vsel %vm1201, %v1253, 0.0
        %1255 = vadd.xlane.f32.xlu0 %v1254
        %v1256 = vpop.xlane.xlu0 %1255
        %v1257 = vrcp.pop %v1256
        %v1258 = vmul.f32 %v1253, %v1257
        %v1259 = vpack.c.bf16 %v1258, %v1258
        %1260 = vrot.lane.b32.xlu0 %v1197, 64
        %v1261 = vpop.permute.xlu0 %1260
        %v1263 = vsel %vm1201, %v1259, 0
        %vm1265 = vcmask 1043456
        %v1267 = vsel %vm1265, %v1261, 0
        %1269 = vmatprep.subr.bf16.mxu0 0
        %1270 = vmatpush1.bf16.msra.mxu0 0
        %1271 = vmatprep.subr.bf16.mxu0 0
        %1272 = vmatpush1.bf16.msra.mxu0 0
        %1273 = vmatprep.subr.bf16.mxu0 0
        %1274 = vmatpush1.bf16.msra.mxu0 0
        %1275 = vmatprep.subr.bf16.mxu0 0
        %1276 = vmatpush1.bf16.msra.mxu0 0
        %1277 = vmatprep.subr.bf16.mxu0 0
        %1278 = vmatpush1.bf16.msra.mxu0 0
        %1279 = vmatprep.subr.bf16.mxu0 0
        %1280 = vmatpush1.bf16.msra.mxu0 0
        %1281 = vmatprep.subr.bf16.mxu0 0
        %1282 = vmatpush1.bf16.msra.mxu0 0
        %1283 = vmatprep.subr.bf16.mxu0 0
        %1284 = vmatpush1.bf16.msra.mxu0 %v1267
        %1285 = vmatprep.subr.bf16.mxu0 0
        %1286 = vmatpush2.bf16.msra.mxu0 0
        %1287 = vmatprep.subr.bf16.mxu0 0
        %1288 = vmatpush2.bf16.msra.mxu0 0
        %1289 = vmatprep.subr.bf16.mxu0 0
        %1290 = vmatpush2.bf16.msra.mxu0 0
        %1291 = vmatprep.subr.bf16.mxu0 0
        %1292 = vmatpush2.bf16.msra.mxu0 0
        %1293 = vmatprep.subr.bf16.mxu0 0
        %1294 = vmatpush2.bf16.msra.mxu0 0
        %1295 = vmatprep.subr.bf16.mxu0 0
        %1296 = vmatpush2.bf16.msra.mxu0 0
        %1297 = vmatprep.subr.bf16.mxu0 0
        %1298 = vmatpush2.bf16.msra.mxu0 0
        %1299 = vmatprep.subr.bf16.mxu0 0
        %1300 = vmatpush2.bf16.msra.mxu0 0
        %1301 = vmatprep.mubr.bf16.mxu0 0
        %1302 = vmatmul.mubr.bf16.gmra.mxu0 %v1263
        %v1303 = vpop.f32.mrf.mxu0
        %v1304 = vadd.f32 0.0, %v1303
        %v1305 = vpop.f32.mrf.mxu0
        %v1306 = vpop.f32.mrf.mxu0
        %v1307 = vpop.f32.mrf.mxu0
        %1308 = vdwg.mxu0
        %1310 = vrot.lane.b32.xlu0 %v1196, 120
        %v1311 = vpop.permute.xlu0 %1310
        %1312 = vrot.lane.b32.xlu0 %v1197, 88
        %v1313 = vpop.permute.xlu0 %1312
        %v1315 = vsel %vm1201, %v1311, 0
        %v1318 = vsel %vm1201, %v1313, 0
        %1320 = vmatprep.subr.bf16.mxu0 0
        %1321 = vmatpush1.bf16.xpose.msra.mxu0 0
        %1322 = vmatprep.subr.bf16.mxu0 0
        %1323 = vmatpush1.bf16.xpose.msra.mxu0 0
        %1324 = vmatprep.subr.bf16.mxu0 0
        %1325 = vmatpush1.bf16.xpose.msra.mxu0 0
        %1326 = vmatprep.subr.bf16.mxu0 0
        %1327 = vmatpush1.bf16.xpose.msra.mxu0 0
        %1328 = vmatprep.subr.bf16.mxu0 0
        %1329 = vmatpush1.bf16.xpose.msra.mxu0 0
        %1330 = vmatprep.subr.bf16.mxu0 0
        %1331 = vmatpush1.bf16.xpose.msra.mxu0 0
        %1332 = vmatprep.subr.bf16.mxu0 0
        %1333 = vmatpush1.bf16.xpose.msra.mxu0 0
        %1334 = vmatprep.subr.bf16.mxu0 0
        %1335 = vmatpush1.bf16.xpose.msra.mxu0 %v1318
        %1336 = vmatprep.subr.bf16.mxu0 0
        %1337 = vmatpush2.bf16.xpose.msra.mxu0 0
        %1338 = vmatprep.subr.bf16.mxu0 0
        %1339 = vmatpush2.bf16.xpose.msra.mxu0 0
        %1340 = vmatprep.subr.bf16.mxu0 0
        %1341 = vmatpush2.bf16.xpose.msra.mxu0 0
        %1342 = vmatprep.subr.bf16.mxu0 0
        %1343 = vmatpush2.bf16.xpose.msra.mxu0 0
        %1344 = vmatprep.subr.bf16.mxu0 0
        %1345 = vmatpush2.bf16.xpose.msra.mxu0 0
        %1346 = vmatprep.subr.bf16.mxu0 0
        %1347 = vmatpush2.bf16.xpose.msra.mxu0 0
        %1348 = vmatprep.subr.bf16.mxu0 0
        %1349 = vmatpush2.bf16.xpose.msra.mxu0 0
        %1350 = vmatprep.subr.bf16.mxu0 0
        %1351 = vmatpush2.bf16.xpose.msra.mxu0 0
        %1352 = vmatprep.mubr.bf16.mxu0 0
        %1353 = vmatmul.mubr.bf16.gmra.mxu0 %v1315
        %v1354 = vpop.f32.mrf.mxu0
        %v1355 = vadd.f32 %v1121, %v1354
        %v1356 = vpop.f32.mrf.mxu0
        %v1357 = vpop.f32.mrf.mxu0
        %v1358 = vpop.f32.mrf.mxu0
        %1359 = vdwg.mxu0
        %v1360 = vsel %vm1201, %v1355, -inf
        %1361 = vmax.xlane.f32.xlu0 %v1360
        %v1362 = vpop.xlane.xlu0 %1361
        %v1363 = vsub.f32 %v1355, %v1362
        %v1364 = vmul.f32 %v1363, 1.442695
        %v1365 = vpow.pop %v1364
        %v1366 = vsel %vm1201, %v1365, 0.0
        %1367 = vadd.xlane.f32.xlu0 %v1366
        %v1368 = vpop.xlane.xlu0 %1367
        %v1369 = vrcp.pop %v1368
        %v1370 = vmul.f32 %v1365, %v1369
        %v1371 = vpack.c.bf16 %v1370, %v1370
        %1372 = vrot.lane.b32.xlu0 %v1197, 56
        %v1373 = vpop.permute.xlu0 %1372
        %v1375 = vsel %vm1201, %v1371, 0
        %v1378 = vsel %vm1265, %v1373, 0
        %1380 = vmatprep.subr.bf16.mxu0 0
        %1381 = vmatpush1.bf16.msra.mxu0 0
        %1382 = vmatprep.subr.bf16.mxu0 0
        %1383 = vmatpush1.bf16.msra.mxu0 0
        %1384 = vmatprep.subr.bf16.mxu0 0
        %1385 = vmatpush1.bf16.msra.mxu0 0
        %1386 = vmatprep.subr.bf16.mxu0 0
        %1387 = vmatpush1.bf16.msra.mxu0 0
        %1388 = vmatprep.subr.bf16.mxu0 0
        %1389 = vmatpush1.bf16.msra.mxu0 0
        %1390 = vmatprep.subr.bf16.mxu0 0
        %1391 = vmatpush1.bf16.msra.mxu0 0
        %1392 = vmatprep.subr.bf16.mxu0 0
        %1393 = vmatpush1.bf16.msra.mxu0 0
        %1394 = vmatprep.subr.bf16.mxu0 0
        %1395 = vmatpush1.bf16.msra.mxu0 %v1378
        %1396 = vmatprep.subr.bf16.mxu0 0
        %1397 = vmatpush2.bf16.msra.mxu0 0
        %1398 = vmatprep.subr.bf16.mxu0 0
        %1399 = vmatpush2.bf16.msra.mxu0 0
        %1400 = vmatprep.subr.bf16.mxu0 0
        %1401 = vmatpush2.bf16.msra.mxu0 0
        %1402 = vmatprep.subr.bf16.mxu0 0
        %1403 = vmatpush2.bf16.msra.mxu0 0
        %1404 = vmatprep.subr.bf16.mxu0 0
        %1405 = vmatpush2.bf16.msra.mxu0 0
        %1406 = vmatprep.subr.bf16.mxu0 0
        %1407 = vmatpush2.bf16.msra.mxu0 0
        %1408 = vmatprep.subr.bf16.mxu0 0
        %1409 = vmatpush2.bf16.msra.mxu0 0
        %1410 = vmatprep.subr.bf16.mxu0 0
        %1411 = vmatpush2.bf16.msra.mxu0 0
        %1412 = vmatprep.mubr.bf16.mxu0 0
        %1413 = vmatmul.mubr.bf16.gmra.mxu0 %v1375
        %v1414 = vpop.f32.mrf.mxu0
        %v1415 = vadd.f32 0.0, %v1414
        %v1416 = vpop.f32.mrf.mxu0
        %v1417 = vpop.f32.mrf.mxu0
        %v1418 = vpop.f32.mrf.mxu0
        %1419 = vdwg.mxu0
        %1420 = vrot.lane.b32.xlu0 %v1196, 112
        %v1421 = vpop.permute.xlu0 %1420
        %1422 = vrot.lane.b32.xlu0 %v1197, 80
        %v1423 = vpop.permute.xlu0 %1422
        %v1425 = vsel %vm1201, %v1421, 0
        %v1428 = vsel %vm1201, %v1423, 0
        %1430 = vmatprep.subr.bf16.mxu0 0
        %1431 = vmatpush1.bf16.xpose.msra.mxu0 0
        %1432 = vmatprep.subr.bf16.mxu0 0
        %1433 = vmatpush1.bf16.xpose.msra.mxu0 0
        %1434 = vmatprep.subr.bf16.mxu0 0
        %1435 = vmatpush1.bf16.xpose.msra.mxu0 0
        %1436 = vmatprep.subr.bf16.mxu0 0
        %1437 = vmatpush1.bf16.xpose.msra.mxu0 0
        %1438 = vmatprep.subr.bf16.mxu0 0
        %1439 = vmatpush1.bf16.xpose.msra.mxu0 0
        %1440 = vmatprep.subr.bf16.mxu0 0
        %1441 = vmatpush1.bf16.xpose.msra.mxu0 0
        %1442 = vmatprep.subr.bf16.mxu0 0
        %1443 = vmatpush1.bf16.xpose.msra.mxu0 0
        %1444 = vmatprep.subr.bf16.mxu0 0
        %1445 = vmatpush1.bf16.xpose.msra.mxu0 %v1428
        %1446 = vmatprep.subr.bf16.mxu0 0
        %1447 = vmatpush2.bf16.xpose.msra.mxu0 0
        %1448 = vmatprep.subr.bf16.mxu0 0
        %1449 = vmatpush2.bf16.xpose.msra.mxu0 0
        %1450 = vmatprep.subr.bf16.mxu0 0
        %1451 = vmatpush2.bf16.xpose.msra.mxu0 0
        %1452 = vmatprep.subr.bf16.mxu0 0
        %1453 = vmatpush2.bf16.xpose.msra.mxu0 0
        %1454 = vmatprep.subr.bf16.mxu0 0
        %1455 = vmatpush2.bf16.xpose.msra.mxu0 0
        %1456 = vmatprep.subr.bf16.mxu0 0
        %1457 = vmatpush2.bf16.xpose.msra.mxu0 0
        %1458 = vmatprep.subr.bf16.mxu0 0
        %1459 = vmatpush2.bf16.xpose.msra.mxu0 0
        %1460 = vmatprep.subr.bf16.mxu0 0
        %1461 = vmatpush2.bf16.xpose.msra.mxu0 0
        %1462 = vmatprep.mubr.bf16.mxu0 0
        %1463 = vmatmul.mubr.bf16.gmra.mxu0 %v1425
        %v1464 = vpop.f32.mrf.mxu0
        %v1465 = vadd.f32 %v1121, %v1464
        %v1466 = vpop.f32.mrf.mxu0
        %v1467 = vpop.f32.mrf.mxu0
        %v1468 = vpop.f32.mrf.mxu0
        %1469 = vdwg.mxu0
        %v1470 = vsel %vm1201, %v1465, -inf
        %1471 = vmax.xlane.f32.xlu0 %v1470
        %v1472 = vpop.xlane.xlu0 %1471
        %v1473 = vsub.f32 %v1465, %v1472
        %v1474 = vmul.f32 %v1473, 1.442695
        %v1475 = vpow.pop %v1474
        %v1476 = vsel %vm1201, %v1475, 0.0
        %1477 = vadd.xlane.f32.xlu0 %v1476
        %v1478 = vpop.xlane.xlu0 %1477
        %v1479 = vrcp.pop %v1478
        %v1480 = vmul.f32 %v1475, %v1479
        %v1481 = vpack.c.bf16 %v1480, %v1480
        %1482 = vrot.lane.b32.xlu0 %v1197, 48
        %v1483 = vpop.permute.xlu0 %1482
        %v1485 = vsel %vm1201, %v1481, 0
        %v1488 = vsel %vm1265, %v1483, 0
        %1490 = vmatprep.subr.bf16.mxu0 0
        %1491 = vmatpush1.bf16.msra.mxu0 0
        %1492 = vmatprep.subr.bf16.mxu0 0
        %1493 = vmatpush1.bf16.msra.mxu0 0
        %1494 = vmatprep.subr.bf16.mxu0 0
        %1495 = vmatpush1.bf16.msra.mxu0 0
        %1496 = vmatprep.subr.bf16.mxu0 0
        %1497 = vmatpush1.bf16.msra.mxu0 0
        %1498 = vmatprep.subr.bf16.mxu0 0
        %1499 = vmatpush1.bf16.msra.mxu0 0
        %1500 = vmatprep.subr.bf16.mxu0 0
        %1501 = vmatpush1.bf16.msra.mxu0 0
        %1502 = vmatprep.subr.bf16.mxu0 0
        %1503 = vmatpush1.bf16.msra.mxu0 0
        %1504 = vmatprep.subr.bf16.mxu0 0
        %1505 = vmatpush1.bf16.msra.mxu0 %v1488
        %1506 = vmatprep.subr.bf16.mxu0 0
        %1507 = vmatpush2.bf16.msra.mxu0 0
        %1508 = vmatprep.subr.bf16.mxu0 0
        %1509 = vmatpush2.bf16.msra.mxu0 0
        %1510 = vmatprep.subr.bf16.mxu0 0
        %1511 = vmatpush2.bf16.msra.mxu0 0
        %1512 = vmatprep.subr.bf16.mxu0 0
        %1513 = vmatpush2.bf16.msra.mxu0 0
        %1514 = vmatprep.subr.bf16.mxu0 0
        %1515 = vmatpush2.bf16.msra.mxu0 0
        %1516 = vmatprep.subr.bf16.mxu0 0
        %1517 = vmatpush2.bf16.msra.mxu0 0
        %1518 = vmatprep.subr.bf16.mxu0 0
        %1519 = vmatpush2.bf16.msra.mxu0 0
        %1520 = vmatprep.subr.bf16.mxu0 0
        %1521 = vmatpush2.bf16.msra.mxu0 0
        %1522 = vmatprep.mubr.bf16.mxu0 0
        %1523 = vmatmul.mubr.bf16.gmra.mxu0 %v1485
        %v1524 = vpop.f32.mrf.mxu0
        %v1525 = vadd.f32 0.0, %v1524
        %v1526 = vpop.f32.mrf.mxu0
        %v1527 = vpop.f32.mrf.mxu0
        %v1528 = vpop.f32.mrf.mxu0
        %1529 = vdwg.mxu0
        %1530 = vrot.lane.b32.xlu0 %v1196, 104
        %v1531 = vpop.permute.xlu0 %1530
        %1532 = vrot.lane.b32.xlu0 %v1197, 72
        %v1533 = vpop.permute.xlu0 %1532
        %v1535 = vsel %vm1201, %v1531, 0
        %v1538 = vsel %vm1201, %v1533, 0
        %1540 = vmatprep.subr.bf16.mxu0 0
        %1541 = vmatpush1.bf16.xpose.msra.mxu0 0
        %1542 = vmatprep.subr.bf16.mxu0 0
        %1543 = vmatpush1.bf16.xpose.msra.mxu0 0
        %1544 = vmatprep.subr.bf16.mxu0 0
        %1545 = vmatpush1.bf16.xpose.msra.mxu0 0
        %1546 = vmatprep.subr.bf16.mxu0 0
        %1547 = vmatpush1.bf16.xpose.msra.mxu0 0
        %1548 = vmatprep.subr.bf16.mxu0 0
        %1549 = vmatpush1.bf16.xpose.msra.mxu0 0
        %1550 = vmatprep.subr.bf16.mxu0 0
        %1551 = vmatpush1.bf16.xpose.msra.mxu0 0
        %1552 = vmatprep.subr.bf16.mxu0 0
        %1553 = vmatpush1.bf16.xpose.msra.mxu0 0
        %1554 = vmatprep.subr.bf16.mxu0 0
        %1555 = vmatpush1.bf16.xpose.msra.mxu0 %v1538
        %1556 = vmatprep.subr.bf16.mxu0 0
        %1557 = vmatpush2.bf16.xpose.msra.mxu0 0
        %1558 = vmatprep.subr.bf16.mxu0 0
        %1559 = vmatpush2.bf16.xpose.msra.mxu0 0
        %1560 = vmatprep.subr.bf16.mxu0 0
        %1561 = vmatpush2.bf16.xpose.msra.mxu0 0
        %1562 = vmatprep.subr.bf16.mxu0 0
        %1563 = vmatpush2.bf16.xpose.msra.mxu0 0
        %1564 = vmatprep.subr.bf16.mxu0 0
        %1565 = vmatpush2.bf16.xpose.msra.mxu0 0
        %1566 = vmatprep.subr.bf16.mxu0 0
        %1567 = vmatpush2.bf16.xpose.msra.mxu0 0
        %1568 = vmatprep.subr.bf16.mxu0 0
        %1569 = vmatpush2.bf16.xpose.msra.mxu0 0
        %1570 = vmatprep.subr.bf16.mxu0 0
        %1571 = vmatpush2.bf16.xpose.msra.mxu0 0
        %1572 = vmatprep.mubr.bf16.mxu0 0
        %1573 = vmatmul.mubr.bf16.gmra.mxu0 %v1535
        %v1574 = vpop.f32.mrf.mxu0
        %v1575 = vadd.f32 %v1121, %v1574
        %v1576 = vpop.f32.mrf.mxu0
        %v1577 = vpop.f32.mrf.mxu0
        %v1578 = vpop.f32.mrf.mxu0
        %1579 = vdwg.mxu0
        %v1580 = vsel %vm1201, %v1575, -inf
        %1581 = vmax.xlane.f32.xlu0 %v1580
        %v1582 = vpop.xlane.xlu0 %1581
        %v1583 = vsub.f32 %v1575, %v1582
        %v1584 = vmul.f32 %v1583, 1.442695
        %v1585 = vpow.pop %v1584
        %v1586 = vsel %vm1201, %v1585, 0.0
        %1587 = vadd.xlane.f32.xlu0 %v1586
        %v1588 = vpop.xlane.xlu0 %1587
        %v1589 = vrcp.pop %v1588
        %v1590 = vmul.f32 %v1585, %v1589
        %v1591 = vpack.c.bf16 %v1590, %v1590
        %1592 = vrot.lane.b32.xlu0 %v1197, 40
        %v1593 = vpop.permute.xlu0 %1592
        %v1595 = vsel %vm1201, %v1591, 0
        %v1598 = vsel %vm1265, %v1593, 0
        %1600 = vmatprep.subr.bf16.mxu0 0
        %1601 = vmatpush1.bf16.msra.mxu0 0
        %1602 = vmatprep.subr.bf16.mxu0 0
        %1603 = vmatpush1.bf16.msra.mxu0 0
        %1604 = vmatprep.subr.bf16.mxu0 0
        %1605 = vmatpush1.bf16.msra.mxu0 0
        %1606 = vmatprep.subr.bf16.mxu0 0
        %1607 = vmatpush1.bf16.msra.mxu0 0
        %1608 = vmatprep.subr.bf16.mxu0 0
        %1609 = vmatpush1.bf16.msra.mxu0 0
        %1610 = vmatprep.subr.bf16.mxu0 0
        %1611 = vmatpush1.bf16.msra.mxu0 0
        %1612 = vmatprep.subr.bf16.mxu0 0
        %1613 = vmatpush1.bf16.msra.mxu0 0
        %1614 = vmatprep.subr.bf16.mxu0 0
        %1615 = vmatpush1.bf16.msra.mxu0 %v1598
        %1616 = vmatprep.subr.bf16.mxu0 0
        %1617 = vmatpush2.bf16.msra.mxu0 0
        %1618 = vmatprep.subr.bf16.mxu0 0
        %1619 = vmatpush2.bf16.msra.mxu0 0
        %1620 = vmatprep.subr.bf16.mxu0 0
        %1621 = vmatpush2.bf16.msra.mxu0 0
        %1622 = vmatprep.subr.bf16.mxu0 0
        %1623 = vmatpush2.bf16.msra.mxu0 0
        %1624 = vmatprep.subr.bf16.mxu0 0
        %1625 = vmatpush2.bf16.msra.mxu0 0
        %1626 = vmatprep.subr.bf16.mxu0 0
        %1627 = vmatpush2.bf16.msra.mxu0 0
        %1628 = vmatprep.subr.bf16.mxu0 0
        %1629 = vmatpush2.bf16.msra.mxu0 0
        %1630 = vmatprep.subr.bf16.mxu0 0
        %1631 = vmatpush2.bf16.msra.mxu0 0
        %1632 = vmatprep.mubr.bf16.mxu0 0
        %1633 = vmatmul.mubr.bf16.gmra.mxu0 %v1595
        %v1634 = vpop.f32.mrf.mxu0
        %v1635 = vadd.f32 0.0, %v1634
        %v1636 = vpop.f32.mrf.mxu0
        %v1637 = vpop.f32.mrf.mxu0
        %v1638 = vpop.f32.mrf.mxu0
        %1639 = vdwg.mxu0
        %1641 = vrot.lane.b32.xlu0 %v1415, 8
        %v1642 = vpop.permute.xlu0 %1641
        %1645 = vrot.lane.b32.xlu0 %v1525, 16
        %v1646 = vpop.permute.xlu0 %1645
        %1649 = vrot.lane.b32.xlu0 %v1635, 24
        %v1650 = vpop.permute.xlu0 %1649
        %v1652 = vsel %vm1201, %v1304, %v1642
        %vm1653 = vcmask 130048
        %v1654 = vsel %vm1653, %v1652, %v1646
        %vm1655 = vcmask 195584
        %v1656 = vsel %vm1655, %v1654, %v1650
        %v1657 = vpack.c.bf16 %v1656, %v1656
        %v1659 = vlaneseq
        %v1660 = vshrl.u32 %v1659, 7
        %v1661 = vsub.s32 0, %v1660
        %v1662 = vrot.slane %v1131, %v1661
        %v1668 = vunpack.c.l.b16 %v1127
        %v1669 = vunpack.c.l.b16 %v1128
        %v1670 = vunpack.c.l.b16 %v1129
        %v1671 = vunpack.c.l.b16 %v1130
        %v1672 = vpack.c.b16 %v1669, %v1668
        %v1673 = vpack.c.b16 %v1671, %v1670
        %v1677 = vsel %vm1151, %v1657, 0
        %1679 = vmatprep.subr.bf16.mxu0 0
        %1680 = vmatpush1.bf16.msra.mxu0 0
        %1681 = vmatprep.subr.bf16.mxu0 0
        %1682 = vmatpush1.bf16.msra.mxu0 0
        %1683 = vmatprep.subr.bf16.mxu0 0
        %1684 = vmatpush1.bf16.msra.mxu0 0
        %1685 = vmatprep.subr.bf16.mxu0 0
        %1686 = vmatpush1.bf16.msra.mxu0 0
        %1687 = vmatprep.subr.bf16.mxu0 0
        %1688 = vmatpush1.bf16.msra.mxu0 0
        %1689 = vmatprep.subr.bf16.mxu0 0
        %1690 = vmatpush1.bf16.msra.mxu0 0
        %1691 = vmatprep.subr.bf16.mxu0 0
        %1692 = vmatpush1.bf16.msra.mxu0 %v1673
        %1693 = vmatprep.subr.bf16.mxu0 0
        %1694 = vmatpush1.bf16.msra.mxu0 %v1672
        %1695 = vmatprep.subr.bf16.mxu0 0
        %1696 = vmatpush2.bf16.msra.mxu0 0
        %1697 = vmatprep.subr.bf16.mxu0 0
        %1698 = vmatpush2.bf16.msra.mxu0 0
        %1699 = vmatprep.subr.bf16.mxu0 0
        %1700 = vmatpush2.bf16.msra.mxu0 0
        %1701 = vmatprep.subr.bf16.mxu0 0
        %1702 = vmatpush2.bf16.msra.mxu0 0
        %1703 = vmatprep.subr.bf16.mxu0 0
        %1704 = vmatpush2.bf16.msra.mxu0 0
        %1705 = vmatprep.subr.bf16.mxu0 0
        %1706 = vmatpush2.bf16.msra.mxu0 0
        %1707 = vmatprep.subr.bf16.mxu0 0
        %1708 = vmatpush2.bf16.msra.mxu0 0
        %1709 = vmatprep.subr.bf16.mxu0 0
        %1710 = vmatpush2.bf16.msra.mxu0 0
        %1711 = vmatprep.mubr.bf16.mxu0 0
        %1712 = vmatmul.mubr.bf16.gmra.mxu0 %v1677
        %v1713 = vpop.f32.mrf.mxu0
        %v1714 = vadd.f32 %v1662, %v1713
        %v1715 = vpop.f32.mrf.mxu0
        %v1716 = vpop.f32.mrf.mxu0
        %v1717 = vpop.f32.mrf.mxu0
        %1718 = vdwg.mxu0
        %v1719 = vadd.f32 %v1119, %v1714
        %v1720 = vld [vmem:[%s1055] sm:$0x1]
        %v1721 = vld [vmem:[%s1058] sm:$0x1]
        %v1722 = vsel %vm1151, %v1719, 0.0
        %1723 = vadd.xlane.f32.xlu0 %v1722
        %v1724 = vpop.xlane.xlu0 %1723
        %v1725 = vrcp.pop 32.0
        %v1726 = vmul.f32 %v1724, %v1725
        %v1727 = vsub.f32 %v1719, %v1726
        %v1728 = vmul.f32 %v1727, %v1727
        %v1729 = vsel %vm1151, %v1728, 0.0
        %1730 = vadd.xlane.f32.xlu0 %v1729
        %v1731 = vpop.xlane.xlu0 %1730
        %v1732 = vmul.f32 %v1731, %v1725
        %v1733 = vadd.f32 %v1732, 1e-05
        %v1734 = vrsqrt.pop %v1733
        %v1735 = vmul.f32 %v1727, %v1734
        %v1737 = vlaneseq
        %v1738 = vshrl.u32 %v1737, 7
        %v1739 = vsub.s32 0, %v1738
        %v1740 = vrot.slane %v1720, %v1739
        %v1742 = vmul.f32 %v1735, %v1740
        %v1744 = vlaneseq
        %v1745 = vshrl.u32 %v1744, 7
        %v1746 = vsub.s32 0, %v1745
        %v1747 = vrot.slane %v1721, %v1746
        %v1749 = vadd.f32 %v1742, %v1747
        %v1750 = vld [vmem:[%s1063] sm:$0xf]
        %v1751 = vld [vmem:[%s1063 + $0x4] sm:$0xf]
        %v1752 = vld [vmem:[%s1063 + $0x8] sm:$0xf]
        %v1753 = vld [vmem:[%s1063 + $0xc] sm:$0xf]
        %v1754 = vld [vmem:[%s1066] sm:$0x1]
        %v1755 = vld [vmem:[%s1071] sm:$0xf]
        %v1756 = vld [vmem:[%s1071 + $0x4] sm:$0xf]
        %v1757 = vld [vmem:[%s1071 + $0x8] sm:$0xf]
        %v1758 = vld [vmem:[%s1071 + $0xc] sm:$0xf]
        %v1759 = vld [vmem:[%s1074] sm:$0x1]
        %v1760 = vld [vmem:[%s1079] sm:$0xf]
        %v1761 = vld [vmem:[%s1079 + $0x4] sm:$0xf]
        %v1762 = vld [vmem:[%s1079 + $0x8] sm:$0xf]
        %v1763 = vld [vmem:[%s1079 + $0xc] sm:$0xf]
        %v1764 = vld [vmem:[%s1082] sm:$0x1]
        %v1765 = vpack.c.bf16 %v1749, %v1749
        %v1767 = vlaneseq
        %v1768 = vshrl.u32 %v1767, 7
        %v1769 = vsub.s32 0, %v1768
        %v1770 = vrot.slane %v1754, %v1769
        %v1776 = vunpack.c.l.b16 %v1750
        %v1777 = vunpack.c.l.b16 %v1751
        %v1778 = vunpack.c.l.b16 %v1752
        %v1779 = vunpack.c.l.b16 %v1753
        %v1780 = vpack.c.b16 %v1777, %v1776
        %v1781 = vpack.c.b16 %v1779, %v1778
        %v1785 = vsel %vm1151, %v1765, 0
        %1787 = vmatprep.subr.bf16.mxu0 0
        %1788 = vmatpush1.bf16.msra.mxu0 0
        %1789 = vmatprep.subr.bf16.mxu0 0
        %1790 = vmatpush1.bf16.msra.mxu0 0
        %1791 = vmatprep.subr.bf16.mxu0 0
        %1792 = vmatpush1.bf16.msra.mxu0 0
        %1793 = vmatprep.subr.bf16.mxu0 0
        %1794 = vmatpush1.bf16.msra.mxu0 0
        %1795 = vmatprep.subr.bf16.mxu0 0
        %1796 = vmatpush1.bf16.msra.mxu0 0
        %1797 = vmatprep.subr.bf16.mxu0 0
        %1798 = vmatpush1.bf16.msra.mxu0 0
        %1799 = vmatprep.subr.bf16.mxu0 0
        %1800 = vmatpush1.bf16.msra.mxu0 %v1781
        %1801 = vmatprep.subr.bf16.mxu0 0
        %1802 = vmatpush1.bf16.msra.mxu0 %v1780
        %1803 = vmatprep.subr.bf16.mxu0 0
        %1804 = vmatpush2.bf16.msra.mxu0 0
        %1805 = vmatprep.subr.bf16.mxu0 0
        %1806 = vmatpush2.bf16.msra.mxu0 0
        %1807 = vmatprep.subr.bf16.mxu0 0
        %1808 = vmatpush2.bf16.msra.mxu0 0
        %1809 = vmatprep.subr.bf16.mxu0 0
        %1810 = vmatpush2.bf16.msra.mxu0 0
        %1811 = vmatprep.subr.bf16.mxu0 0
        %1812 = vmatpush2.bf16.msra.mxu0 0
        %1813 = vmatprep.subr.bf16.mxu0 0
        %1814 = vmatpush2.bf16.msra.mxu0 0
        %1815 = vmatprep.subr.bf16.mxu0 0
        %1816 = vmatpush2.bf16.msra.mxu0 0
        %1817 = vmatprep.subr.bf16.mxu0 0
        %1818 = vmatpush2.bf16.msra.mxu0 0
        %1819 = vmatprep.mubr.bf16.mxu0 0
        %1820 = vmatmul.mubr.bf16.gmra.mxu0 %v1785
        %v1821 = vpop.f32.mrf.mxu0
        %v1822 = vadd.f32 %v1770, %v1821
        %v1823 = vpop.f32.mrf.mxu0
        %v1824 = vpop.f32.mrf.mxu0
        %v1825 = vpop.f32.mrf.mxu0
        %1826 = vdwg.mxu0
        %v1827 = vpack.c.bf16 %v1120, %v1120
        %v1829 = vlaneseq
        %v1830 = vshrl.u32 %v1829, 7
        %v1831 = vsub.s32 0, %v1830
        %v1832 = vrot.slane %v1759, %v1831
        %v1838 = vunpack.c.l.b16 %v1755
        %v1839 = vunpack.c.l.b16 %v1756
        %v1840 = vunpack.c.l.b16 %v1757
        %v1841 = vunpack.c.l.b16 %v1758
        %v1842 = vpack.c.b16 %v1839, %v1838
        %v1843 = vpack.c.b16 %v1841, %v1840
        %v1847 = vsel %vm1151, %v1827, 0
        %1849 = vmatprep.subr.bf16.mxu0 0
        %1850 = vmatpush1.bf16.msra.mxu0 0
        %1851 = vmatprep.subr.bf16.mxu0 0
        %1852 = vmatpush1.bf16.msra.mxu0 0
        %1853 = vmatprep.subr.bf16.mxu0 0
        %1854 = vmatpush1.bf16.msra.mxu0 0
        %1855 = vmatprep.subr.bf16.mxu0 0
        %1856 = vmatpush1.bf16.msra.mxu0 0
        %1857 = vmatprep.subr.bf16.mxu0 0
        %1858 = vmatpush1.bf16.msra.mxu0 0
        %1859 = vmatprep.subr.bf16.mxu0 0
        %1860 = vmatpush1.bf16.msra.mxu0 0
        %1861 = vmatprep.subr.bf16.mxu0 0
        %1862 = vmatpush1.bf16.msra.mxu0 %v1843
        %1863 = vmatprep.subr.bf16.mxu0 0
        %1864 = vmatpush1.bf16.msra.mxu0 %v1842
        %1865 = vmatprep.subr.bf16.mxu0 0
        %1866 = vmatpush2.bf16.msra.mxu0 0
        %1867 = vmatprep.subr.bf16.mxu0 0
        %1868 = vmatpush2.bf16.msra.mxu0 0
        %1869 = vmatprep.subr.bf16.mxu0 0
        %1870 = vmatpush2.bf16.msra.mxu0 0
        %1871 = vmatprep.subr.bf16.mxu0 0
        %1872 = vmatpush2.bf16.msra.mxu0 0
        %1873 = vmatprep.subr.bf16.mxu0 0
        %1874 = vmatpush2.bf16.msra.mxu0 0
        %1875 = vmatprep.subr.bf16.mxu0 0
        %1876 = vmatpush2.bf16.msra.mxu0 0
        %1877 = vmatprep.subr.bf16.mxu0 0
        %1878 = vmatpush2.bf16.msra.mxu0 0
        %1879 = vmatprep.subr.bf16.mxu0 0
        %1880 = vmatpush2.bf16.msra.mxu0 0
        %1881 = vmatprep.mubr.bf16.mxu0 0
        %1882 = vmatmul.mubr.bf16.gmra.mxu0 %v1847
        %v1883 = vpop.f32.mrf.mxu0
        %v1884 = vadd.f32 %v1832, %v1883
        %v1885 = vpop.f32.mrf.mxu0
        %v1886 = vpop.f32.mrf.mxu0
        %v1887 = vpop.f32.mrf.mxu0
        %1888 = vdwg.mxu0
        %v1889 = vmul.f32 %v1822, 0.35355338
        %v1890 = vpack.c.bf16 %v1889, %v1889
        %v1891 = vpack.c.bf16 %v1884, %v1884
        %v1893 = vsel %vm1201, %v1890, 0
        %v1896 = vsel %vm1201, %v1891, 0
        %1898 = vmatprep.subr.bf16.mxu0 0
        %1899 = vmatpush1.bf16.xpose.msra.mxu0 0
        %1900 = vmatprep.subr.bf16.mxu0 0
        %1901 = vmatpush1.bf16.xpose.msra.mxu0 0
        %1902 = vmatprep.subr.bf16.mxu0 0
        %1903 = vmatpush1.bf16.xpose.msra.mxu0 0
        %1904 = vmatprep.subr.bf16.mxu0 0
        %1905 = vmatpush1.bf16.xpose.msra.mxu0 0
        %1906 = vmatprep.subr.bf16.mxu0 0
        %1907 = vmatpush1.bf16.xpose.msra.mxu0 0
        %1908 = vmatprep.subr.bf16.mxu0 0
        %1909 = vmatpush1.bf16.xpose.msra.mxu0 0
        %1910 = vmatprep.subr.bf16.mxu0 0
        %1911 = vmatpush1.bf16.xpose.msra.mxu0 0
        %1912 = vmatprep.subr.bf16.mxu0 0
        %1913 = vmatpush1.bf16.xpose.msra.mxu0 %v1896
        %1914 = vmatprep.subr.bf16.mxu0 0
        %1915 = vmatpush2.bf16.xpose.msra.mxu0 0
        %1916 = vmatprep.subr.bf16.mxu0 0
        %1917 = vmatpush2.bf16.xpose.msra.mxu0 0
        %1918 = vmatprep.subr.bf16.mxu0 0
        %1919 = vmatpush2.bf16.xpose.msra.mxu0 0
        %1920 = vmatprep.subr.bf16.mxu0 0
        %1921 = vmatpush2.bf16.xpose.msra.mxu0 0
        %1922 = vmatprep.subr.bf16.mxu0 0
        %1923 = vmatpush2.bf16.xpose.msra.mxu0 0
        %1924 = vmatprep.subr.bf16.mxu0 0
        %1925 = vmatpush2.bf16.xpose.msra.mxu0 0
        %1926 = vmatprep.subr.bf16.mxu0 0
        %1927 = vmatpush2.bf16.xpose.msra.mxu0 0
        %1928 = vmatprep.subr.bf16.mxu0 0
        %1929 = vmatpush2.bf16.xpose.msra.mxu0 0
        %1930 = vmatprep.mubr.bf16.mxu0 0
        %1931 = vmatmul.mubr.bf16.gmra.mxu0 %v1893
        %v1932 = vpop.f32.mrf.mxu0
        %v1933 = vadd.f32 0.0, %v1932
        %v1934 = vpop.f32.mrf.mxu0
        %v1935 = vpop.f32.mrf.mxu0
        %v1936 = vpop.f32.mrf.mxu0
        %1937 = vdwg.mxu0
        %vm1938 = vcmask 39936
        %v1939 = vsel %vm1938, %v1933, -inf
        %1940 = vmax.xlane.f32.xlu0 %v1939
        %v1941 = vpop.xlane.xlu0 %1940
        %v1942 = vsub.f32 %v1933, %v1941
        %v1943 = vmul.f32 %v1942, 1.442695
        %v1944 = vpow.pop %v1943
        %v1945 = vsel %vm1938, %v1944, 0.0
        %1946 = vadd.xlane.f32.xlu0 %v1945
        %v1947 = vpop.xlane.xlu0 %1946
        %v1948 = vrcp.pop %v1947
        %v1949 = vmul.f32 %v1944, %v1948
        %v1950 = vpack.c.bf16 %v1949, %v1949
        %1952 = vrot.lane.b32.xlu0 %v1891, 96
        %v1953 = vpop.permute.xlu0 %1952
        %v1955 = vsel %vm1938, %v1950, 0
        %vm1957 = vcmask 1041408
        %vm1958 = vcmask 1042432
        %v1959 = vsel %vm1957, 4294967295, 65535
        %v1960 = vsel %vm1958, %v1959, 0
        %v1962 = vand.u32 %v1953, %v1960
        %1964 = vmatprep.subr.bf16.mxu0 0
        %1965 = vmatpush1.bf16.msra.mxu0 0
        %1966 = vmatprep.subr.bf16.mxu0 0
        %1967 = vmatpush1.bf16.msra.mxu0 0
        %1968 = vmatprep.subr.bf16.mxu0 0
        %1969 = vmatpush1.bf16.msra.mxu0 0
        %1970 = vmatprep.subr.bf16.mxu0 0
        %1971 = vmatpush1.bf16.msra.mxu0 0
        %1972 = vmatprep.subr.bf16.mxu0 0
        %1973 = vmatpush1.bf16.msra.mxu0 0
        %1974 = vmatprep.subr.bf16.mxu0 0
        %1975 = vmatpush1.bf16.msra.mxu0 0
        %1976 = vmatprep.subr.bf16.mxu0 0
        %1977 = vmatpush1.bf16.msra.mxu0 0
        %1978 = vmatprep.subr.bf16.mxu0 0
        %1979 = vmatpush1.bf16.msra.mxu0 %v1962
        %1980 = vmatprep.subr.bf16.mxu0 0
        %1981 = vmatpush2.bf16.msra.mxu0 0
        %1982 = vmatprep.subr.bf16.mxu0 0
        %1983 = vmatpush2.bf16.msra.mxu0 0
        %1984 = vmatprep.subr.bf16.mxu0 0
        %1985 = vmatpush2.bf16.msra.mxu0 0
        %1986 = vmatprep.subr.bf16.mxu0 0
        %1987 = vmatpush2.bf16.msra.mxu0 0
        %1988 = vmatprep.subr.bf16.mxu0 0
        %1989 = vmatpush2.bf16.msra.mxu0 0
        %1990 = vmatprep.subr.bf16.mxu0 0
        %1991 = vmatpush2.bf16.msra.mxu0 0
        %1992 = vmatprep.subr.bf16.mxu0 0
        %1993 = vmatpush2.bf16.msra.mxu0 0
        %1994 = vmatprep.subr.bf16.mxu0 0
        %1995 = vmatpush2.bf16.msra.mxu0 0
        %1996 = vmatprep.mubr.bf16.mxu0 0
        %1997 = vmatmul.mubr.bf16.gmra.mxu0 %v1955
        %v1998 = vpop.f32.mrf.mxu0
        %v1999 = vadd.f32 0.0, %v1998
        %v2000 = vpop.f32.mrf.mxu0
        %v2001 = vpop.f32.mrf.mxu0
        %v2002 = vpop.f32.mrf.mxu0
        %2003 = vdwg.mxu0
        %2005 = vrot.lane.b32.xlu0 %v1890, 120
        %v2006 = vpop.permute.xlu0 %2005
        %2007 = vrot.lane.b32.xlu0 %v1891, 120
        %v2008 = vpop.permute.xlu0 %2007
        %v2010 = vsel %vm1201, %v2006, 0
        %v2013 = vsel %vm1201, %v2008, 0
        %2015 = vmatprep.subr.bf16.mxu0 0
        %2016 = vmatpush1.bf16.xpose.msra.mxu0 0
        %2017 = vmatprep.subr.bf16.mxu0 0
        %2018 = vmatpush1.bf16.xpose.msra.mxu0 0
        %2019 = vmatprep.subr.bf16.mxu0 0
        %2020 = vmatpush1.bf16.xpose.msra.mxu0 0
        %2021 = vmatprep.subr.bf16.mxu0 0
        %2022 = vmatpush1.bf16.xpose.msra.mxu0 0
        %2023 = vmatprep.subr.bf16.mxu0 0
        %2024 = vmatpush1.bf16.xpose.msra.mxu0 0
        %2025 = vmatprep.subr.bf16.mxu0 0
        %2026 = vmatpush1.bf16.xpose.msra.mxu0 0
        %2027 = vmatprep.subr.bf16.mxu0 0
        %2028 = vmatpush1.bf16.xpose.msra.mxu0 0
        %2029 = vmatprep.subr.bf16.mxu0 0
        %2030 = vmatpush1.bf16.xpose.msra.mxu0 %v2013
        %2031 = vmatprep.subr.bf16.mxu0 0
        %2032 = vmatpush2.bf16.xpose.msra.mxu0 0
        %2033 = vmatprep.subr.bf16.mxu0 0
        %2034 = vmatpush2.bf16.xpose.msra.mxu0 0
        %2035 = vmatprep.subr.bf16.mxu0 0
        %2036 = vmatpush2.bf16.xpose.msra.mxu0 0
        %2037 = vmatprep.subr.bf16.mxu0 0
        %2038 = vmatpush2.bf16.xpose.msra.mxu0 0
        %2039 = vmatprep.subr.bf16.mxu0 0
        %2040 = vmatpush2.bf16.xpose.msra.mxu0 0
        %2041 = vmatprep.subr.bf16.mxu0 0
        %2042 = vmatpush2.bf16.xpose.msra.mxu0 0
        %2043 = vmatprep.subr.bf16.mxu0 0
        %2044 = vmatpush2.bf16.xpose.msra.mxu0 0
        %2045 = vmatprep.subr.bf16.mxu0 0
        %2046 = vmatpush2.bf16.xpose.msra.mxu0 0
        %2047 = vmatprep.mubr.bf16.mxu0 0
        %2048 = vmatmul.mubr.bf16.gmra.mxu0 %v2010
        %v2049 = vpop.f32.mrf.mxu0
        %v2050 = vadd.f32 0.0, %v2049
        %v2051 = vpop.f32.mrf.mxu0
        %v2052 = vpop.f32.mrf.mxu0
        %v2053 = vpop.f32.mrf.mxu0
        %2054 = vdwg.mxu0
        %v2055 = vsel %vm1938, %v2050, -inf
        %2056 = vmax.xlane.f32.xlu0 %v2055
        %v2057 = vpop.xlane.xlu0 %2056
        %v2058 = vsub.f32 %v2050, %v2057
        %v2059 = vmul.f32 %v2058, 1.442695
        %v2060 = vpow.pop %v2059
        %v2061 = vsel %vm1938, %v2060, 0.0
        %2062 = vadd.xlane.f32.xlu0 %v2061
        %v2063 = vpop.xlane.xlu0 %2062
        %v2064 = vrcp.pop %v2063
        %v2065 = vmul.f32 %v2060, %v2064
        %v2066 = vpack.c.bf16 %v2065, %v2065
        %2067 = vrot.lane.b32.xlu0 %v1891, 88
        %v2068 = vpop.permute.xlu0 %2067
        %v2070 = vsel %vm1938, %v2066, 0
        %v2073 = vand.u32 %v2068, %v1960
        %2075 = vmatprep.subr.bf16.mxu0 0
        %2076 = vmatpush1.bf16.msra.mxu0 0
        %2077 = vmatprep.subr.bf16.mxu0 0
        %2078 = vmatpush1.bf16.msra.mxu0 0
        %2079 = vmatprep.subr.bf16.mxu0 0
        %2080 = vmatpush1.bf16.msra.mxu0 0
        %2081 = vmatprep.subr.bf16.mxu0 0
        %2082 = vmatpush1.bf16.msra.mxu0 0
        %2083 = vmatprep.subr.bf16.mxu0 0
        %2084 = vmatpush1.bf16.msra.mxu0 0
        %2085 = vmatprep.subr.bf16.mxu0 0
        %2086 = vmatpush1.bf16.msra.mxu0 0
        %2087 = vmatprep.subr.bf16.mxu0 0
        %2088 = vmatpush1.bf16.msra.mxu0 0
        %2089 = vmatprep.subr.bf16.mxu0 0
        %2090 = vmatpush1.bf16.msra.mxu0 %v2073
        %2091 = vmatprep.subr.bf16.mxu0 0
        %2092 = vmatpush2.bf16.msra.mxu0 0
        %2093 = vmatprep.subr.bf16.mxu0 0
        %2094 = vmatpush2.bf16.msra.mxu0 0
        %2095 = vmatprep.subr.bf16.mxu0 0
        %2096 = vmatpush2.bf16.msra.mxu0 0
        %2097 = vmatprep.subr.bf16.mxu0 0
        %2098 = vmatpush2.bf16.msra.mxu0 0
        %2099 = vmatprep.subr.bf16.mxu0 0
        %2100 = vmatpush2.bf16.msra.mxu0 0
        %2101 = vmatprep.subr.bf16.mxu0 0
        %2102 = vmatpush2.bf16.msra.mxu0 0
        %2103 = vmatprep.subr.bf16.mxu0 0
        %2104 = vmatpush2.bf16.msra.mxu0 0
        %2105 = vmatprep.subr.bf16.mxu0 0
        %2106 = vmatpush2.bf16.msra.mxu0 0
        %2107 = vmatprep.mubr.bf16.mxu0 0
        %2108 = vmatmul.mubr.bf16.gmra.mxu0 %v2070
        %v2109 = vpop.f32.mrf.mxu0
        %v2110 = vadd.f32 0.0, %v2109
        %v2111 = vpop.f32.mrf.mxu0
        %v2112 = vpop.f32.mrf.mxu0
        %v2113 = vpop.f32.mrf.mxu0
        %2114 = vdwg.mxu0
        %2115 = vrot.lane.b32.xlu0 %v1890, 112
        %v2116 = vpop.permute.xlu0 %2115
        %2117 = vrot.lane.b32.xlu0 %v1891, 112
        %v2118 = vpop.permute.xlu0 %2117
        %v2120 = vsel %vm1201, %v2116, 0
        %v2123 = vsel %vm1201, %v2118, 0
        %2125 = vmatprep.subr.bf16.mxu0 0
        %2126 = vmatpush1.bf16.xpose.msra.mxu0 0
        %2127 = vmatprep.subr.bf16.mxu0 0
        %2128 = vmatpush1.bf16.xpose.msra.mxu0 0
        %2129 = vmatprep.subr.bf16.mxu0 0
        %2130 = vmatpush1.bf16.xpose.msra.mxu0 0
        %2131 = vmatprep.subr.bf16.mxu0 0
        %2132 = vmatpush1.bf16.xpose.msra.mxu0 0
        %2133 = vmatprep.subr.bf16.mxu0 0
        %2134 = vmatpush1.bf16.xpose.msra.mxu0 0
        %2135 = vmatprep.subr.bf16.mxu0 0
        %2136 = vmatpush1.bf16.xpose.msra.mxu0 0
        %2137 = vmatprep.subr.bf16.mxu0 0
        %2138 = vmatpush1.bf16.xpose.msra.mxu0 0
        %2139 = vmatprep.subr.bf16.mxu0 0
        %2140 = vmatpush1.bf16.xpose.msra.mxu0 %v2123
        %2141 = vmatprep.subr.bf16.mxu0 0
        %2142 = vmatpush2.bf16.xpose.msra.mxu0 0
        %2143 = vmatprep.subr.bf16.mxu0 0
        %2144 = vmatpush2.bf16.xpose.msra.mxu0 0
        %2145 = vmatprep.subr.bf16.mxu0 0
        %2146 = vmatpush2.bf16.xpose.msra.mxu0 0
        %2147 = vmatprep.subr.bf16.mxu0 0
        %2148 = vmatpush2.bf16.xpose.msra.mxu0 0
        %2149 = vmatprep.subr.bf16.mxu0 0
        %2150 = vmatpush2.bf16.xpose.msra.mxu0 0
        %2151 = vmatprep.subr.bf16.mxu0 0
        %2152 = vmatpush2.bf16.xpose.msra.mxu0 0
        %2153 = vmatprep.subr.bf16.mxu0 0
        %2154 = vmatpush2.bf16.xpose.msra.mxu0 0
        %2155 = vmatprep.subr.bf16.mxu0 0
        %2156 = vmatpush2.bf16.xpose.msra.mxu0 0
        %2157 = vmatprep.mubr.bf16.mxu0 0
        %2158 = vmatmul.mubr.bf16.gmra.mxu0 %v2120
        %v2159 = vpop.f32.mrf.mxu0
        %v2160 = vadd.f32 0.0, %v2159
        %v2161 = vpop.f32.mrf.mxu0
        %v2162 = vpop.f32.mrf.mxu0
        %v2163 = vpop.f32.mrf.mxu0
        %2164 = vdwg.mxu0
        %v2165 = vsel %vm1938, %v2160, -inf
        %2166 = vmax.xlane.f32.xlu0 %v2165
        %v2167 = vpop.xlane.xlu0 %2166
        %v2168 = vsub.f32 %v2160, %v2167
        %v2169 = vmul.f32 %v2168, 1.442695
        %v2170 = vpow.pop %v2169
        %v2171 = vsel %vm1938, %v2170, 0.0
        %2172 = vadd.xlane.f32.xlu0 %v2171
        %v2173 = vpop.xlane.xlu0 %2172
        %v2174 = vrcp.pop %v2173
        %v2175 = vmul.f32 %v2170, %v2174
        %v2176 = vpack.c.bf16 %v2175, %v2175
        %2177 = vrot.lane.b32.xlu0 %v1891, 80
        %v2178 = vpop.permute.xlu0 %2177
        %v2180 = vsel %vm1938, %v2176, 0
        %v2183 = vand.u32 %v2178, %v1960
        %2185 = vmatprep.subr.bf16.mxu0 0
        %2186 = vmatpush1.bf16.msra.mxu0 0
        %2187 = vmatprep.subr.bf16.mxu0 0
        %2188 = vmatpush1.bf16.msra.mxu0 0
        %2189 = vmatprep.subr.bf16.mxu0 0
        %2190 = vmatpush1.bf16.msra.mxu0 0
        %2191 = vmatprep.subr.bf16.mxu0 0
        %2192 = vmatpush1.bf16.msra.mxu0 0
        %2193 = vmatprep.subr.bf16.mxu0 0
        %2194 = vmatpush1.bf16.msra.mxu0 0
        %2195 = vmatprep.subr.bf16.mxu0 0
        %2196 = vmatpush1.bf16.msra.mxu0 0
        %2197 = vmatprep.subr.bf16.mxu0 0
        %2198 = vmatpush1.bf16.msra.mxu0 0
        %2199 = vmatprep.subr.bf16.mxu0 0
        %2200 = vmatpush1.bf16.msra.mxu0 %v2183
        %2201 = vmatprep.subr.bf16.mxu0 0
        %2202 = vmatpush2.bf16.msra.mxu0 0
        %2203 = vmatprep.subr.bf16.mxu0 0
        %2204 = vmatpush2.bf16.msra.mxu0 0
        %2205 = vmatprep.subr.bf16.mxu0 0
        %2206 = vmatpush2.bf16.msra.mxu0 0
        %2207 = vmatprep.subr.bf16.mxu0 0
        %2208 = vmatpush2.bf16.msra.mxu0 0
        %2209 = vmatprep.subr.bf16.mxu0 0
        %2210 = vmatpush2.bf16.msra.mxu0 0
        %2211 = vmatprep.subr.bf16.mxu0 0
        %2212 = vmatpush2.bf16.msra.mxu0 0
        %2213 = vmatprep.subr.bf16.mxu0 0
        %2214 = vmatpush2.bf16.msra.mxu0 0
        %2215 = vmatprep.subr.bf16.mxu0 0
        %2216 = vmatpush2.bf16.msra.mxu0 0
        %2217 = vmatprep.mubr.bf16.mxu0 0
        %2218 = vmatmul.mubr.bf16.gmra.mxu0 %v2180
        %v2219 = vpop.f32.mrf.mxu0
        %v2220 = vadd.f32 0.0, %v2219
        %v2221 = vpop.f32.mrf.mxu0
        %v2222 = vpop.f32.mrf.mxu0
        %v2223 = vpop.f32.mrf.mxu0
        %2224 = vdwg.mxu0
        %2225 = vrot.lane.b32.xlu0 %v1890, 104
        %v2226 = vpop.permute.xlu0 %2225
        %2227 = vrot.lane.b32.xlu0 %v1891, 104
        %v2228 = vpop.permute.xlu0 %2227
        %v2230 = vsel %vm1201, %v2226, 0
        %v2233 = vsel %vm1201, %v2228, 0
        %2235 = vmatprep.subr.bf16.mxu0 0
        %2236 = vmatpush1.bf16.xpose.msra.mxu0 0
        %2237 = vmatprep.subr.bf16.mxu0 0
        %2238 = vmatpush1.bf16.xpose.msra.mxu0 0
        %2239 = vmatprep.subr.bf16.mxu0 0
        %2240 = vmatpush1.bf16.xpose.msra.mxu0 0
        %2241 = vmatprep.subr.bf16.mxu0 0
        %2242 = vmatpush1.bf16.xpose.msra.mxu0 0
        %2243 = vmatprep.subr.bf16.mxu0 0
        %2244 = vmatpush1.bf16.xpose.msra.mxu0 0
        %2245 = vmatprep.subr.bf16.mxu0 0
        %2246 = vmatpush1.bf16.xpose.msra.mxu0 0
        %2247 = vmatprep.subr.bf16.mxu0 0
        %2248 = vmatpush1.bf16.xpose.msra.mxu0 0
        %2249 = vmatprep.subr.bf16.mxu0 0
        %2250 = vmatpush1.bf16.xpose.msra.mxu0 %v2233
        %2251 = vmatprep.subr.bf16.mxu0 0
        %2252 = vmatpush2.bf16.xpose.msra.mxu0 0
        %2253 = vmatprep.subr.bf16.mxu0 0
        %2254 = vmatpush2.bf16.xpose.msra.mxu0 0
        %2255 = vmatprep.subr.bf16.mxu0 0
        %2256 = vmatpush2.bf16.xpose.msra.mxu0 0
        %2257 = vmatprep.subr.bf16.mxu0 0
        %2258 = vmatpush2.bf16.xpose.msra.mxu0 0
        %2259 = vmatprep.subr.bf16.mxu0 0
        %2260 = vmatpush2.bf16.xpose.msra.mxu0 0
        %2261 = vmatprep.subr.bf16.mxu0 0
        %2262 = vmatpush2.bf16.xpose.msra.mxu0 0
        %2263 = vmatprep.subr.bf16.mxu0 0
        %2264 = vmatpush2.bf16.xpose.msra.mxu0 0
        %2265 = vmatprep.subr.bf16.mxu0 0
        %2266 = vmatpush2.bf16.xpose.msra.mxu0 0
        %2267 = vmatprep.mubr.bf16.mxu0 0
        %2268 = vmatmul.mubr.bf16.gmra.mxu0 %v2230
        %v2269 = vpop.f32.mrf.mxu0
        %v2270 = vadd.f32 0.0, %v2269
        %v2271 = vpop.f32.mrf.mxu0
        %v2272 = vpop.f32.mrf.mxu0
        %v2273 = vpop.f32.mrf.mxu0
        %2274 = vdwg.mxu0
        %v2275 = vsel %vm1938, %v2270, -inf
        %2276 = vmax.xlane.f32.xlu0 %v2275
        %v2277 = vpop.xlane.xlu0 %2276
        %v2278 = vsub.f32 %v2270, %v2277
        %v2279 = vmul.f32 %v2278, 1.442695
        %v2280 = vpow.pop %v2279
        %v2281 = vsel %vm1938, %v2280, 0.0
        %2282 = vadd.xlane.f32.xlu0 %v2281
        %v2283 = vpop.xlane.xlu0 %2282
        %v2284 = vrcp.pop %v2283
        %v2285 = vmul.f32 %v2280, %v2284
        %v2286 = vpack.c.bf16 %v2285, %v2285
        %2287 = vrot.lane.b32.xlu0 %v1891, 72
        %v2288 = vpop.permute.xlu0 %2287
        %v2290 = vsel %vm1938, %v2286, 0
        %v2293 = vand.u32 %v2288, %v1960
        %2295 = vmatprep.subr.bf16.mxu0 0
        %2296 = vmatpush1.bf16.msra.mxu0 0
        %2297 = vmatprep.subr.bf16.mxu0 0
        %2298 = vmatpush1.bf16.msra.mxu0 0
        %2299 = vmatprep.subr.bf16.mxu0 0
        %2300 = vmatpush1.bf16.msra.mxu0 0
        %2301 = vmatprep.subr.bf16.mxu0 0
        %2302 = vmatpush1.bf16.msra.mxu0 0
        %2303 = vmatprep.subr.bf16.mxu0 0
        %2304 = vmatpush1.bf16.msra.mxu0 0
        %2305 = vmatprep.subr.bf16.mxu0 0
        %2306 = vmatpush1.bf16.msra.mxu0 0
        %2307 = vmatprep.subr.bf16.mxu0 0
        %2308 = vmatpush1.bf16.msra.mxu0 0
        %2309 = vmatprep.subr.bf16.mxu0 0
        %2310 = vmatpush1.bf16.msra.mxu0 %v2293
        %2311 = vmatprep.subr.bf16.mxu0 0
        %2312 = vmatpush2.bf16.msra.mxu0 0
        %2313 = vmatprep.subr.bf16.mxu0 0
        %2314 = vmatpush2.bf16.msra.mxu0 0
        %2315 = vmatprep.subr.bf16.mxu0 0
        %2316 = vmatpush2.bf16.msra.mxu0 0
        %2317 = vmatprep.subr.bf16.mxu0 0
        %2318 = vmatpush2.bf16.msra.mxu0 0
        %2319 = vmatprep.subr.bf16.mxu0 0
        %2320 = vmatpush2.bf16.msra.mxu0 0
        %2321 = vmatprep.subr.bf16.mxu0 0
        %2322 = vmatpush2.bf16.msra.mxu0 0
        %2323 = vmatprep.subr.bf16.mxu0 0
        %2324 = vmatpush2.bf16.msra.mxu0 0
        %2325 = vmatprep.subr.bf16.mxu0 0
        %2326 = vmatpush2.bf16.msra.mxu0 0
        %2327 = vmatprep.mubr.bf16.mxu0 0
        %2328 = vmatmul.mubr.bf16.gmra.mxu0 %v2290
        %v2329 = vpop.f32.mrf.mxu0
        %v2330 = vadd.f32 0.0, %v2329
        %v2331 = vpop.f32.mrf.mxu0
        %v2332 = vpop.f32.mrf.mxu0
        %v2333 = vpop.f32.mrf.mxu0
        %2334 = vdwg.mxu0
        %2336 = vrot.lane.b32.xlu0 %v2110, 8
        %v2337 = vpop.permute.xlu0 %2336
        %2340 = vrot.lane.b32.xlu0 %v2220, 16
        %v2341 = vpop.permute.xlu0 %2340
        %2344 = vrot.lane.b32.xlu0 %v2330, 24
        %v2345 = vpop.permute.xlu0 %2344
        %v2347 = vsel %vm1201, %v1999, %v2337
        %v2348 = vsel %vm1653, %v2347, %v2341
        %v2349 = vsel %vm1655, %v2348, %v2345
        %v2350 = vpack.c.bf16 %v2349, %v2349
        %v2352 = vlaneseq
        %v2353 = vshrl.u32 %v2352, 7
        %v2354 = vsub.s32 0, %v2353
        %v2355 = vrot.slane %v1764, %v2354
        %v2361 = vunpack.c.l.b16 %v1760
        %v2362 = vunpack.c.l.b16 %v1761
        %v2363 = vunpack.c.l.b16 %v1762
        %v2364 = vunpack.c.l.b16 %v1763
        %v2365 = vpack.c.b16 %v2362, %v2361
        %v2366 = vpack.c.b16 %v2364, %v2363
        %v2370 = vsel %vm1151, %v2350, 0
        %2372 = vmatprep.subr.bf16.mxu0 0
        %2373 = vmatpush1.bf16.msra.mxu0 0
        %2374 = vmatprep.subr.bf16.mxu0 0
        %2375 = vmatpush1.bf16.msra.mxu0 0
        %2376 = vmatprep.subr.bf16.mxu0 0
        %2377 = vmatpush1.bf16.msra.mxu0 0
        %2378 = vmatprep.subr.bf16.mxu0 0
        %2379 = vmatpush1.bf16.msra.mxu0 0
        %2380 = vmatprep.subr.bf16.mxu0 0
        %2381 = vmatpush1.bf16.msra.mxu0 0
        %2382 = vmatprep.subr.bf16.mxu0 0
        %2383 = vmatpush1.bf16.msra.mxu0 0
        %2384 = vmatprep.subr.bf16.mxu0 0
        %2385 = vmatpush1.bf16.msra.mxu0 %v2366
        %2386 = vmatprep.subr.bf16.mxu0 0
        %2387 = vmatpush1.bf16.msra.mxu0 %v2365
        %2388 = vmatprep.subr.bf16.mxu0 0
        %2389 = vmatpush2.bf16.msra.mxu0 0
        %2390 = vmatprep.subr.bf16.mxu0 0
        %2391 = vmatpush2.bf16.msra.mxu0 0
        %2392 = vmatprep.subr.bf16.mxu0 0
        %2393 = vmatpush2.bf16.msra.mxu0 0
        %2394 = vmatprep.subr.bf16.mxu0 0
        %2395 = vmatpush2.bf16.msra.mxu0 0
        %2396 = vmatprep.subr.bf16.mxu0 0
        %2397 = vmatpush2.bf16.msra.mxu0 0
        %2398 = vmatprep.subr.bf16.mxu0 0
        %2399 = vmatpush2.bf16.msra.mxu0 0
        %2400 = vmatprep.subr.bf16.mxu0 0
        %2401 = vmatpush2.bf16.msra.mxu0 0
        %2402 = vmatprep.subr.bf16.mxu0 0
        %2403 = vmatpush2.bf16.msra.mxu0 0
        %2404 = vmatprep.mubr.bf16.mxu0 0
        %2405 = vmatmul.mubr.bf16.gmra.mxu0 %v2370
        %v2406 = vpop.f32.mrf.mxu0
        %v2407 = vadd.f32 %v2355, %v2406
        %v2408 = vpop.f32.mrf.mxu0
        %v2409 = vpop.f32.mrf.mxu0
        %v2410 = vpop.f32.mrf.mxu0
        %2411 = vdwg.mxu0
        %v2412 = vadd.f32 %v1749, %v2407
        %v2413 = vld [vmem:[%s1085] sm:$0x1]
        %v2414 = vld [vmem:[%s1088] sm:$0x1]
        %v2415 = vsel %vm1151, %v2412, 0.0
        %2416 = vadd.xlane.f32.xlu0 %v2415
        %v2417 = vpop.xlane.xlu0 %2416
        %v2418 = vmul.f32 %v2417, %v1725
        %v2419 = vsub.f32 %v2412, %v2418
        %v2420 = vmul.f32 %v2419, %v2419
        %v2421 = vsel %vm1151, %v2420, 0.0
        %2422 = vadd.xlane.f32.xlu0 %v2421
        %v2423 = vpop.xlane.xlu0 %2422
        %v2424 = vmul.f32 %v2423, %v1725
        %v2425 = vadd.f32 %v2424, 1e-05
        %v2426 = vrsqrt.pop %v2425
        %v2427 = vmul.f32 %v2419, %v2426
        %v2429 = vlaneseq
        %v2430 = vshrl.u32 %v2429, 7
        %v2431 = vsub.s32 0, %v2430
        %v2432 = vrot.slane %v2413, %v2431
        %v2434 = vmul.f32 %v2427, %v2432
        %v2436 = vlaneseq
        %v2437 = vshrl.u32 %v2436, 7
        %v2438 = vsub.s32 0, %v2437
        %v2439 = vrot.slane %v2414, %v2438
        %v2441 = vadd.f32 %v2434, %v2439
        %v2442 = vpack.c.bf16 %v2441, %v2441
        %v2443 = vld [vmem:[%s1093] sm:$0xf]
        %v2444 = vld [vmem:[%s1093 + $0x4] sm:$0xf]
        %v2445 = vld [vmem:[%s1093 + $0x8] sm:$0xf]
        %v2446 = vld [vmem:[%s1093 + $0xc] sm:$0xf]
        %v2447 = vld [vmem:[%s1096] sm:$0x1]
        %v2449 = vlaneseq
        %v2450 = vshrl.u32 %v2449, 7
        %v2451 = vsub.s32 0, %v2450
        %v2452 = vrot.slane %v2447, %v2451
        %v2458 = vunpack.c.l.b16 %v2443
        %v2459 = vunpack.c.l.b16 %v2444
        %v2460 = vunpack.c.l.b16 %v2445
        %v2461 = vunpack.c.l.b16 %v2446
        %v2462 = vpack.c.b16 %v2459, %v2458
        %v2463 = vpack.c.b16 %v2461, %v2460
        %v2467 = vsel %vm1151, %v2442, 0
        %2469 = vmatprep.subr.bf16.mxu0 0
        %2470 = vmatpush1.bf16.msra.mxu0 0
        %2471 = vmatprep.subr.bf16.mxu0 0
        %2472 = vmatpush1.bf16.msra.mxu0 0
        %2473 = vmatprep.subr.bf16.mxu0 0
        %2474 = vmatpush1.bf16.msra.mxu0 0
        %2475 = vmatprep.subr.bf16.mxu0 0
        %2476 = vmatpush1.bf16.msra.mxu0 0
        %2477 = vmatprep.subr.bf16.mxu0 0
        %2478 = vmatpush1.bf16.msra.mxu0 0
        %2479 = vmatprep.subr.bf16.mxu0 0
        %2480 = vmatpush1.bf16.msra.mxu0 0
        %2481 = vmatprep.subr.bf16.mxu0 0
        %2482 = vmatpush1.bf16.msra.mxu0 %v2463
        %2483 = vmatprep.subr.bf16.mxu0 0
        %2484 = vmatpush1.bf16.msra.mxu0 %v2462
        %2485 = vmatprep.subr.bf16.mxu0 0
        %2486 = vmatpush2.bf16.msra.mxu0 0
        %2487 = vmatprep.subr.bf16.mxu0 0
        %2488 = vmatpush2.bf16.msra.mxu0 0
        %2489 = vmatprep.subr.bf16.mxu0 0
        %2490 = vmatpush2.bf16.msra.mxu0 0
        %2491 = vmatprep.subr.bf16.mxu0 0
        %2492 = vmatpush2.bf16.msra.mxu0 0
        %2493 = vmatprep.subr.bf16.mxu0 0
        %2494 = vmatpush2.bf16.msra.mxu0 0
        %2495 = vmatprep.subr.bf16.mxu0 0
        %2496 = vmatpush2.bf16.msra.mxu0 0
        %2497 = vmatprep.subr.bf16.mxu0 0
        %2498 = vmatpush2.bf16.msra.mxu0 0
        %2499 = vmatprep.subr.bf16.mxu0 0
        %2500 = vmatpush2.bf16.msra.mxu0 0
        %2501 = vmatprep.mubr.bf16.mxu0 0
        %2502 = vmatmul.mubr.bf16.gmra.mxu0 %v2467
        %v2503 = vpop.f32.mrf.mxu0
        %v2504 = vadd.f32 %v2452, %v2503
        %v2505 = vpop.f32.mrf.mxu0
        %v2506 = vpop.f32.mrf.mxu0
        %v2507 = vpop.f32.mrf.mxu0
        %2508 = vdwg.mxu0
        %v2509 = vmax.f32 %v2504, 0.0
        %v2510 = vpack.c.bf16 %v2509, %v2509
        %v2511 = vld [vmem:[%s1101] sm:$0xf]
        %v2512 = vld [vmem:[%s1101 + $0x4] sm:$0xf]
        %v2513 = vld [vmem:[%s1101 + $0x8] sm:$0xf]
        %v2514 = vld [vmem:[%s1101 + $0xc] sm:$0xf]
        %v2515 = vld [vmem:[%s1101 + $0x10] sm:$0xf]
        %v2516 = vld [vmem:[%s1101 + $0x14] sm:$0xf]
        %v2517 = vld [vmem:[%s1101 + $0x18] sm:$0xf]
        %v2518 = vld [vmem:[%s1101 + $0x1c] sm:$0xf]
        %v2519 = vld [vmem:[%s1104] sm:$0x1]
        %v2521 = vlaneseq
        %v2522 = vshrl.u32 %v2521, 7
        %v2523 = vsub.s32 0, %v2522
        %v2524 = vrot.slane %v2519, %v2523
        %v2534 = vunpack.c.l.b16 %v2511
        %v2535 = vunpack.c.l.b16 %v2512
        %v2536 = vunpack.c.l.b16 %v2513
        %v2537 = vunpack.c.l.b16 %v2514
        %v2538 = vunpack.c.l.b16 %v2515
        %v2539 = vunpack.c.l.b16 %v2516
        %v2540 = vunpack.c.l.b16 %v2517
        %v2541 = vunpack.c.l.b16 %v2518
        %v2542 = vpack.c.b16 %v2535, %v2534
        %v2543 = vpack.c.b16 %v2537, %v2536
        %v2544 = vpack.c.b16 %v2539, %v2538
        %v2545 = vpack.c.b16 %v2541, %v2540
        %vm2550 = vcmask 523264
        %v2552 = vsel %vm2550, %v2510, 0
        %2554 = vmatprep.subr.bf16.mxu0 0
        %2555 = vmatpush1.bf16.msra.mxu0 0
        %2556 = vmatprep.subr.bf16.mxu0 0
        %2557 = vmatpush1.bf16.msra.mxu0 0
        %2558 = vmatprep.subr.bf16.mxu0 0
        %2559 = vmatpush1.bf16.msra.mxu0 0
        %2560 = vmatprep.subr.bf16.mxu0 0
        %2561 = vmatpush1.bf16.msra.mxu0 0
        %2562 = vmatprep.subr.bf16.mxu0 0
        %2563 = vmatpush1.bf16.msra.mxu0 %v2545
        %2564 = vmatprep.subr.bf16.mxu0 0
        %2565 = vmatpush1.bf16.msra.mxu0 %v2544
        %2566 = vmatprep.subr.bf16.mxu0 0
        %2567 = vmatpush1.bf16.msra.mxu0 %v2543
        %2568 = vmatprep.subr.bf16.mxu0 0
        %2569 = vmatpush1.bf16.msra.mxu0 %v2542
        %2570 = vmatprep.subr.bf16.mxu0 0
        %2571 = vmatpush2.bf16.msra.mxu0 0
        %2572 = vmatprep.subr.bf16.mxu0 0
        %2573 = vmatpush2.bf16.msra.mxu0 0
        %2574 = vmatprep.subr.bf16.mxu0 0
        %2575 = vmatpush2.bf16.msra.mxu0 0
        %2576 = vmatprep.subr.bf16.mxu0 0
        %2577 = vmatpush2.bf16.msra.mxu0 0
        %2578 = vmatprep.subr.bf16.mxu0 0
        %2579 = vmatpush2.bf16.msra.mxu0 0
        %2580 = vmatprep.subr.bf16.mxu0 0
        %2581 = vmatpush2.bf16.msra.mxu0 0
        %2582 = vmatprep.subr.bf16.mxu0 0
        %2583 = vmatpush2.bf16.msra.mxu0 0
        %2584 = vmatprep.subr.bf16.mxu0 0
        %2585 = vmatpush2.bf16.msra.mxu0 0
        %2586 = vmatprep.mubr.bf16.mxu0 0
        %2587 = vmatmul.mubr.bf16.gmra.mxu0 %v2552
        %v2588 = vpop.f32.mrf.mxu0
        %v2589 = vadd.f32 %v2524, %v2588
        %v2590 = vpop.f32.mrf.mxu0
        %v2591 = vpop.f32.mrf.mxu0
        %v2592 = vpop.f32.mrf.mxu0
        %2593 = vdwg.mxu0
        %v2594 = vadd.f32 %v2441, %v2589
        %v2595 = vld [vmem:[%s1107] sm:$0x1]
        %v2596 = vld [vmem:[%s1110] sm:$0x1]
        %v2597 = vsel %vm1151, %v2594, 0.0
        %2598 = vadd.xlane.f32.xlu0 %v2597
        %v2599 = vpop.xlane.xlu0 %2598
        %v2600 = vmul.f32 %v2599, %v1725
        %v2601 = vsub.f32 %v2594, %v2600
        %v2602 = vmul.f32 %v2601, %v2601
        %v2603 = vsel %vm1151, %v2602, 0.0
        %2604 = vadd.xlane.f32.xlu0 %v2603
        %v2605 = vpop.xlane.xlu0 %2604
        %v2606 = vmul.f32 %v2605, %v1725
        %v2607 = vadd.f32 %v2606, 1e-05
        %v2608 = vrsqrt.pop %v2607
        %v2609 = vmul.f32 %v2601, %v2608
        %v2611 = vlaneseq
        %v2612 = vshrl.u32 %v2611, 7
        %v2613 = vsub.s32 0, %v2612
        %v2614 = vrot.slane %v2595, %v2613
        %v2616 = vmul.f32 %v2609, %v2614
        %v2618 = vlaneseq
        %v2619 = vshrl.u32 %v2618, 7
        %v2620 = vsub.s32 0, %v2619
        %v2621 = vrot.slane %v2596, %v2620
        %v2623 = vadd.f32 %v2616, %v2621
        %2624 = vst.msk [vmem:[#allocation2] sm:$0xff] %vm1151, %v2623
        %p2625 = scmp.eq.s32.totalorder %s44, 1
        // Predicated region
        $region125: #{vit_captioning_forward.3} parent=119 // pred_check
          %p2626 = pneg %p2625
        $region126: #{vit_captioning_forward.3} parent=119 // pred_check_branch
          %2628 = sbr.rel (%p2626) target = $region128
        $region127: #{vit_captioning_forward.3} parent=119 // pred_region
          %v2629 = vpack.c.bf16 %v2623, %v2623
          %v2630 = vld [vmem:[%s23] sm:$0xf]
          %v2631 = vld [vmem:[%s23 + $0x4] sm:$0xf]
          %v2632 = vld [vmem:[%s23 + $0x8] sm:$0xf]
          %v2633 = vld [vmem:[%s23 + $0xc] sm:$0xf]
          %v2634 = vld [vmem:[%s24] sm:$0x1]
          %v2636 = vlaneseq
          %v2637 = vshrl.u32 %v2636, 7
          %v2638 = vsub.s32 0, %v2637
          %v2639 = vrot.slane %v2634, %v2638
          %v2645 = vunpack.c.l.b16 %v2630
          %v2646 = vunpack.c.l.b16 %v2631
          %v2647 = vunpack.c.l.b16 %v2632
          %v2648 = vunpack.c.l.b16 %v2633
          %v2649 = vpack.c.b16 %v2646, %v2645
          %v2650 = vpack.c.b16 %v2648, %v2647
          %v2654 = vsel %vm1151, %v2629, 0
          %2656 = vmatprep.subr.bf16.mxu0 0
          %2657 = vmatpush1.bf16.msra.mxu0 0
          %2658 = vmatprep.subr.bf16.mxu0 0
          %2659 = vmatpush1.bf16.msra.mxu0 0
          %2660 = vmatprep.subr.bf16.mxu0 0
          %2661 = vmatpush1.bf16.msra.mxu0 0
          %2662 = vmatprep.subr.bf16.mxu0 0
          %2663 = vmatpush1.bf16.msra.mxu0 0
          %2664 = vmatprep.subr.bf16.mxu0 0
          %2665 = vmatpush1.bf16.msra.mxu0 0
          %2666 = vmatprep.subr.bf16.mxu0 0
          %2667 = vmatpush1.bf16.msra.mxu0 0
          %2668 = vmatprep.subr.bf16.mxu0 0
          %2669 = vmatpush1.bf16.msra.mxu0 %v2650
          %2670 = vmatprep.subr.bf16.mxu0 0
          %2671 = vmatpush1.bf16.msra.mxu0 %v2649
          %2672 = vmatprep.subr.bf16.mxu0 0
          %2673 = vmatpush2.bf16.msra.mxu0 0
          %2674 = vmatprep.subr.bf16.mxu0 0
          %2675 = vmatpush2.bf16.msra.mxu0 0
          %2676 = vmatprep.subr.bf16.mxu0 0
          %2677 = vmatpush2.bf16.msra.mxu0 0
          %2678 = vmatprep.subr.bf16.mxu0 0
          %2679 = vmatpush2.bf16.msra.mxu0 0
          %2680 = vmatprep.subr.bf16.mxu0 0
          %2681 = vmatpush2.bf16.msra.mxu0 0
          %2682 = vmatprep.subr.bf16.mxu0 0
          %2683 = vmatpush2.bf16.msra.mxu0 0
          %2684 = vmatprep.subr.bf16.mxu0 0
          %2685 = vmatpush2.bf16.msra.mxu0 0
          %2686 = vmatprep.subr.bf16.mxu0 0
          %2687 = vmatpush2.bf16.msra.mxu0 0
          %2688 = vmatprep.mubr.bf16.mxu0 0
          %2689 = vmatmul.mubr.bf16.gmra.mxu0 %v2654
          %v2690 = vpop.f32.mrf.mxu0
          %v2691 = vadd.f32 %v2639, %v2690
          %v2692 = vpop.f32.mrf.mxu0
          %v2693 = vpop.f32.mrf.mxu0
          %v2694 = vpop.f32.mrf.mxu0
          %2695 = vdwg.mxu0
          %2696 = vst [vmem:[%s1028] sm:$0xff] %v2691
        $region128: #{vit_captioning_forward.3} parent=119 // pred_fallthru
          _
        %s2697 = sand.u32 %s694, 1
        %s2698 = scalar_lea.sflag [#allocation4], %s2697
        %s2699 = sand.u32 %s694, 1
        %s2700 = smul.addr %s2699, 8
        %s2701 = scalar_lea.vmem [#allocation3], %s2700
        // Predicated region
        $region129: #{vit_captioning_forward.3} parent=119 // pred_check
          %p2702 = pneg %p704
        $region130: #{vit_captioning_forward.3} parent=119 // pred_check_branch
          %2704 = sbr.rel (%p2702) target = $region132
        $region131: #{vit_captioning_forward.3} parent=119 // pred_region
          %s2706 = ssub.s32 128, 128
          %2707 = vsyncadd %s2698, %s2706
          %s2708 = smul.addr %s43, 128
          %s2709 = scalar_lea.hbm %s25, %s2708
          %s2711 = sshll.u32 %s2701, 4
          %s2712 = int_to_ptr.vmem [resolvable:$true] %s2711
          %2714 = dma.vmem_to_hbm [thread:$0]  %s2712, 128, %s2709, %s2698
        $region132: #{vit_captioning_forward.3} parent=119 // pred_fallthru
          _
      $region120: #{vit_captioning_forward.3} parent=5 // pred_fallthru
        _
      %p2715 = scmp.le.s32.totalorder 2, %s34
      // Predicated region
      $region133: #{vit_captioning_forward.3} parent=5 // pred_check
        %p2716 = pneg %p2715
      $region134: #{vit_captioning_forward.3} parent=5 // pred_check_branch
        %2718 = sbr.rel (%p2716) target = $region136
      $region135: #{vit_captioning_forward.3} parent=5 // pred_region
        %s2719 = ssub.s32 %s34, 2
        // Predicated region
        $region137: #{vit_captioning_forward.3} parent=135 // pred_check
          %p2720 = pneg %p710
        $region138: #{vit_captioning_forward.3} parent=135 // pred_check_branch
          %2722 = sbr.rel (%p2720) target = $region140
        $region139: #{vit_captioning_forward.3} parent=135 // pred_region
          %s2723 = sand.u32 %s695, 1
          %s2724 = scalar_lea.sflag [#allocation4], %s2723
          %s2725 = sand.u32 %s695, 1
          %s2726 = smul.addr %s2725, 8
          %s2727 = scalar_lea.vmem [#allocation3], %s2726
          %2728 = dma.done %s2724, 128
        $region140: #{vit_captioning_forward.3} parent=135 // pred_fallthru
          _
      $region136: #{vit_captioning_forward.3} parent=5 // pred_fallthru
        _
    $region6: #{vit_captioning_forward.3} parent=1 // loop_footer
      %s38 = sadd.s32 1, %s34
    $region7: #{vit_captioning_forward.3} parent=1 // loop_footer_branch
      %33 = sbr.rel target = $region3
    $region8: #{vit_captioning_forward.3} parent=1 // loop_exit
      _
    %2729 = vsyncpa [#allocation4], 1
    %s2730 = scalar_lea.sflag [#allocation4], 1
    %2731 = vsyncpa %s2730, 1

</llo_original>
